<compile_context>
chip_gen: v6e
topology: v6e:2x2x1
jax: 0.10.0
libtpu: 0.0.40
codegen_flags: <defaults>
</compile_context>

<pallas_src>
import functools
import math

import jax
import jax.numpy as jnp
from jax.experimental import pallas as pl
from jax.experimental.pallas import tpu as pltpu


# ----------------------------------------------------------------------------
# Model config (small deterministic BERT — no checkpoint may be loaded)
# ----------------------------------------------------------------------------
VOCAB = 100
HIDDEN = 32
LAYERS = 2
HEADS = 4
HEAD_DIM = HIDDEN // HEADS
INTERMEDIATE = 64
MAX_POS = 16
N_CLASSES = 3
LN_EPS = 1e-12

# ---- packed-parameter column offsets --------------------------------------
# w_hid:  (LAYERS, HIDDEN, 3H + H + I)   = [ qkv_w | ao_w | ff1_w ]
_W_QKV = 0
_W_AO = 3 * HIDDEN
_W_FF1 = 4 * HIDDEN
# b_layer: (LAYERS, 1, 9H + I) = [qkv_b|ao_b|ln1_g|ln1_b|ff1_b|ff2_b|ln2_g|ln2_b]
_B_QKV = 0
_B_AO = 3 * HIDDEN
_G_LN1 = 4 * HIDDEN
_B_LN1 = 5 * HIDDEN
_B_FF1 = 6 * HIDDEN
_B_FF2 = 6 * HIDDEN + INTERMEDIATE
_G_LN2 = 7 * HIDDEN + INTERMEDIATE
_B_LN2 = 8 * HIDDEN + INTERMEDIATE
# head_w: (HIDDEN, H + N_CLASSES) = [ pooler_w | out_w ]
_POOL_W = 0
_OUT_W = HIDDEN
# head_b: (1, 3H + N_CLASSES) = [ emb_ln_g | emb_ln_b | pooler_b | out_b ]
_EMB_G = 0
_EMB_B = HIDDEN
_POOL_B = 2 * HIDDEN
_OUT_B = 3 * HIDDEN


# ----------------------------------------------------------------------------
# In-kernel helpers (pure jnp, traced inside the Pallas kernel)
# ----------------------------------------------------------------------------
def _layer_norm(h, g, b):
    mu = jnp.mean(h, axis=-1, keepdims=True)
    d = h - mu
    var = jnp.mean(d * d, axis=-1, keepdims=True)
    return d * jax.lax.rsqrt(var + LN_EPS) * g + b


def _gelu_tanh(y):
    # TODO(synk): exact erf GELU (PyTorch BERT default) has no guaranteed Mosaic
    # lowering; tanh approximation used (~1e-3 relative difference).
    return 0.5 * y * (1.0 + jnp.tanh(0.7978845608028654 * (y + 0.044715 * y * y * y)))


# ----------------------------------------------------------------------------
# Fused forward kernel: embeddings-LN -> N transformer layers -> pooler -> head
# ----------------------------------------------------------------------------
def _fused_bert_kernel(x_ref, mask_ref,
                       w_hid_ref, w_ff2_ref, b_layer_ref,
                       head_w_ref, head_b_ref,
                       logits_ref, *, batch, seq):
    BS = batch * seq
    H = HIDDEN

    # ---- additive attention bias built in-kernel from the (1, BS) mask ----
    # 0 where (same batch) AND (key token unmasked); -1e9 otherwise.
    row_id = jax.lax.broadcasted_iota(jnp.int32, (BS, BS), 0)
    col_id = jax.lax.broadcasted_iota(jnp.int32, (BS, BS), 1)
    if seq & (seq - 1) == 0:                       # power-of-two seq -> shift
        sh = seq.bit_length() - 1
        same_batch = (row_id >> sh) == (col_id >> sh)
    else:
        same_batch = (row_id // seq) == (col_id // seq)
    key_valid = mask_ref[...] > 0.5                # (1, BS) broadcasts over rows
    bias = jnp.where(same_batch & key_valid,
                     jnp.float32(0.0), jnp.float32(-1e9))      # (BS, BS)

    # ---- embedding LayerNorm ----
    x = _layer_norm(x_ref[...],
                    head_b_ref[:, _EMB_G:_EMB_G + H],
                    head_b_ref[:, _EMB_B:_EMB_B + H])          # (BS, H)

    for l in range(LAYERS):
        # --- fused QKV projection (Q already pre-scaled by 1/sqrt(Dh)) ---
        qkv = (jnp.dot(x, w_hid_ref[l, :, _W_QKV:_W_QKV + 3 * H],
                       preferred_element_type=jnp.float32)
               + b_layer_ref[l, :, _B_QKV:_B_QKV + 3 * H])     # (BS, 3H)

        # --- head-batched attention: one Q/K/V relayout in, one ctx relayout out ---
        q = qkv[:, 0:H].reshape(BS, HEADS, HEAD_DIM).transpose(1, 0, 2)
        k = qkv[:, H:2 * H].reshape(BS, HEADS, HEAD_DIM).transpose(1, 0, 2)
        v = qkv[:, 2 * H:3 * H].reshape(BS, HEADS, HEAD_DIM).transpose(1, 0, 2)
        s = jnp.einsum('hqd,hkd->hqk', q, k,
                       preferred_element_type=jnp.float32) + bias   # (HEADS,BS,BS)
        s = s - jnp.max(s, axis=-1, keepdims=True)
        p = jnp.exp(s)
        p = p * pl.reciprocal(jnp.sum(p, axis=-1, keepdims=True), approx=True)
        ctx = jnp.einsum('hqk,hkd->hqd', p, v,
                         preferred_element_type=jnp.float32)        # (HEADS,BS,Dh)
        ctx = ctx.transpose(1, 0, 2).reshape(BS, H)                 # (BS, H)

        attn = (jnp.dot(ctx, w_hid_ref[l, :, _W_AO:_W_AO + H],
                        preferred_element_type=jnp.float32)
                + b_layer_ref[l, :, _B_AO:_B_AO + H])
        x = _layer_norm(attn + x,
                        b_layer_ref[l, :, _G_LN1:_G_LN1 + H],
                        b_layer_ref[l, :, _B_LN1:_B_LN1 + H])

        # --- feed forward ---
        ff = (jnp.dot(x, w_hid_ref[l, :, _W_FF1:_W_FF1 + INTERMEDIATE],
                      preferred_element_type=jnp.float32)
              + b_layer_ref[l, :, _B_FF1:_B_FF1 + INTERMEDIATE])
        ff = _gelu_tanh(ff)
        ff = (jnp.dot(ff, w_ff2_ref[l],
                      preferred_element_type=jnp.float32)
              + b_layer_ref[l, :, _B_FF2:_B_FF2 + H])
        x = _layer_norm(ff + x,
                        b_layer_ref[l, :, _G_LN2:_G_LN2 + H],
                        b_layer_ref[l, :, _B_LN2:_B_LN2 + H])

    # ---- pooler: tanh(W * hidden[CLS]) — [CLS] rows via a selection matmul ----
    ii = jax.lax.broadcasted_iota(jnp.int32, (batch, BS), 0)
    jj = jax.lax.broadcasted_iota(jnp.int32, (batch, BS), 1)
    sel = (jj == ii * seq).astype(jnp.float32)                 # (B, BS) one-hot
    first = jnp.dot(sel, x, preferred_element_type=jnp.float32)      # (B, H)
    pooled = jnp.tanh(
        jnp.dot(first, head_w_ref[:, _POOL_W:_POOL_W + H],
                preferred_element_type=jnp.float32)
        + head_b_ref[:, _POOL_B:_POOL_B + H])

    # dropout(p=0.3) is identity at inference (module in eval mode)
    logits_ref[...] = (
        jnp.dot(pooled, head_w_ref[:, _OUT_W:_OUT_W + N_CLASSES],
                preferred_element_type=jnp.float32)
        + head_b_ref[:, _OUT_B:_OUT_B + N_CLASSES])


# ----------------------------------------------------------------------------
# Parameters (constructed per-tensor, then packed once — no per-call packing)
# ----------------------------------------------------------------------------
def init_params(key):
    def nrm(k, shape):
        return jax.random.normal(k, shape, jnp.float32) * 0.02

    keys = iter(jax.random.split(key, 16))
    word_emb = nrm(next(keys), (VOCAB, HIDDEN))
    pos_emb = nrm(next(keys), (MAX_POS, HIDDEN))
    type_emb = nrm(next(keys), (2, HIDDEN))
    emb_ln_g = jnp.ones((1, HIDDEN), jnp.float32)
    emb_ln_b = jnp.zeros((1, HIDDEN), jnp.float32)
    # fused QKV weights: [q | k | v] along the output dim, stacked per layer
    qkv_w = nrm(next(keys), (LAYERS, HIDDEN, 3 * HIDDEN))
    qkv_b = jnp.zeros((LAYERS, 1, 3 * HIDDEN), jnp.float32)
    ao_w = nrm(next(keys), (LAYERS, HIDDEN, HIDDEN))
    ao_b = jnp.zeros((LAYERS, 1, HIDDEN), jnp.float32)
    ln1_g = jnp.ones((LAYERS, 1, HIDDEN), jnp.float32)
    ln1_b = jnp.zeros((LAYERS, 1, HIDDEN), jnp.float32)
    ff1_w = nrm(next(keys), (LAYERS, HIDDEN, INTERMEDIATE))
    ff1_b = jnp.zeros((LAYERS, 1, INTERMEDIATE), jnp.float32)
    ff2_w = nrm(next(keys), (LAYERS, INTERMEDIATE, HIDDEN))
    ff2_b = jnp.zeros((LAYERS, 1, HIDDEN), jnp.float32)
    ln2_g = jnp.ones((LAYERS, 1, HIDDEN), jnp.float32)
    ln2_b = jnp.zeros((LAYERS, 1, HIDDEN), jnp.float32)
    pooler_w = nrm(next(keys), (HIDDEN, HIDDEN))
    pooler_b = jnp.zeros((1, HIDDEN), jnp.float32)
    out_w = nrm(next(keys), (HIDDEN, N_CLASSES))
    out_b = jnp.zeros((1, N_CLASSES), jnp.float32)

    # One-time transform: fold attention scale 1/sqrt(Dh) into the Q projection.
    scale = 1.0 / math.sqrt(HEAD_DIM)
    qkv_w = qkv_w.at[:, :, :HIDDEN].multiply(scale)
    qkv_b = qkv_b.at[:, :, :HIDDEN].multiply(scale)

    return {
        "word_emb": word_emb,
        "pos_emb": pos_emb,
        "type_emb": type_emb,
        # packed operands (fewer, larger HBM->VMEM DMAs)
        "w_hid": jnp.concatenate([qkv_w, ao_w, ff1_w], axis=2),       # (L,H,192)
        "w_ff2": ff2_w,                                               # (L,I,H)
        "b_layer": jnp.concatenate([qkv_b, ao_b, ln1_g, ln1_b,
                                    ff1_b, ff2_b, ln2_g, ln2_b],
                                   axis=2),                           # (L,1,352)
        "head_w": jnp.concatenate([pooler_w, out_w], axis=1),         # (H, H+3)
        "head_b": jnp.concatenate([emb_ln_g, emb_ln_b, pooler_b, out_b],
                                  axis=1),                            # (1, 3H+3)
    }


# ----------------------------------------------------------------------------
# Forward wrapper: plain-JAX embedding gather + ONE fused pallas_call
# ----------------------------------------------------------------------------
@jax.jit
def bert_vanilla_classifier(params, input_ids, attention_mask):
    B, S = input_ids.shape
    BS = B * S

    # --- embeddings (table gathers are plain-JAX glue) ---
    positions = jnp.arange(S)
    # TODO(synk): token_type_ids fixed to 0 (reference calls BertModel with no type ids)
    emb = (params["word_emb"][input_ids]
           + params["pos_emb"][positions][None, :, :]
           + params["type_emb"][0][None, None, :])                   # (B,S,H)
    x = emb.reshape(BS, HIDDEN).astype(jnp.float32)
    mask = attention_mask.reshape(1, BS).astype(jnp.float32)         # (1, BS)

    operands = (x, mask,
                params["w_hid"], params["w_ff2"], params["b_layer"],
                params["head_w"], params["head_b"])

    logits = pl.pallas_call(
        functools.partial(_fused_bert_kernel, batch=B, seq=S),
        out_shape=jax.ShapeDtypeStruct((B, N_CLASSES), jnp.float32),
        in_specs=[pl.BlockSpec(memory_space=pltpu.MemorySpace.VMEM)
                  for _ in operands],
        out_specs=pl.BlockSpec(memory_space=pltpu.MemorySpace.VMEM),
    )(*operands)
    return logits


if __name__ == "__main__":
    key = jax.random.PRNGKey(0)
    pkey, ikey = jax.random.split(key, 2)

    params = init_params(pkey)

    B, S = 2, 8
    input_ids = jax.random.randint(ikey, (B, S), 0, VOCAB, dtype=jnp.int32)
    attention_mask = jnp.ones((B, S), dtype=jnp.int32)
    # mask out last two tokens of second example
    attention_mask = attention_mask.at[1, 6:].set(0)

    logits = bert_vanilla_classifier(params, input_ids, attention_mask)
    jax.block_until_ready(logits)
    assert logits.shape == (B, N_CLASSES)
    print("KERNEL_OK")
</pallas_src>

<mosaic_0001>
module attributes {stable_mosaic.version = 11 : i64} {
  func.func @_fused_bert_kernel(%arg0: memref<16x32xf32, #tpu.memory_space<vmem>>, %arg1: memref<1x16xf32, #tpu.memory_space<vmem>>, %arg2: memref<2x32x192xf32, #tpu.memory_space<vmem>>, %arg3: memref<2x64x32xf32, #tpu.memory_space<vmem>>, %arg4: memref<2x1x352xf32, #tpu.memory_space<vmem>>, %arg5: memref<32x35xf32, #tpu.memory_space<vmem>>, %arg6: memref<1x99xf32, #tpu.memory_space<vmem>>, %arg7: memref<2x3xf32, #tpu.memory_space<vmem>>) attributes {dimension_semantics = [], scalar_prefetch = 0 : i64, scratch_operands = 0 : i64, tpu.core_type = #tpu.core_type<tc>} {
    %0 = tpu.iota {dimensions = array<i32: 0>} : vector<16x16xi32>
    %1 = tpu.iota {dimensions = array<i32: 1>} : vector<16x16xi32>
    %c3_i32 = arith.constant 3 : i32
    %2 = vector.broadcast %c3_i32 : i32 to vector<16x16xi32>
    %3 = arith.shrsi %0, %2 : vector<16x16xi32>
    %c3_i32_0 = arith.constant 3 : i32
    %4 = vector.broadcast %c3_i32_0 : i32 to vector<16x16xi32>
    %5 = arith.shrsi %1, %4 : vector<16x16xi32>
    %6 = arith.cmpi eq, %3, %5 : vector<16x16xi32>
    %c0 = arith.constant 0 : index
    %c0_1 = arith.constant 0 : index
    %7 = vector.load %arg1[%c0, %c0_1] : memref<1x16xf32, #tpu.memory_space<vmem>>, vector<1x16xf32>
    %cst = arith.constant 5.000000e-01 : f32
    %8 = vector.broadcast %cst : f32 to vector<1x16xf32>
    %9 = arith.cmpf ogt, %7, %8 : vector<1x16xf32>
    %10 = vector.broadcast %9 : vector<1x16xi1> to vector<16x16xi1>
    %11 = arith.andi %6, %10 : vector<16x16xi1>
    %cst_2 = arith.constant 0.000000e+00 : f32
    %cst_3 = arith.constant -1.000000e+09 : f32
    %12 = vector.broadcast %cst_2 : f32 to vector<16x16xf32>
    %13 = vector.broadcast %cst_3 : f32 to vector<16x16xf32>
    %14 = arith.select %11, %12, %13 : vector<16x16xi1>, vector<16x16xf32>
    %c0_4 = arith.constant 0 : index
    %c0_5 = arith.constant 0 : index
    %15 = vector.load %arg0[%c0_4, %c0_5] : memref<16x32xf32, #tpu.memory_space<vmem>>, vector<16x32xf32>
    %c0_6 = arith.constant 0 : index
    %c0_7 = arith.constant 0 : index
    %16 = vector.load %arg6[%c0_6, %c0_7] : memref<1x99xf32, #tpu.memory_space<vmem>>, vector<1x32xf32>
    %c0_8 = arith.constant 0 : index
    %c32 = arith.constant 32 : index
    %17 = vector.load %arg6[%c0_8, %c32] : memref<1x99xf32, #tpu.memory_space<vmem>>, vector<1x32xf32>
    %cst_9 = arith.constant dense<0.000000e+00> : vector<16xf32>
    %18 = vector.multi_reduction <add>, %15, %cst_9 [1] : vector<16x32xf32> to vector<16xf32>
    %19 = vector.shape_cast %18 : vector<16xf32> to vector<16x1xf32>
    %cst_10 = arith.constant 3.200000e+01 : f32
    %20 = vector.broadcast %cst_10 : f32 to vector<16x1xf32>
    %21 = arith.divf %19, %20 : vector<16x1xf32>
    %22 = vector.broadcast %21 : vector<16x1xf32> to vector<16x32xf32>
    %23 = arith.subf %15, %22 : vector<16x32xf32>
    %24 = arith.mulf %23, %23 : vector<16x32xf32>
    %cst_11 = arith.constant dense<0.000000e+00> : vector<16xf32>
    %25 = vector.multi_reduction <add>, %24, %cst_11 [1] : vector<16x32xf32> to vector<16xf32>
    %26 = vector.shape_cast %25 : vector<16xf32> to vector<16x1xf32>
    %cst_12 = arith.constant 3.200000e+01 : f32
    %27 = vector.broadcast %cst_12 : f32 to vector<16x1xf32>
    %28 = arith.divf %26, %27 : vector<16x1xf32>
    %cst_13 = arith.constant 9.99999996E-13 : f32
    %29 = vector.broadcast %cst_13 : f32 to vector<16x1xf32>
    %30 = arith.addf %28, %29 : vector<16x1xf32>
    %31 = math.rsqrt %30 : vector<16x1xf32>
    %32 = vector.broadcast %31 : vector<16x1xf32> to vector<16x32xf32>
    %33 = arith.mulf %23, %32 : vector<16x32xf32>
    %34 = vector.broadcast %16 : vector<1x32xf32> to vector<16x32xf32>
    %35 = arith.mulf %33, %34 : vector<16x32xf32>
    %36 = vector.broadcast %17 : vector<1x32xf32> to vector<16x32xf32>
    %37 = arith.addf %35, %36 : vector<16x32xf32>
    %c0_14 = arith.constant 0 : index
    %c0_15 = arith.constant 0 : index
    %c0_16 = arith.constant 0 : index
    %38 = vector.load %arg2[%c0_14, %c0_15, %c0_16] : memref<2x32x192xf32, #tpu.memory_space<vmem>>, vector<1x32x96xf32>
    %39 = vector.shape_cast %38 : vector<1x32x96xf32> to vector<32x96xf32>
    %cst_17 = arith.constant dense<0.000000e+00> : vector<16x96xf32>
    %40 = tpu.matmul %37, %39, %cst_17 {dimension_numbers = #tpu.dot_dimension_numbers<[1], [0], [0], [1], [0, 0, 1, 1], [], []>} : vector<16x32xf32>, vector<32x96xf32>, vector<16x96xf32> -> vector<16x96xf32>
    %c0_18 = arith.constant 0 : index
    %c0_19 = arith.constant 0 : index
    %c0_20 = arith.constant 0 : index
    %41 = vector.load %arg4[%c0_18, %c0_19, %c0_20] : memref<2x1x352xf32, #tpu.memory_space<vmem>>, vector<1x1x96xf32>
    %42 = vector.shape_cast %41 : vector<1x1x96xf32> to vector<1x96xf32>
    %43 = vector.broadcast %42 : vector<1x96xf32> to vector<16x96xf32>
    %44 = arith.addf %40, %43 : vector<16x96xf32>
    %45 = vector.extract_strided_slice %44 {offsets = [0, 0], sizes = [16, 32], strides = [1, 1]} : vector<16x96xf32> to vector<16x32xf32>
    %46 = vector.shape_cast %45 : vector<16x32xf32> to vector<16x4x8xf32>
    %47 = tpu.transpose %46, [1, 0, 2] : vector<16x4x8xf32> -> vector<4x16x8xf32>
    %48 = vector.extract_strided_slice %44 {offsets = [0, 32], sizes = [16, 32], strides = [1, 1]} : vector<16x96xf32> to vector<16x32xf32>
    %49 = vector.shape_cast %48 : vector<16x32xf32> to vector<16x4x8xf32>
    %50 = tpu.transpose %49, [1, 0, 2] : vector<16x4x8xf32> -> vector<4x16x8xf32>
    %51 = vector.extract_strided_slice %44 {offsets = [0, 64], sizes = [16, 32], strides = [1, 1]} : vector<16x96xf32> to vector<16x32xf32>
    %52 = vector.shape_cast %51 : vector<16x32xf32> to vector<16x4x8xf32>
    %53 = tpu.transpose %52, [1, 0, 2] : vector<16x4x8xf32> -> vector<4x16x8xf32>
    "tpu.trace_start"() <{level = 10 : i32, message = "hqd,hkd->hqk"}> : () -> ()
    %cst_21 = arith.constant dense<0.000000e+00> : vector<4x16x16xf32>
    %54 = tpu.matmul %47, %50, %cst_21 {dimension_numbers = #tpu.dot_dimension_numbers<[2], [2], [1], [1], [0, 0, 0, 1, 1, 1], [0], [0]>} : vector<4x16x8xf32>, vector<4x16x8xf32>, vector<4x16x16xf32> -> vector<4x16x16xf32>
    "tpu.trace_stop"() : () -> ()
    %55 = vector.shape_cast %14 : vector<16x16xf32> to vector<1x16x16xf32>
    %56 = vector.broadcast %55 : vector<1x16x16xf32> to vector<4x16x16xf32>
    %57 = arith.addf %54, %56 : vector<4x16x16xf32>
    %cst_22 = arith.constant dense<0xFF800000> : vector<4x16xf32>
    %58 = vector.multi_reduction <maximumf>, %57, %cst_22 [2] : vector<4x16x16xf32> to vector<4x16xf32>
    %59 = vector.shape_cast %58 : vector<4x16xf32> to vector<4x16x1xf32>
    %60 = vector.broadcast %59 : vector<4x16x1xf32> to vector<4x16x16xf32>
    %61 = arith.subf %57, %60 : vector<4x16x16xf32>
    %62 = math.exp %61 : vector<4x16x16xf32>
    %cst_23 = arith.constant dense<0.000000e+00> : vector<4x16xf32>
    %63 = vector.multi_reduction <add>, %62, %cst_23 [2] : vector<4x16x16xf32> to vector<4x16xf32>
    %64 = vector.shape_cast %63 : vector<4x16xf32> to vector<4x16x1xf32>
    %65 = tpu.reciprocal %64 {approx = true} : vector<4x16x1xf32> -> vector<4x16x1xf32>
    %66 = vector.broadcast %65 : vector<4x16x1xf32> to vector<4x16x16xf32>
    %67 = arith.mulf %62, %66 : vector<4x16x16xf32>
    "tpu.trace_start"() <{level = 10 : i32, message = "hqk,hkd->hqd"}> : () -> ()
    %cst_24 = arith.constant dense<0.000000e+00> : vector<4x16x8xf32>
    %68 = tpu.matmul %67, %53, %cst_24 {dimension_numbers = #tpu.dot_dimension_numbers<[2], [1], [1], [2], [0, 0, 0, 1, 1, 2], [0], [0]>} : vector<4x16x16xf32>, vector<4x16x8xf32>, vector<4x16x8xf32> -> vector<4x16x8xf32>
    "tpu.trace_stop"() : () -> ()
    %69 = tpu.transpose %68, [1, 0, 2] : vector<4x16x8xf32> -> vector<16x4x8xf32>
    %70 = vector.shape_cast %69 : vector<16x4x8xf32> to vector<16x32xf32>
    %c0_25 = arith.constant 0 : index
    %c0_26 = arith.constant 0 : index
    %c96 = arith.constant 96 : index
    %71 = vector.load %arg2[%c0_25, %c0_26, %c96] : memref<2x32x192xf32, #tpu.memory_space<vmem>>, vector<1x32x32xf32>
    %72 = vector.shape_cast %71 : vector<1x32x32xf32> to vector<32x32xf32>
    %cst_27 = arith.constant dense<0.000000e+00> : vector<16x32xf32>
    %73 = tpu.matmul %70, %72, %cst_27 {dimension_numbers = #tpu.dot_dimension_numbers<[1], [0], [0], [1], [0, 0, 1, 1], [], []>} : vector<16x32xf32>, vector<32x32xf32>, vector<16x32xf32> -> vector<16x32xf32>
    %c0_28 = arith.constant 0 : index
    %c0_29 = arith.constant 0 : index
    %c96_30 = arith.constant 96 : index
    %74 = vector.load %arg4[%c0_28, %c0_29, %c96_30] : memref<2x1x352xf32, #tpu.memory_space<vmem>>, vector<1x1x32xf32>
    %75 = vector.shape_cast %74 : vector<1x1x32xf32> to vector<1x32xf32>
    %76 = vector.broadcast %75 : vector<1x32xf32> to vector<16x32xf32>
    %77 = arith.addf %73, %76 : vector<16x32xf32>
    %78 = arith.addf %77, %37 : vector<16x32xf32>
    %c0_31 = arith.constant 0 : index
    %c0_32 = arith.constant 0 : index
    %c128 = arith.constant 128 : index
    %79 = vector.load %arg4[%c0_31, %c0_32, %c128] : memref<2x1x352xf32, #tpu.memory_space<vmem>>, vector<1x1x32xf32>
    %80 = vector.shape_cast %79 : vector<1x1x32xf32> to vector<1x32xf32>
    %c0_33 = arith.constant 0 : index
    %c0_34 = arith.constant 0 : index
    %c160 = arith.constant 160 : index
    %81 = vector.load %arg4[%c0_33, %c0_34, %c160] : memref<2x1x352xf32, #tpu.memory_space<vmem>>, vector<1x1x32xf32>
    %82 = vector.shape_cast %81 : vector<1x1x32xf32> to vector<1x32xf32>
    %cst_35 = arith.constant dense<0.000000e+00> : vector<16xf32>
    %83 = vector.multi_reduction <add>, %78, %cst_35 [1] : vector<16x32xf32> to vector<16xf32>
    %84 = vector.shape_cast %83 : vector<16xf32> to vector<16x1xf32>
    %cst_36 = arith.constant 3.200000e+01 : f32
    %85 = vector.broadcast %cst_36 : f32 to vector<16x1xf32>
    %86 = arith.divf %84, %85 : vector<16x1xf32>
    %87 = vector.broadcast %86 : vector<16x1xf32> to vector<16x32xf32>
    %88 = arith.subf %78, %87 : vector<16x32xf32>
    %89 = arith.mulf %88, %88 : vector<16x32xf32>
    %cst_37 = arith.constant dense<0.000000e+00> : vector<16xf32>
    %90 = vector.multi_reduction <add>, %89, %cst_37 [1] : vector<16x32xf32> to vector<16xf32>
    %91 = vector.shape_cast %90 : vector<16xf32> to vector<16x1xf32>
    %cst_38 = arith.constant 3.200000e+01 : f32
    %92 = vector.broadcast %cst_38 : f32 to vector<16x1xf32>
    %93 = arith.divf %91, %92 : vector<16x1xf32>
    %cst_39 = arith.constant 9.99999996E-13 : f32
    %94 = vector.broadcast %cst_39 : f32 to vector<16x1xf32>
    %95 = arith.addf %93, %94 : vector<16x1xf32>
    %96 = math.rsqrt %95 : vector<16x1xf32>
    %97 = vector.broadcast %96 : vector<16x1xf32> to vector<16x32xf32>
    %98 = arith.mulf %88, %97 : vector<16x32xf32>
    %99 = vector.broadcast %80 : vector<1x32xf32> to vector<16x32xf32>
    %100 = arith.mulf %98, %99 : vector<16x32xf32>
    %101 = vector.broadcast %82 : vector<1x32xf32> to vector<16x32xf32>
    %102 = arith.addf %100, %101 : vector<16x32xf32>
    %c0_40 = arith.constant 0 : index
    %c0_41 = arith.constant 0 : index
    %c128_42 = arith.constant 128 : index
    %103 = vector.load %arg2[%c0_40, %c0_41, %c128_42] : memref<2x32x192xf32, #tpu.memory_space<vmem>>, vector<1x32x64xf32>
    %104 = vector.shape_cast %103 : vector<1x32x64xf32> to vector<32x64xf32>
    %cst_43 = arith.constant dense<0.000000e+00> : vector<16x64xf32>
    %105 = tpu.matmul %102, %104, %cst_43 {dimension_numbers = #tpu.dot_dimension_numbers<[1], [0], [0], [1], [0, 0, 1, 1], [], []>} : vector<16x32xf32>, vector<32x64xf32>, vector<16x64xf32> -> vector<16x64xf32>
    %c0_44 = arith.constant 0 : index
    %c0_45 = arith.constant 0 : index
    %c192 = arith.constant 192 : index
    %106 = vector.load %arg4[%c0_44, %c0_45, %c192] : memref<2x1x352xf32, #tpu.memory_space<vmem>>, vector<1x1x64xf32>
    %107 = vector.shape_cast %106 : vector<1x1x64xf32> to vector<1x64xf32>
    %108 = vector.broadcast %107 : vector<1x64xf32> to vector<16x64xf32>
    %109 = arith.addf %105, %108 : vector<16x64xf32>
    %cst_46 = arith.constant 5.000000e-01 : f32
    %110 = vector.broadcast %cst_46 : f32 to vector<16x64xf32>
    %111 = arith.mulf %110, %109 : vector<16x64xf32>
    %cst_47 = arith.constant 4.471500e-02 : f32
    %112 = vector.broadcast %cst_47 : f32 to vector<16x64xf32>
    %113 = arith.mulf %112, %109 : vector<16x64xf32>
    %114 = arith.mulf %113, %109 : vector<16x64xf32>
    %115 = arith.mulf %114, %109 : vector<16x64xf32>
    %116 = arith.addf %109, %115 : vector<16x64xf32>
    %cst_48 = arith.constant 0.797884583 : f32
    %117 = vector.broadcast %cst_48 : f32 to vector<16x64xf32>
    %118 = arith.mulf %117, %116 : vector<16x64xf32>
    %119 = math.tanh %118 : vector<16x64xf32>
    %cst_49 = arith.constant 1.000000e+00 : f32
    %120 = vector.broadcast %cst_49 : f32 to vector<16x64xf32>
    %121 = arith.addf %120, %119 : vector<16x64xf32>
    %122 = arith.mulf %111, %121 : vector<16x64xf32>
    %c0_50 = arith.constant 0 : index
    %c0_51 = arith.constant 0 : index
    %c0_52 = arith.constant 0 : index
    %123 = vector.load %arg3[%c0_50, %c0_51, %c0_52] : memref<2x64x32xf32, #tpu.memory_space<vmem>>, vector<1x64x32xf32>
    %124 = vector.shape_cast %123 : vector<1x64x32xf32> to vector<64x32xf32>
    %cst_53 = arith.constant dense<0.000000e+00> : vector<16x32xf32>
    %125 = tpu.matmul %122, %124, %cst_53 {dimension_numbers = #tpu.dot_dimension_numbers<[1], [0], [0], [1], [0, 0, 1, 1], [], []>} : vector<16x64xf32>, vector<64x32xf32>, vector<16x32xf32> -> vector<16x32xf32>
    %c0_54 = arith.constant 0 : index
    %c0_55 = arith.constant 0 : index
    %c256 = arith.constant 256 : index
    %126 = vector.load %arg4[%c0_54, %c0_55, %c256] : memref<2x1x352xf32, #tpu.memory_space<vmem>>, vector<1x1x32xf32>
    %127 = vector.shape_cast %126 : vector<1x1x32xf32> to vector<1x32xf32>
    %128 = vector.broadcast %127 : vector<1x32xf32> to vector<16x32xf32>
    %129 = arith.addf %125, %128 : vector<16x32xf32>
    %130 = arith.addf %129, %102 : vector<16x32xf32>
    %c0_56 = arith.constant 0 : index
    %c0_57 = arith.constant 0 : index
    %c288 = arith.constant 288 : index
    %131 = vector.load %arg4[%c0_56, %c0_57, %c288] : memref<2x1x352xf32, #tpu.memory_space<vmem>>, vector<1x1x32xf32>
    %132 = vector.shape_cast %131 : vector<1x1x32xf32> to vector<1x32xf32>
    %c0_58 = arith.constant 0 : index
    %c0_59 = arith.constant 0 : index
    %c320 = arith.constant 320 : index
    %133 = vector.load %arg4[%c0_58, %c0_59, %c320] : memref<2x1x352xf32, #tpu.memory_space<vmem>>, vector<1x1x32xf32>
    %134 = vector.shape_cast %133 : vector<1x1x32xf32> to vector<1x32xf32>
    %cst_60 = arith.constant dense<0.000000e+00> : vector<16xf32>
    %135 = vector.multi_reduction <add>, %130, %cst_60 [1] : vector<16x32xf32> to vector<16xf32>
    %136 = vector.shape_cast %135 : vector<16xf32> to vector<16x1xf32>
    %cst_61 = arith.constant 3.200000e+01 : f32
    %137 = vector.broadcast %cst_61 : f32 to vector<16x1xf32>
    %138 = arith.divf %136, %137 : vector<16x1xf32>
    %139 = vector.broadcast %138 : vector<16x1xf32> to vector<16x32xf32>
    %140 = arith.subf %130, %139 : vector<16x32xf32>
    %141 = arith.mulf %140, %140 : vector<16x32xf32>
    %cst_62 = arith.constant dense<0.000000e+00> : vector<16xf32>
    %142 = vector.multi_reduction <add>, %141, %cst_62 [1] : vector<16x32xf32> to vector<16xf32>
    %143 = vector.shape_cast %142 : vector<16xf32> to vector<16x1xf32>
    %cst_63 = arith.constant 3.200000e+01 : f32
    %144 = vector.broadcast %cst_63 : f32 to vector<16x1xf32>
    %145 = arith.divf %143, %144 : vector<16x1xf32>
    %cst_64 = arith.constant 9.99999996E-13 : f32
    %146 = vector.broadcast %cst_64 : f32 to vector<16x1xf32>
    %147 = arith.addf %145, %146 : vector<16x1xf32>
    %148 = math.rsqrt %147 : vector<16x1xf32>
    %149 = vector.broadcast %148 : vector<16x1xf32> to vector<16x32xf32>
    %150 = arith.mulf %140, %149 : vector<16x32xf32>
    %151 = vector.broadcast %132 : vector<1x32xf32> to vector<16x32xf32>
    %152 = arith.mulf %150, %151 : vector<16x32xf32>
    %153 = vector.broadcast %134 : vector<1x32xf32> to vector<16x32xf32>
    %154 = arith.addf %152, %153 : vector<16x32xf32>
    %c1 = arith.constant 1 : index
    %c0_65 = arith.constant 0 : index
    %c0_66 = arith.constant 0 : index
    %155 = vector.load %arg2[%c1, %c0_65, %c0_66] : memref<2x32x192xf32, #tpu.memory_space<vmem>>, vector<1x32x96xf32>
    %156 = vector.shape_cast %155 : vector<1x32x96xf32> to vector<32x96xf32>
    %cst_67 = arith.constant dense<0.000000e+00> : vector<16x96xf32>
    %157 = tpu.matmul %154, %156, %cst_67 {dimension_numbers = #tpu.dot_dimension_numbers<[1], [0], [0], [1], [0, 0, 1, 1], [], []>} : vector<16x32xf32>, vector<32x96xf32>, vector<16x96xf32> -> vector<16x96xf32>
    %c1_68 = arith.constant 1 : index
    %c0_69 = arith.constant 0 : index
    %c0_70 = arith.constant 0 : index
    %158 = vector.load %arg4[%c1_68, %c0_69, %c0_70] : memref<2x1x352xf32, #tpu.memory_space<vmem>>, vector<1x1x96xf32>
    %159 = vector.shape_cast %158 : vector<1x1x96xf32> to vector<1x96xf32>
    %160 = vector.broadcast %159 : vector<1x96xf32> to vector<16x96xf32>
    %161 = arith.addf %157, %160 : vector<16x96xf32>
    %162 = vector.extract_strided_slice %161 {offsets = [0, 0], sizes = [16, 32], strides = [1, 1]} : vector<16x96xf32> to vector<16x32xf32>
    %163 = vector.shape_cast %162 : vector<16x32xf32> to vector<16x4x8xf32>
    %164 = tpu.transpose %163, [1, 0, 2] : vector<16x4x8xf32> -> vector<4x16x8xf32>
    %165 = vector.extract_strided_slice %161 {offsets = [0, 32], sizes = [16, 32], strides = [1, 1]} : vector<16x96xf32> to vector<16x32xf32>
    %166 = vector.shape_cast %165 : vector<16x32xf32> to vector<16x4x8xf32>
    %167 = tpu.transpose %166, [1, 0, 2] : vector<16x4x8xf32> -> vector<4x16x8xf32>
    %168 = vector.extract_strided_slice %161 {offsets = [0, 64], sizes = [16, 32], strides = [1, 1]} : vector<16x96xf32> to vector<16x32xf32>
    %169 = vector.shape_cast %168 : vector<16x32xf32> to vector<16x4x8xf32>
    %170 = tpu.transpose %169, [1, 0, 2] : vector<16x4x8xf32> -> vector<4x16x8xf32>
    "tpu.trace_start"() <{level = 10 : i32, message = "hqd,hkd->hqk"}> : () -> ()
    %cst_71 = arith.constant dense<0.000000e+00> : vector<4x16x16xf32>
    %171 = tpu.matmul %164, %167, %cst_71 {dimension_numbers = #tpu.dot_dimension_numbers<[2], [2], [1], [1], [0, 0, 0, 1, 1, 1], [0], [0]>} : vector<4x16x8xf32>, vector<4x16x8xf32>, vector<4x16x16xf32> -> vector<4x16x16xf32>
    "tpu.trace_stop"() : () -> ()
    %172 = vector.shape_cast %14 : vector<16x16xf32> to vector<1x16x16xf32>
    %173 = vector.broadcast %172 : vector<1x16x16xf32> to vector<4x16x16xf32>
    %174 = arith.addf %171, %173 : vector<4x16x16xf32>
    %cst_72 = arith.constant dense<0xFF800000> : vector<4x16xf32>
    %175 = vector.multi_reduction <maximumf>, %174, %cst_72 [2] : vector<4x16x16xf32> to vector<4x16xf32>
    %176 = vector.shape_cast %175 : vector<4x16xf32> to vector<4x16x1xf32>
    %177 = vector.broadcast %176 : vector<4x16x1xf32> to vector<4x16x16xf32>
    %178 = arith.subf %174, %177 : vector<4x16x16xf32>
    %179 = math.exp %178 : vector<4x16x16xf32>
    %cst_73 = arith.constant dense<0.000000e+00> : vector<4x16xf32>
    %180 = vector.multi_reduction <add>, %179, %cst_73 [2] : vector<4x16x16xf32> to vector<4x16xf32>
    %181 = vector.shape_cast %180 : vector<4x16xf32> to vector<4x16x1xf32>
    %182 = tpu.reciprocal %181 {approx = true} : vector<4x16x1xf32> -> vector<4x16x1xf32>
    %183 = vector.broadcast %182 : vector<4x16x1xf32> to vector<4x16x16xf32>
    %184 = arith.mulf %179, %183 : vector<4x16x16xf32>
    "tpu.trace_start"() <{level = 10 : i32, message = "hqk,hkd->hqd"}> : () -> ()
    %cst_74 = arith.constant dense<0.000000e+00> : vector<4x16x8xf32>
    %185 = tpu.matmul %184, %170, %cst_74 {dimension_numbers = #tpu.dot_dimension_numbers<[2], [1], [1], [2], [0, 0, 0, 1, 1, 2], [0], [0]>} : vector<4x16x16xf32>, vector<4x16x8xf32>, vector<4x16x8xf32> -> vector<4x16x8xf32>
    "tpu.trace_stop"() : () -> ()
    %186 = tpu.transpose %185, [1, 0, 2] : vector<4x16x8xf32> -> vector<16x4x8xf32>
    %187 = vector.shape_cast %186 : vector<16x4x8xf32> to vector<16x32xf32>
    %c1_75 = arith.constant 1 : index
    %c0_76 = arith.constant 0 : index
    %c96_77 = arith.constant 96 : index
    %188 = vector.load %arg2[%c1_75, %c0_76, %c96_77] : memref<2x32x192xf32, #tpu.memory_space<vmem>>, vector<1x32x32xf32>
    %189 = vector.shape_cast %188 : vector<1x32x32xf32> to vector<32x32xf32>
    %cst_78 = arith.constant dense<0.000000e+00> : vector<16x32xf32>
    %190 = tpu.matmul %187, %189, %cst_78 {dimension_numbers = #tpu.dot_dimension_numbers<[1], [0], [0], [1], [0, 0, 1, 1], [], []>} : vector<16x32xf32>, vector<32x32xf32>, vector<16x32xf32> -> vector<16x32xf32>
    %c1_79 = arith.constant 1 : index
    %c0_80 = arith.constant 0 : index
    %c96_81 = arith.constant 96 : index
    %191 = vector.load %arg4[%c1_79, %c0_80, %c96_81] : memref<2x1x352xf32, #tpu.memory_space<vmem>>, vector<1x1x32xf32>
    %192 = vector.shape_cast %191 : vector<1x1x32xf32> to vector<1x32xf32>
    %193 = vector.broadcast %192 : vector<1x32xf32> to vector<16x32xf32>
    %194 = arith.addf %190, %193 : vector<16x32xf32>
    %195 = arith.addf %194, %154 : vector<16x32xf32>
    %c1_82 = arith.constant 1 : index
    %c0_83 = arith.constant 0 : index
    %c128_84 = arith.constant 128 : index
    %196 = vector.load %arg4[%c1_82, %c0_83, %c128_84] : memref<2x1x352xf32, #tpu.memory_space<vmem>>, vector<1x1x32xf32>
    %197 = vector.shape_cast %196 : vector<1x1x32xf32> to vector<1x32xf32>
    %c1_85 = arith.constant 1 : index
    %c0_86 = arith.constant 0 : index
    %c160_87 = arith.constant 160 : index
    %198 = vector.load %arg4[%c1_85, %c0_86, %c160_87] : memref<2x1x352xf32, #tpu.memory_space<vmem>>, vector<1x1x32xf32>
    %199 = vector.shape_cast %198 : vector<1x1x32xf32> to vector<1x32xf32>
    %cst_88 = arith.constant dense<0.000000e+00> : vector<16xf32>
    %200 = vector.multi_reduction <add>, %195, %cst_88 [1] : vector<16x32xf32> to vector<16xf32>
    %201 = vector.shape_cast %200 : vector<16xf32> to vector<16x1xf32>
    %cst_89 = arith.constant 3.200000e+01 : f32
    %202 = vector.broadcast %cst_89 : f32 to vector<16x1xf32>
    %203 = arith.divf %201, %202 : vector<16x1xf32>
    %204 = vector.broadcast %203 : vector<16x1xf32> to vector<16x32xf32>
    %205 = arith.subf %195, %204 : vector<16x32xf32>
    %206 = arith.mulf %205, %205 : vector<16x32xf32>
    %cst_90 = arith.constant dense<0.000000e+00> : vector<16xf32>
    %207 = vector.multi_reduction <add>, %206, %cst_90 [1] : vector<16x32xf32> to vector<16xf32>
    %208 = vector.shape_cast %207 : vector<16xf32> to vector<16x1xf32>
    %cst_91 = arith.constant 3.200000e+01 : f32
    %209 = vector.broadcast %cst_91 : f32 to vector<16x1xf32>
    %210 = arith.divf %208, %209 : vector<16x1xf32>
    %cst_92 = arith.constant 9.99999996E-13 : f32
    %211 = vector.broadcast %cst_92 : f32 to vector<16x1xf32>
    %212 = arith.addf %210, %211 : vector<16x1xf32>
    %213 = math.rsqrt %212 : vector<16x1xf32>
    %214 = vector.broadcast %213 : vector<16x1xf32> to vector<16x32xf32>
    %215 = arith.mulf %205, %214 : vector<16x32xf32>
    %216 = vector.broadcast %197 : vector<1x32xf32> to vector<16x32xf32>
    %217 = arith.mulf %215, %216 : vector<16x32xf32>
    %218 = vector.broadcast %199 : vector<1x32xf32> to vector<16x32xf32>
    %219 = arith.addf %217, %218 : vector<16x32xf32>
    %c1_93 = arith.constant 1 : index
    %c0_94 = arith.constant 0 : index
    %c128_95 = arith.constant 128 : index
    %220 = vector.load %arg2[%c1_93, %c0_94, %c128_95] : memref<2x32x192xf32, #tpu.memory_space<vmem>>, vector<1x32x64xf32>
    %221 = vector.shape_cast %220 : vector<1x32x64xf32> to vector<32x64xf32>
    %cst_96 = arith.constant dense<0.000000e+00> : vector<16x64xf32>
    %222 = tpu.matmul %219, %221, %cst_96 {dimension_numbers = #tpu.dot_dimension_numbers<[1], [0], [0], [1], [0, 0, 1, 1], [], []>} : vector<16x32xf32>, vector<32x64xf32>, vector<16x64xf32> -> vector<16x64xf32>
    %c1_97 = arith.constant 1 : index
    %c0_98 = arith.constant 0 : index
    %c192_99 = arith.constant 192 : index
    %223 = vector.load %arg4[%c1_97, %c0_98, %c192_99] : memref<2x1x352xf32, #tpu.memory_space<vmem>>, vector<1x1x64xf32>
    %224 = vector.shape_cast %223 : vector<1x1x64xf32> to vector<1x64xf32>
    %225 = vector.broadcast %224 : vector<1x64xf32> to vector<16x64xf32>
    %226 = arith.addf %222, %225 : vector<16x64xf32>
    %cst_100 = arith.constant 5.000000e-01 : f32
    %227 = vector.broadcast %cst_100 : f32 to vector<16x64xf32>
    %228 = arith.mulf %227, %226 : vector<16x64xf32>
    %cst_101 = arith.constant 4.471500e-02 : f32
    %229 = vector.broadcast %cst_101 : f32 to vector<16x64xf32>
    %230 = arith.mulf %229, %226 : vector<16x64xf32>
    %231 = arith.mulf %230, %226 : vector<16x64xf32>
    %232 = arith.mulf %231, %226 : vector<16x64xf32>
    %233 = arith.addf %226, %232 : vector<16x64xf32>
    %cst_102 = arith.constant 0.797884583 : f32
    %234 = vector.broadcast %cst_102 : f32 to vector<16x64xf32>
    %235 = arith.mulf %234, %233 : vector<16x64xf32>
    %236 = math.tanh %235 : vector<16x64xf32>
    %cst_103 = arith.constant 1.000000e+00 : f32
    %237 = vector.broadcast %cst_103 : f32 to vector<16x64xf32>
    %238 = arith.addf %237, %236 : vector<16x64xf32>
    %239 = arith.mulf %228, %238 : vector<16x64xf32>
    %c1_104 = arith.constant 1 : index
    %c0_105 = arith.constant 0 : index
    %c0_106 = arith.constant 0 : index
    %240 = vector.load %arg3[%c1_104, %c0_105, %c0_106] : memref<2x64x32xf32, #tpu.memory_space<vmem>>, vector<1x64x32xf32>
    %241 = vector.shape_cast %240 : vector<1x64x32xf32> to vector<64x32xf32>
    %cst_107 = arith.constant dense<0.000000e+00> : vector<16x32xf32>
    %242 = tpu.matmul %239, %241, %cst_107 {dimension_numbers = #tpu.dot_dimension_numbers<[1], [0], [0], [1], [0, 0, 1, 1], [], []>} : vector<16x64xf32>, vector<64x32xf32>, vector<16x32xf32> -> vector<16x32xf32>
    %c1_108 = arith.constant 1 : index
    %c0_109 = arith.constant 0 : index
    %c256_110 = arith.constant 256 : index
    %243 = vector.load %arg4[%c1_108, %c0_109, %c256_110] : memref<2x1x352xf32, #tpu.memory_space<vmem>>, vector<1x1x32xf32>
    %244 = vector.shape_cast %243 : vector<1x1x32xf32> to vector<1x32xf32>
    %245 = vector.broadcast %244 : vector<1x32xf32> to vector<16x32xf32>
    %246 = arith.addf %242, %245 : vector<16x32xf32>
    %247 = arith.addf %246, %219 : vector<16x32xf32>
    %c1_111 = arith.constant 1 : index
    %c0_112 = arith.constant 0 : index
    %c288_113 = arith.constant 288 : index
    %248 = vector.load %arg4[%c1_111, %c0_112, %c288_113] : memref<2x1x352xf32, #tpu.memory_space<vmem>>, vector<1x1x32xf32>
    %249 = vector.shape_cast %248 : vector<1x1x32xf32> to vector<1x32xf32>
    %c1_114 = arith.constant 1 : index
    %c0_115 = arith.constant 0 : index
    %c320_116 = arith.constant 320 : index
    %250 = vector.load %arg4[%c1_114, %c0_115, %c320_116] : memref<2x1x352xf32, #tpu.memory_space<vmem>>, vector<1x1x32xf32>
    %251 = vector.shape_cast %250 : vector<1x1x32xf32> to vector<1x32xf32>
    %cst_117 = arith.constant dense<0.000000e+00> : vector<16xf32>
    %252 = vector.multi_reduction <add>, %247, %cst_117 [1] : vector<16x32xf32> to vector<16xf32>
    %253 = vector.shape_cast %252 : vector<16xf32> to vector<16x1xf32>
    %cst_118 = arith.constant 3.200000e+01 : f32
    %254 = vector.broadcast %cst_118 : f32 to vector<16x1xf32>
    %255 = arith.divf %253, %254 : vector<16x1xf32>
    %256 = vector.broadcast %255 : vector<16x1xf32> to vector<16x32xf32>
    %257 = arith.subf %247, %256 : vector<16x32xf32>
    %258 = arith.mulf %257, %257 : vector<16x32xf32>
    %cst_119 = arith.constant dense<0.000000e+00> : vector<16xf32>
    %259 = vector.multi_reduction <add>, %258, %cst_119 [1] : vector<16x32xf32> to vector<16xf32>
    %260 = vector.shape_cast %259 : vector<16xf32> to vector<16x1xf32>
    %cst_120 = arith.constant 3.200000e+01 : f32
    %261 = vector.broadcast %cst_120 : f32 to vector<16x1xf32>
    %262 = arith.divf %260, %261 : vector<16x1xf32>
    %cst_121 = arith.constant 9.99999996E-13 : f32
    %263 = vector.broadcast %cst_121 : f32 to vector<16x1xf32>
    %264 = arith.addf %262, %263 : vector<16x1xf32>
    %265 = math.rsqrt %264 : vector<16x1xf32>
    %266 = vector.broadcast %265 : vector<16x1xf32> to vector<16x32xf32>
    %267 = arith.mulf %257, %266 : vector<16x32xf32>
    %268 = vector.broadcast %249 : vector<1x32xf32> to vector<16x32xf32>
    %269 = arith.mulf %267, %268 : vector<16x32xf32>
    %270 = vector.broadcast %251 : vector<1x32xf32> to vector<16x32xf32>
    %271 = arith.addf %269, %270 : vector<16x32xf32>
    %272 = tpu.iota {dimensions = array<i32: 0>} : vector<2x16xi32>
    %273 = tpu.iota {dimensions = array<i32: 1>} : vector<2x16xi32>
    %c8_i32 = arith.constant 8 : i32
    %274 = vector.broadcast %c8_i32 : i32 to vector<2x16xi32>
    %275 = arith.muli %272, %274 : vector<2x16xi32>
    %276 = arith.cmpi eq, %273, %275 : vector<2x16xi32>
    %277 = arith.extui %276 : vector<2x16xi1> to vector<2x16xi32>
    %278 = arith.sitofp %277 : vector<2x16xi32> to vector<2x16xf32>
    %cst_122 = arith.constant dense<0.000000e+00> : vector<2x32xf32>
    %279 = tpu.matmul %278, %271, %cst_122 {dimension_numbers = #tpu.dot_dimension_numbers<[1], [0], [0], [1], [0, 0, 1, 1], [], []>} : vector<2x16xf32>, vector<16x32xf32>, vector<2x32xf32> -> vector<2x32xf32>
    %c0_123 = arith.constant 0 : index
    %c0_124 = arith.constant 0 : index
    %280 = vector.load %arg5[%c0_123, %c0_124] : memref<32x35xf32, #tpu.memory_space<vmem>>, vector<32x32xf32>
    %cst_125 = arith.constant dense<0.000000e+00> : vector<2x32xf32>
    %281 = tpu.matmul %279, %280, %cst_125 {dimension_numbers = #tpu.dot_dimension_numbers<[1], [0], [0], [1], [0, 0, 1, 1], [], []>} : vector<2x32xf32>, vector<32x32xf32>, vector<2x32xf32> -> vector<2x32xf32>
    %c0_126 = arith.constant 0 : index
    %c64 = arith.constant 64 : index
    %282 = vector.load %arg6[%c0_126, %c64] : memref<1x99xf32, #tpu.memory_space<vmem>>, vector<1x32xf32>
    %283 = vector.broadcast %282 : vector<1x32xf32> to vector<2x32xf32>
    %284 = arith.addf %281, %283 : vector<2x32xf32>
    %285 = math.tanh %284 : vector<2x32xf32>
    %c0_127 = arith.constant 0 : index
    %c32_128 = arith.constant 32 : index
    %286 = vector.load %arg5[%c0_127, %c32_128] : memref<32x35xf32, #tpu.memory_space<vmem>>, vector<32x3xf32>
    %cst_129 = arith.constant dense<0.000000e+00> : vector<2x3xf32>
    %287 = tpu.matmul %285, %286, %cst_129 {dimension_numbers = #tpu.dot_dimension_numbers<[1], [0], [0], [1], [0, 0, 1, 1], [], []>} : vector<2x32xf32>, vector<32x3xf32>, vector<2x3xf32> -> vector<2x3xf32>
    %c0_130 = arith.constant 0 : index
    %c96_131 = arith.constant 96 : index
    %288 = vector.load %arg6[%c0_130, %c96_131] : memref<1x99xf32, #tpu.memory_space<vmem>>, vector<1x3xf32>
    %289 = vector.broadcast %288 : vector<1x3xf32> to vector<2x3xf32>
    %290 = arith.addf %287, %289 : vector<2x3xf32>
    %c0_132 = arith.constant 0 : index
    %c0_133 = arith.constant 0 : index
    %291 = vector.load %arg7[%c0_132, %c0_133] : memref<2x3xf32, #tpu.memory_space<vmem>>, vector<2x3xf32>
    tpu.vector_store %arg7[%c0_132, %c0_133], %290 {strides = array<i32>} : memref<2x3xf32, #tpu.memory_space<vmem>>, vector<2x3xf32>,
    return
  }
}

</mosaic_0001>

<llo_original>
// kernel: bert_vanilla_classifier.1
$region0: #{bert_vanilla_classifier.1}
  #allocation0 [shape = 'u32[]', space=smem, size = 0x4, offset = 0x4, fixed_abs, tag = 'smem constant byte address 0x4 - core index']
  #allocation1 [shape = 'u32[144,128]{1,0:T(1,128)}', space=vmem, size = 0x12000, scoped, tag = 'internal scratch']
  %s0 = inlined_call_operand.vmem [shape: f32[16,32], index: 0, kind: input, shape index: {}]
  %s1 = inlined_call_operand.vmem [shape: f32[1,16], index: 1, kind: input, shape index: {}]
  %s2 = inlined_call_operand.vmem [shape: f32[2,32,192], index: 2, kind: input, shape index: {}]
  %s3 = inlined_call_operand.vmem [shape: f32[2,64,32], index: 3, kind: input, shape index: {}]
  %s4 = inlined_call_operand.vmem [shape: f32[2,1,352], index: 4, kind: input, shape index: {}]
  %s5 = inlined_call_operand.vmem [shape: f32[32,35], index: 5, kind: input, shape index: {}]
  %s6 = inlined_call_operand.vmem [shape: f32[1,99], index: 6, kind: input, shape index: {}]
  %s7 = inlined_call_operand.hbm [shape: f32[2,3], index: 7, kind: output, shape index: {}]
  %s8 = sld [smem:[#allocation0]]
  $region38: #{bert_vanilla_classifier.1} parent=0
    _
  %s10 = ssub.s32 1, %s8
  %s11 = scalar_select 0, %s10, %s8
  $region1: #{bert_vanilla_classifier.1} parent=0
    #allocation2 [shape = 'u8[1024]{0}', space=vmem, size = 0x400, scoped, tag = 'output window, operand 0, single buffered']
    #allocation3 [shape = 's32[1]{0}', space=sflag, size = 0x4, scoped, tag = 'scoped memory for bert_vanilla_classifier.1']
    %12 = vsyncpa [#allocation3], 0
    // Predicated region
    $region2: #{bert_vanilla_classifier.1} parent=1 // pred_check
      _
    $region3: #{bert_vanilla_classifier.1} parent=1 // pred_check_branch
      %14 = sbr.rel (0) target = $region5
    $region4: #{bert_vanilla_classifier.1} parent=1 // pred_region
      _
    $region5: #{bert_vanilla_classifier.1} parent=1 // pred_fallthru
      _
    // Predicated region
    $region6: #{bert_vanilla_classifier.1} parent=1 // pred_check
      _
    $region7: #{bert_vanilla_classifier.1} parent=1 // pred_check_branch
      %16 = sbr.rel (0) target = $region9
    $region8: #{bert_vanilla_classifier.1} parent=1 // pred_region
      _
    $region9: #{bert_vanilla_classifier.1} parent=1 // pred_fallthru
      _
    // Predicated region
    $region10: #{bert_vanilla_classifier.1} parent=1 // pred_check
      _
    $region11: #{bert_vanilla_classifier.1} parent=1 // pred_check_branch
      %18 = sbr.rel (0) target = $region13
    $region12: #{bert_vanilla_classifier.1} parent=1 // pred_region
      _
    $region13: #{bert_vanilla_classifier.1} parent=1 // pred_fallthru
      _
    // Predicated region
    $region14: #{bert_vanilla_classifier.1} parent=1 // pred_check
      _
    $region15: #{bert_vanilla_classifier.1} parent=1 // pred_check_branch
      %20 = sbr.rel (0) target = $region17
    $region16: #{bert_vanilla_classifier.1} parent=1 // pred_region
      _
    $region17: #{bert_vanilla_classifier.1} parent=1 // pred_fallthru
      _
    // Predicated region
    $region18: #{bert_vanilla_classifier.1} parent=1 // pred_check
      _
    $region19: #{bert_vanilla_classifier.1} parent=1 // pred_check_branch
      %22 = sbr.rel (0) target = $region21
    $region20: #{bert_vanilla_classifier.1} parent=1 // pred_region
      _
    $region21: #{bert_vanilla_classifier.1} parent=1 // pred_fallthru
      _
    // Predicated region
    $region22: #{bert_vanilla_classifier.1} parent=1 // pred_check
      _
    $region23: #{bert_vanilla_classifier.1} parent=1 // pred_check_branch
      %24 = sbr.rel (0) target = $region25
    $region24: #{bert_vanilla_classifier.1} parent=1 // pred_region
      _
    $region25: #{bert_vanilla_classifier.1} parent=1 // pred_fallthru
      _
    // Predicated region
    $region26: #{bert_vanilla_classifier.1} parent=1 // pred_check
      _
    $region27: #{bert_vanilla_classifier.1} parent=1 // pred_check_branch
      %26 = sbr.rel (0) target = $region29
    $region28: #{bert_vanilla_classifier.1} parent=1 // pred_region
      _
    $region29: #{bert_vanilla_classifier.1} parent=1 // pred_fallthru
      _
    %v27 = vlaneseq
    %v28 = vshrl.u32 %v27, 7
    %v29 = vadd.s32 %v28, 8
    %v30 = vlaneseq
    %v31 = vand.u32 %v30, 127
    %v32 = vshra.s32 %v28, 3
    %v33 = vshra.s32 %v29, 3
    %v34 = vshra.s32 %v31, 3
    %vm35 = vcmp.eq.s32.totalorder %v32, %v34
    %vm36 = vcmp.eq.s32.totalorder %v33, %v34
    %v37 = vld [vmem:[%s1] sm:$0x1]
    %vm38 = vcmp.gt.f32.partialorder %v37, 0.5
    %v39 = vsel %vm38, 1, 0
    %v40 = vlaneseq
    %v41 = vshrl.u32 %v40, 7
    %v42 = vsub.s32 0, %v41
    %v43 = vrot.slane %v39, %v42
    %vm44 = vcmp.eq.s32.totalorder %v43, 1
    %vm45 = vmand %vm35, %vm44
    %vm46 = vmand %vm36, %vm44
    %v47 = vsel %vm45, 0.0, -1e+09
    %v48 = vsel %vm46, 0.0, -1e+09
    %v49 = vld [vmem:[%s0] sm:$0xff]
    %v50 = vld [vmem:[%s0 + $0x8] sm:$0xff]
    %v51 = vld [vmem:[%s6] sm:$0x1]
    %vm52 = vcmask 261120
    %v53 = vsel %vm52, %v49, 0.0
    %54 = vadd.xlane.f32.xlu0 %v53
    %v55 = vpop.xlane.xlu0 %54
    %v56 = vsel %vm52, %v50, 0.0
    %57 = vadd.xlane.f32.xlu0 %v56
    %v58 = vpop.xlane.xlu0 %57
    %v59 = vrcp.pop 32.0
    %v60 = vmul.f32 %v55, %v59
    %v61 = vmul.f32 %v58, %v59
    %v62 = vsub.f32 %v49, %v60
    %v63 = vsub.f32 %v50, %v61
    %v64 = vmul.f32 %v62, %v62
    %v65 = vmul.f32 %v63, %v63
    %v66 = vsel %vm52, %v64, 0.0
    %67 = vadd.xlane.f32.xlu0 %v66
    %v68 = vpop.xlane.xlu0 %67
    %v69 = vsel %vm52, %v65, 0.0
    %70 = vadd.xlane.f32.xlu0 %v69
    %v71 = vpop.xlane.xlu0 %70
    %v72 = vmul.f32 %v68, %v59
    %v73 = vmul.f32 %v71, %v59
    %v74 = vadd.f32 %v72, 1e-12
    %v75 = vadd.f32 %v73, 1e-12
    %v76 = vrsqrt.pop %v74
    %v77 = vrsqrt.pop %v75
    %v78 = vmul.f32 %v62, %v76
    %v79 = vmul.f32 %v63, %v77
    %v81 = vlaneseq
    %v82 = vshrl.u32 %v81, 7
    %v83 = vsub.s32 0, %v82
    %v84 = vrot.slane %v51, %v83
    %v86 = vmul.f32 %v78, %v84
    %v87 = vmul.f32 %v79, %v84
    %88 = vrot.lane.b32.xlu0 %v84, 96
    %v89 = vpop.permute.xlu0 %88
    %v91 = vadd.f32 %v86, %v89
    %v92 = vadd.f32 %v87, %v89
    %v93 = vld [vmem:[%s2] sm:$0xff]
    %v94 = vld [vmem:[%s2 + $0x10] sm:$0xff]
    %v95 = vld [vmem:[%s2 + $0x20] sm:$0xff]
    %v96 = vld [vmem:[%s2 + $0x30] sm:$0xff]
    %v97 = vld [vmem:[%s4] sm:$0x1]
    %v99 = vlaneseq
    %v100 = vshrl.u32 %v99, 7
    %v101 = vsub.s32 0, %v100
    %v102 = vrot.slane %v97, %v101
    %v105 = vsel %vm52, %v91, 0
    %v108 = vsel %vm52, %v92, 0
    %110 = vmatprep.subr.mxu0 0.0
    %111 = vmatpush1.msra.mxu0 0.0
    %112 = vmatprep.subr.mxu0 0.0
    %113 = vmatpush1.msra.mxu0 0.0
    %114 = vmatprep.subr.mxu0 0.0
    %115 = vmatpush1.msra.mxu0 0.0
    %116 = vmatprep.subr.mxu0 0.0
    %117 = vmatpush1.msra.mxu0 0.0
    %118 = vmatprep.subr.mxu0 0.0
    %119 = vmatpush1.msra.mxu0 0.0
    %120 = vmatprep.subr.mxu0 0.0
    %121 = vmatpush1.msra.mxu0 0.0
    %122 = vmatprep.subr.mxu0 0.0
    %123 = vmatpush1.msra.mxu0 0.0
    %124 = vmatprep.subr.mxu0 0.0
    %125 = vmatpush1.msra.mxu0 0.0
    %126 = vmatprep.subr.mxu0 0.0
    %127 = vmatpush1.msra.mxu0 0.0
    %128 = vmatprep.subr.mxu0 0.0
    %129 = vmatpush1.msra.mxu0 0.0
    %130 = vmatprep.subr.mxu0 0.0
    %131 = vmatpush1.msra.mxu0 0.0
    %132 = vmatprep.subr.mxu0 0.0
    %133 = vmatpush1.msra.mxu0 0.0
    %134 = vmatprep.subr.mxu0 0.0
    %135 = vmatpush1.msra.mxu0 %v96
    %136 = vmatprep.subr.mxu0 0.0
    %137 = vmatpush1.msra.mxu0 %v95
    %138 = vmatprep.subr.mxu0 0.0
    %139 = vmatpush1.msra.mxu0 %v94
    %140 = vmatprep.subr.mxu0 0.0
    %141 = vmatpush1.msra.mxu0 %v93
    %142 = vmatprep.subr.mxu0 0.0
    %143 = vmatpush2.msra.mxu0 0.0
    %144 = vmatprep.subr.mxu0 0.0
    %145 = vmatpush2.msra.mxu0 0.0
    %146 = vmatprep.subr.mxu0 0.0
    %147 = vmatpush2.msra.mxu0 0.0
    %148 = vmatprep.subr.mxu0 0.0
    %149 = vmatpush2.msra.mxu0 0.0
    %150 = vmatprep.subr.mxu0 0.0
    %151 = vmatpush2.msra.mxu0 0.0
    %152 = vmatprep.subr.mxu0 0.0
    %153 = vmatpush2.msra.mxu0 0.0
    %154 = vmatprep.subr.mxu0 0.0
    %155 = vmatpush2.msra.mxu0 0.0
    %156 = vmatprep.subr.mxu0 0.0
    %157 = vmatpush2.msra.mxu0 0.0
    %158 = vmatprep.subr.mxu0 0.0
    %159 = vmatpush2.msra.mxu0 0.0
    %160 = vmatprep.subr.mxu0 0.0
    %161 = vmatpush2.msra.mxu0 0.0
    %162 = vmatprep.subr.mxu0 0.0
    %163 = vmatpush2.msra.mxu0 0.0
    %164 = vmatprep.subr.mxu0 0.0
    %165 = vmatpush2.msra.mxu0 0.0
    %166 = vmatprep.subr.mxu0 0.0
    %167 = vmatpush2.msra.mxu0 0.0
    %168 = vmatprep.subr.mxu0 0.0
    %169 = vmatpush2.msra.mxu0 0.0
    %170 = vmatprep.subr.mxu0 0.0
    %171 = vmatpush2.msra.mxu0 0.0
    %172 = vmatprep.subr.mxu0 0.0
    %173 = vmatpush2.msra.mxu0 0.0
    %174 = vmatprep.mubr.f32.mxu0 0.0
    %175 = vmatmul.mubr.f32.gmra.mxu0 %v105
    %v176 = vpop.f32.mrf.mxu0
    %v177 = vadd.f32 %v102, %v176
    %v178 = vpop.f32.mrf.mxu0
    %179 = vmatprep.mubr.f32.mxu0 0.0
    %180 = vmatmul.mubr.f32.gmra.mxu0 %v108
    %v181 = vpop.f32.mrf.mxu0
    %v182 = vadd.f32 %v102, %v181
    %v183 = vpop.f32.mrf.mxu0
    %184 = vdwg.mxu0
    %187 = vrot.lane.b32.xlu0 %v177, 120
    %v188 = vpop.permute.xlu0 %187
    %189 = vrot.lane.b32.xlu0 %v182, 120
    %v190 = vpop.permute.xlu0 %189
    %193 = vrot.lane.b32.xlu0 %v177, 112
    %v194 = vpop.permute.xlu0 %193
    %195 = vrot.lane.b32.xlu0 %v182, 112
    %v196 = vpop.permute.xlu0 %195
    %199 = vrot.lane.b32.xlu0 %v177, 104
    %v200 = vpop.permute.xlu0 %199
    %201 = vrot.lane.b32.xlu0 %v182, 104
    %v202 = vpop.permute.xlu0 %201
    %v205 = vcombine.low %v177, %v194
    %v206 = vcombine.high %v177, %v194
    %v208 = vunpack.c.l.s4 1983009808
    %v209 = vunpack.c.0.s8 %v208
    %v210 = vlaneseq
    %v211 = vshrl.u32 %v210, 7
    %v212 = vsub.s32 %v209, %v211
    %v213 = vrot.slane %v205, %v212
    %v215 = vunpack.c.l.s4 1983009808
    %v216 = vunpack.c.0.s8 %v215
    %v217 = vlaneseq
    %v218 = vshrl.u32 %v217, 7
    %v219 = vsub.s32 %v216, %v218
    %v220 = vrot.slane %v206, %v219
    %v221 = vcombine.low %v188, %v200
    %v222 = vcombine.high %v188, %v200
    %v224 = vunpack.c.l.s4 1983009808
    %v225 = vunpack.c.0.s8 %v224
    %v226 = vlaneseq
    %v227 = vshrl.u32 %v226, 7
    %v228 = vsub.s32 %v225, %v227
    %v229 = vrot.slane %v221, %v228
    %v231 = vunpack.c.l.s4 1983009808
    %v232 = vunpack.c.0.s8 %v231
    %v233 = vlaneseq
    %v234 = vshrl.u32 %v233, 7
    %v235 = vsub.s32 %v232, %v234
    %v236 = vrot.slane %v222, %v235
    %v237 = vcombine.low %v213, %v229
    %v238 = vcombine.high %v213, %v229
    %v240 = vunpack.c.l.s4 1934713408
    %v241 = vunpack.c.0.s8 %v240
    %v242 = vlaneseq
    %v243 = vshrl.u32 %v242, 7
    %v244 = vsub.s32 %v241, %v243
    %v245 = vrot.slane %v237, %v244
    %v247 = vunpack.c.l.s4 1934713408
    %v248 = vunpack.c.0.s8 %v247
    %v249 = vlaneseq
    %v250 = vshrl.u32 %v249, 7
    %v251 = vsub.s32 %v248, %v250
    %v252 = vrot.slane %v238, %v251
    %v253 = vcombine.low %v220, %v236
    %v254 = vcombine.high %v220, %v236
    %v256 = vunpack.c.l.s4 1934713408
    %v257 = vunpack.c.0.s8 %v256
    %v258 = vlaneseq
    %v259 = vshrl.u32 %v258, 7
    %v260 = vsub.s32 %v257, %v259
    %v261 = vrot.slane %v253, %v260
    %v263 = vunpack.c.l.s4 1934713408
    %v264 = vunpack.c.0.s8 %v263
    %v265 = vlaneseq
    %v266 = vshrl.u32 %v265, 7
    %v267 = vsub.s32 %v264, %v266
    %v268 = vrot.slane %v254, %v267
    %v269 = vcombine.high %v245, 0.0
    %v270 = vcombine.high %v252, 0.0
    %v271 = vcombine.high %v261, 0.0
    %v272 = vcombine.high %v268, 0.0
    %v273 = vcombine.low %v182, %v196
    %v274 = vcombine.high %v182, %v196
    %v276 = vunpack.c.l.s4 1983009808
    %v277 = vunpack.c.0.s8 %v276
    %v278 = vlaneseq
    %v279 = vshrl.u32 %v278, 7
    %v280 = vsub.s32 %v277, %v279
    %v281 = vrot.slane %v273, %v280
    %v283 = vunpack.c.l.s4 1983009808
    %v284 = vunpack.c.0.s8 %v283
    %v285 = vlaneseq
    %v286 = vshrl.u32 %v285, 7
    %v287 = vsub.s32 %v284, %v286
    %v288 = vrot.slane %v274, %v287
    %v289 = vcombine.low %v190, %v202
    %v290 = vcombine.high %v190, %v202
    %v292 = vunpack.c.l.s4 1983009808
    %v293 = vunpack.c.0.s8 %v292
    %v294 = vlaneseq
    %v295 = vshrl.u32 %v294, 7
    %v296 = vsub.s32 %v293, %v295
    %v297 = vrot.slane %v289, %v296
    %v299 = vunpack.c.l.s4 1983009808
    %v300 = vunpack.c.0.s8 %v299
    %v301 = vlaneseq
    %v302 = vshrl.u32 %v301, 7
    %v303 = vsub.s32 %v300, %v302
    %v304 = vrot.slane %v290, %v303
    %v305 = vcombine.low %v281, %v297
    %v306 = vcombine.high %v281, %v297
    %v308 = vunpack.c.l.s4 1934713408
    %v309 = vunpack.c.0.s8 %v308
    %v310 = vlaneseq
    %v311 = vshrl.u32 %v310, 7
    %v312 = vsub.s32 %v309, %v311
    %v313 = vrot.slane %v305, %v312
    %v315 = vunpack.c.l.s4 1934713408
    %v316 = vunpack.c.0.s8 %v315
    %v317 = vlaneseq
    %v318 = vshrl.u32 %v317, 7
    %v319 = vsub.s32 %v316, %v318
    %v320 = vrot.slane %v306, %v319
    %v321 = vcombine.low %v288, %v304
    %v322 = vcombine.high %v288, %v304
    %v324 = vunpack.c.l.s4 1934713408
    %v325 = vunpack.c.0.s8 %v324
    %v326 = vlaneseq
    %v327 = vshrl.u32 %v326, 7
    %v328 = vsub.s32 %v325, %v327
    %v329 = vrot.slane %v321, %v328
    %v331 = vunpack.c.l.s4 1934713408
    %v332 = vunpack.c.0.s8 %v331
    %v333 = vlaneseq
    %v334 = vshrl.u32 %v333, 7
    %v335 = vsub.s32 %v332, %v334
    %v336 = vrot.slane %v322, %v335
    %v337 = vcombine.high %v313, 0.0
    %v338 = vcombine.high %v320, 0.0
    %v339 = vcombine.high %v329, 0.0
    %v340 = vcombine.high %v336, 0.0
    %v341 = vcombine.low %v245, %v252
    %v343 = vunpack.c.l.s4 1983009808
    %v344 = vunpack.c.0.s8 %v343
    %v345 = vlaneseq
    %v346 = vshrl.u32 %v345, 7
    %v347 = vsub.s32 %v344, %v346
    %v348 = vrot.slane %v341, %v347
    %v349 = vcombine.low %v269, %v270
    %v351 = vunpack.c.l.s4 1983009808
    %v352 = vunpack.c.0.s8 %v351
    %v353 = vlaneseq
    %v354 = vshrl.u32 %v353, 7
    %v355 = vsub.s32 %v352, %v354
    %v356 = vrot.slane %v349, %v355
    %v357 = vcombine.low %v261, %v268
    %v359 = vunpack.c.l.s4 1983009808
    %v360 = vunpack.c.0.s8 %v359
    %v361 = vlaneseq
    %v362 = vshrl.u32 %v361, 7
    %v363 = vsub.s32 %v360, %v362
    %v364 = vrot.slane %v357, %v363
    %v365 = vcombine.low %v271, %v272
    %v367 = vunpack.c.l.s4 1983009808
    %v368 = vunpack.c.0.s8 %v367
    %v369 = vlaneseq
    %v370 = vshrl.u32 %v369, 7
    %v371 = vsub.s32 %v368, %v370
    %v372 = vrot.slane %v365, %v371
    %v373 = vcombine.low %v348, %v356
    %v374 = vcombine.high %v348, %v356
    %v376 = vunpack.c.l.s4 1934713408
    %v377 = vunpack.c.0.s8 %v376
    %v378 = vlaneseq
    %v379 = vshrl.u32 %v378, 7
    %v380 = vsub.s32 %v377, %v379
    %v381 = vrot.slane %v373, %v380
    %v383 = vunpack.c.l.s4 1934713408
    %v384 = vunpack.c.0.s8 %v383
    %v385 = vlaneseq
    %v386 = vshrl.u32 %v385, 7
    %v387 = vsub.s32 %v384, %v386
    %v388 = vrot.slane %v374, %v387
    %v389 = vcombine.low %v364, %v372
    %v390 = vcombine.high %v364, %v372
    %v392 = vunpack.c.l.s4 1934713408
    %v393 = vunpack.c.0.s8 %v392
    %v394 = vlaneseq
    %v395 = vshrl.u32 %v394, 7
    %v396 = vsub.s32 %v393, %v395
    %v397 = vrot.slane %v389, %v396
    %v399 = vunpack.c.l.s4 1934713408
    %v400 = vunpack.c.0.s8 %v399
    %v401 = vlaneseq
    %v402 = vshrl.u32 %v401, 7
    %v403 = vsub.s32 %v400, %v402
    %v404 = vrot.slane %v390, %v403
    %v405 = vcombine.low %v381, %v397
    %v406 = vcombine.high %v381, %v397
    %v407 = vcombine.low %v388, %v404
    %v408 = vcombine.high %v388, %v404
    %v409 = vcombine.low %v313, %v320
    %v411 = vunpack.c.l.s4 1983009808
    %v412 = vunpack.c.0.s8 %v411
    %v413 = vlaneseq
    %v414 = vshrl.u32 %v413, 7
    %v415 = vsub.s32 %v412, %v414
    %v416 = vrot.slane %v409, %v415
    %v417 = vcombine.low %v337, %v338
    %v419 = vunpack.c.l.s4 1983009808
    %v420 = vunpack.c.0.s8 %v419
    %v421 = vlaneseq
    %v422 = vshrl.u32 %v421, 7
    %v423 = vsub.s32 %v420, %v422
    %v424 = vrot.slane %v417, %v423
    %v425 = vcombine.low %v329, %v336
    %v427 = vunpack.c.l.s4 1983009808
    %v428 = vunpack.c.0.s8 %v427
    %v429 = vlaneseq
    %v430 = vshrl.u32 %v429, 7
    %v431 = vsub.s32 %v428, %v430
    %v432 = vrot.slane %v425, %v431
    %v433 = vcombine.low %v339, %v340
    %v435 = vunpack.c.l.s4 1983009808
    %v436 = vunpack.c.0.s8 %v435
    %v437 = vlaneseq
    %v438 = vshrl.u32 %v437, 7
    %v439 = vsub.s32 %v436, %v438
    %v440 = vrot.slane %v433, %v439
    %v441 = vcombine.low %v416, %v424
    %v442 = vcombine.high %v416, %v424
    %v444 = vunpack.c.l.s4 1934713408
    %v445 = vunpack.c.0.s8 %v444
    %v446 = vlaneseq
    %v447 = vshrl.u32 %v446, 7
    %v448 = vsub.s32 %v445, %v447
    %v449 = vrot.slane %v441, %v448
    %v451 = vunpack.c.l.s4 1934713408
    %v452 = vunpack.c.0.s8 %v451
    %v453 = vlaneseq
    %v454 = vshrl.u32 %v453, 7
    %v455 = vsub.s32 %v452, %v454
    %v456 = vrot.slane %v442, %v455
    %v457 = vcombine.low %v432, %v440
    %v458 = vcombine.high %v432, %v440
    %v460 = vunpack.c.l.s4 1934713408
    %v461 = vunpack.c.0.s8 %v460
    %v462 = vlaneseq
    %v463 = vshrl.u32 %v462, 7
    %v464 = vsub.s32 %v461, %v463
    %v465 = vrot.slane %v457, %v464
    %v467 = vunpack.c.l.s4 1934713408
    %v468 = vunpack.c.0.s8 %v467
    %v469 = vlaneseq
    %v470 = vshrl.u32 %v469, 7
    %v471 = vsub.s32 %v468, %v470
    %v472 = vrot.slane %v458, %v471
    %v473 = vcombine.low %v449, %v465
    %v474 = vcombine.high %v449, %v465
    %v475 = vcombine.low %v456, %v472
    %v476 = vcombine.high %v456, %v472
    %477 = vrot.lane.b32.xlu0 %v177, 96
    %v478 = vpop.permute.xlu0 %477
    %479 = vrot.lane.b32.xlu0 %v182, 96
    %v480 = vpop.permute.xlu0 %479
    %481 = vrot.lane.b32.xlu0 %v188, 96
    %v482 = vpop.permute.xlu0 %481
    %483 = vrot.lane.b32.xlu0 %v190, 96
    %v484 = vpop.permute.xlu0 %483
    %485 = vrot.lane.b32.xlu0 %v194, 96
    %v486 = vpop.permute.xlu0 %485
    %487 = vrot.lane.b32.xlu0 %v196, 96
    %v488 = vpop.permute.xlu0 %487
    %489 = vrot.lane.b32.xlu0 %v200, 96
    %v490 = vpop.permute.xlu0 %489
    %491 = vrot.lane.b32.xlu0 %v202, 96
    %v492 = vpop.permute.xlu0 %491
    %v501 = vcombine.low %v478, %v486
    %v502 = vcombine.high %v478, %v486
    %v504 = vunpack.c.l.s4 1983009808
    %v505 = vunpack.c.0.s8 %v504
    %v506 = vlaneseq
    %v507 = vshrl.u32 %v506, 7
    %v508 = vsub.s32 %v505, %v507
    %v509 = vrot.slane %v501, %v508
    %v511 = vunpack.c.l.s4 1983009808
    %v512 = vunpack.c.0.s8 %v511
    %v513 = vlaneseq
    %v514 = vshrl.u32 %v513, 7
    %v515 = vsub.s32 %v512, %v514
    %v516 = vrot.slane %v502, %v515
    %v517 = vcombine.low %v482, %v490
    %v518 = vcombine.high %v482, %v490
    %v520 = vunpack.c.l.s4 1983009808
    %v521 = vunpack.c.0.s8 %v520
    %v522 = vlaneseq
    %v523 = vshrl.u32 %v522, 7
    %v524 = vsub.s32 %v521, %v523
    %v525 = vrot.slane %v517, %v524
    %v527 = vunpack.c.l.s4 1983009808
    %v528 = vunpack.c.0.s8 %v527
    %v529 = vlaneseq
    %v530 = vshrl.u32 %v529, 7
    %v531 = vsub.s32 %v528, %v530
    %v532 = vrot.slane %v518, %v531
    %v533 = vcombine.low %v509, %v525
    %v534 = vcombine.high %v509, %v525
    %v536 = vunpack.c.l.s4 1934713408
    %v537 = vunpack.c.0.s8 %v536
    %v538 = vlaneseq
    %v539 = vshrl.u32 %v538, 7
    %v540 = vsub.s32 %v537, %v539
    %v541 = vrot.slane %v533, %v540
    %v543 = vunpack.c.l.s4 1934713408
    %v544 = vunpack.c.0.s8 %v543
    %v545 = vlaneseq
    %v546 = vshrl.u32 %v545, 7
    %v547 = vsub.s32 %v544, %v546
    %v548 = vrot.slane %v534, %v547
    %v549 = vcombine.low %v516, %v532
    %v550 = vcombine.high %v516, %v532
    %v552 = vunpack.c.l.s4 1934713408
    %v553 = vunpack.c.0.s8 %v552
    %v554 = vlaneseq
    %v555 = vshrl.u32 %v554, 7
    %v556 = vsub.s32 %v553, %v555
    %v557 = vrot.slane %v549, %v556
    %v559 = vunpack.c.l.s4 1934713408
    %v560 = vunpack.c.0.s8 %v559
    %v561 = vlaneseq
    %v562 = vshrl.u32 %v561, 7
    %v563 = vsub.s32 %v560, %v562
    %v564 = vrot.slane %v550, %v563
    %v565 = vcombine.high %v541, 0.0
    %v566 = vcombine.high %v548, 0.0
    %v567 = vcombine.high %v557, 0.0
    %v568 = vcombine.high %v564, 0.0
    %v569 = vcombine.low %v480, %v488
    %v570 = vcombine.high %v480, %v488
    %v572 = vunpack.c.l.s4 1983009808
    %v573 = vunpack.c.0.s8 %v572
    %v574 = vlaneseq
    %v575 = vshrl.u32 %v574, 7
    %v576 = vsub.s32 %v573, %v575
    %v577 = vrot.slane %v569, %v576
    %v579 = vunpack.c.l.s4 1983009808
    %v580 = vunpack.c.0.s8 %v579
    %v581 = vlaneseq
    %v582 = vshrl.u32 %v581, 7
    %v583 = vsub.s32 %v580, %v582
    %v584 = vrot.slane %v570, %v583
    %v585 = vcombine.low %v484, %v492
    %v586 = vcombine.high %v484, %v492
    %v588 = vunpack.c.l.s4 1983009808
    %v589 = vunpack.c.0.s8 %v588
    %v590 = vlaneseq
    %v591 = vshrl.u32 %v590, 7
    %v592 = vsub.s32 %v589, %v591
    %v593 = vrot.slane %v585, %v592
    %v595 = vunpack.c.l.s4 1983009808
    %v596 = vunpack.c.0.s8 %v595
    %v597 = vlaneseq
    %v598 = vshrl.u32 %v597, 7
    %v599 = vsub.s32 %v596, %v598
    %v600 = vrot.slane %v586, %v599
    %v601 = vcombine.low %v577, %v593
    %v602 = vcombine.high %v577, %v593
    %v604 = vunpack.c.l.s4 1934713408
    %v605 = vunpack.c.0.s8 %v604
    %v606 = vlaneseq
    %v607 = vshrl.u32 %v606, 7
    %v608 = vsub.s32 %v605, %v607
    %v609 = vrot.slane %v601, %v608
    %v611 = vunpack.c.l.s4 1934713408
    %v612 = vunpack.c.0.s8 %v611
    %v613 = vlaneseq
    %v614 = vshrl.u32 %v613, 7
    %v615 = vsub.s32 %v612, %v614
    %v616 = vrot.slane %v602, %v615
    %v617 = vcombine.low %v584, %v600
    %v618 = vcombine.high %v584, %v600
    %v620 = vunpack.c.l.s4 1934713408
    %v621 = vunpack.c.0.s8 %v620
    %v622 = vlaneseq
    %v623 = vshrl.u32 %v622, 7
    %v624 = vsub.s32 %v621, %v623
    %v625 = vrot.slane %v617, %v624
    %v627 = vunpack.c.l.s4 1934713408
    %v628 = vunpack.c.0.s8 %v627
    %v629 = vlaneseq
    %v630 = vshrl.u32 %v629, 7
    %v631 = vsub.s32 %v628, %v630
    %v632 = vrot.slane %v618, %v631
    %v633 = vcombine.high %v609, 0.0
    %v634 = vcombine.high %v616, 0.0
    %v635 = vcombine.high %v625, 0.0
    %v636 = vcombine.high %v632, 0.0
    %v637 = vcombine.low %v541, %v548
    %v639 = vunpack.c.l.s4 1983009808
    %v640 = vunpack.c.0.s8 %v639
    %v641 = vlaneseq
    %v642 = vshrl.u32 %v641, 7
    %v643 = vsub.s32 %v640, %v642
    %v644 = vrot.slane %v637, %v643
    %v645 = vcombine.low %v565, %v566
    %v647 = vunpack.c.l.s4 1983009808
    %v648 = vunpack.c.0.s8 %v647
    %v649 = vlaneseq
    %v650 = vshrl.u32 %v649, 7
    %v651 = vsub.s32 %v648, %v650
    %v652 = vrot.slane %v645, %v651
    %v653 = vcombine.low %v557, %v564
    %v655 = vunpack.c.l.s4 1983009808
    %v656 = vunpack.c.0.s8 %v655
    %v657 = vlaneseq
    %v658 = vshrl.u32 %v657, 7
    %v659 = vsub.s32 %v656, %v658
    %v660 = vrot.slane %v653, %v659
    %v661 = vcombine.low %v567, %v568
    %v663 = vunpack.c.l.s4 1983009808
    %v664 = vunpack.c.0.s8 %v663
    %v665 = vlaneseq
    %v666 = vshrl.u32 %v665, 7
    %v667 = vsub.s32 %v664, %v666
    %v668 = vrot.slane %v661, %v667
    %v669 = vcombine.low %v644, %v652
    %v670 = vcombine.high %v644, %v652
    %v672 = vunpack.c.l.s4 1934713408
    %v673 = vunpack.c.0.s8 %v672
    %v674 = vlaneseq
    %v675 = vshrl.u32 %v674, 7
    %v676 = vsub.s32 %v673, %v675
    %v677 = vrot.slane %v669, %v676
    %v679 = vunpack.c.l.s4 1934713408
    %v680 = vunpack.c.0.s8 %v679
    %v681 = vlaneseq
    %v682 = vshrl.u32 %v681, 7
    %v683 = vsub.s32 %v680, %v682
    %v684 = vrot.slane %v670, %v683
    %v685 = vcombine.low %v660, %v668
    %v686 = vcombine.high %v660, %v668
    %v688 = vunpack.c.l.s4 1934713408
    %v689 = vunpack.c.0.s8 %v688
    %v690 = vlaneseq
    %v691 = vshrl.u32 %v690, 7
    %v692 = vsub.s32 %v689, %v691
    %v693 = vrot.slane %v685, %v692
    %v695 = vunpack.c.l.s4 1934713408
    %v696 = vunpack.c.0.s8 %v695
    %v697 = vlaneseq
    %v698 = vshrl.u32 %v697, 7
    %v699 = vsub.s32 %v696, %v698
    %v700 = vrot.slane %v686, %v699
    %v701 = vcombine.low %v677, %v693
    %v702 = vcombine.high %v677, %v693
    %v703 = vcombine.low %v684, %v700
    %v704 = vcombine.high %v684, %v700
    %v705 = vcombine.low %v609, %v616
    %v707 = vunpack.c.l.s4 1983009808
    %v708 = vunpack.c.0.s8 %v707
    %v709 = vlaneseq
    %v710 = vshrl.u32 %v709, 7
    %v711 = vsub.s32 %v708, %v710
    %v712 = vrot.slane %v705, %v711
    %v713 = vcombine.low %v633, %v634
    %v715 = vunpack.c.l.s4 1983009808
    %v716 = vunpack.c.0.s8 %v715
    %v717 = vlaneseq
    %v718 = vshrl.u32 %v717, 7
    %v719 = vsub.s32 %v716, %v718
    %v720 = vrot.slane %v713, %v719
    %v721 = vcombine.low %v625, %v632
    %v723 = vunpack.c.l.s4 1983009808
    %v724 = vunpack.c.0.s8 %v723
    %v725 = vlaneseq
    %v726 = vshrl.u32 %v725, 7
    %v727 = vsub.s32 %v724, %v726
    %v728 = vrot.slane %v721, %v727
    %v729 = vcombine.low %v635, %v636
    %v731 = vunpack.c.l.s4 1983009808
    %v732 = vunpack.c.0.s8 %v731
    %v733 = vlaneseq
    %v734 = vshrl.u32 %v733, 7
    %v735 = vsub.s32 %v732, %v734
    %v736 = vrot.slane %v729, %v735
    %v737 = vcombine.low %v712, %v720
    %v738 = vcombine.high %v712, %v720
    %v740 = vunpack.c.l.s4 1934713408
    %v741 = vunpack.c.0.s8 %v740
    %v742 = vlaneseq
    %v743 = vshrl.u32 %v742, 7
    %v744 = vsub.s32 %v741, %v743
    %v745 = vrot.slane %v737, %v744
    %v747 = vunpack.c.l.s4 1934713408
    %v748 = vunpack.c.0.s8 %v747
    %v749 = vlaneseq
    %v750 = vshrl.u32 %v749, 7
    %v751 = vsub.s32 %v748, %v750
    %v752 = vrot.slane %v738, %v751
    %v753 = vcombine.low %v728, %v736
    %v754 = vcombine.high %v728, %v736
    %v756 = vunpack.c.l.s4 1934713408
    %v757 = vunpack.c.0.s8 %v756
    %v758 = vlaneseq
    %v759 = vshrl.u32 %v758, 7
    %v760 = vsub.s32 %v757, %v759
    %v761 = vrot.slane %v753, %v760
    %v763 = vunpack.c.l.s4 1934713408
    %v764 = vunpack.c.0.s8 %v763
    %v765 = vlaneseq
    %v766 = vshrl.u32 %v765, 7
    %v767 = vsub.s32 %v764, %v766
    %v768 = vrot.slane %v754, %v767
    %v769 = vcombine.low %v745, %v761
    %v770 = vcombine.high %v745, %v761
    %v771 = vcombine.low %v752, %v768
    %v772 = vcombine.high %v752, %v768
    %773 = vrot.lane.b32.xlu0 %v177, 64
    %v774 = vpop.permute.xlu0 %773
    %775 = vrot.lane.b32.xlu0 %v182, 64
    %v776 = vpop.permute.xlu0 %775
    %777 = vrot.lane.b32.xlu0 %v188, 64
    %v778 = vpop.permute.xlu0 %777
    %779 = vrot.lane.b32.xlu0 %v190, 64
    %v780 = vpop.permute.xlu0 %779
    %781 = vrot.lane.b32.xlu0 %v194, 64
    %v782 = vpop.permute.xlu0 %781
    %783 = vrot.lane.b32.xlu0 %v196, 64
    %v784 = vpop.permute.xlu0 %783
    %785 = vrot.lane.b32.xlu0 %v200, 64
    %v786 = vpop.permute.xlu0 %785
    %787 = vrot.lane.b32.xlu0 %v202, 64
    %v788 = vpop.permute.xlu0 %787
    %v797 = vcombine.low %v774, %v782
    %v798 = vcombine.high %v774, %v782
    %v800 = vunpack.c.l.s4 1983009808
    %v801 = vunpack.c.0.s8 %v800
    %v802 = vlaneseq
    %v803 = vshrl.u32 %v802, 7
    %v804 = vsub.s32 %v801, %v803
    %v805 = vrot.slane %v797, %v804
    %v807 = vunpack.c.l.s4 1983009808
    %v808 = vunpack.c.0.s8 %v807
    %v809 = vlaneseq
    %v810 = vshrl.u32 %v809, 7
    %v811 = vsub.s32 %v808, %v810
    %v812 = vrot.slane %v798, %v811
    %v813 = vcombine.low %v778, %v786
    %v814 = vcombine.high %v778, %v786
    %v816 = vunpack.c.l.s4 1983009808
    %v817 = vunpack.c.0.s8 %v816
    %v818 = vlaneseq
    %v819 = vshrl.u32 %v818, 7
    %v820 = vsub.s32 %v817, %v819
    %v821 = vrot.slane %v813, %v820
    %v823 = vunpack.c.l.s4 1983009808
    %v824 = vunpack.c.0.s8 %v823
    %v825 = vlaneseq
    %v826 = vshrl.u32 %v825, 7
    %v827 = vsub.s32 %v824, %v826
    %v828 = vrot.slane %v814, %v827
    %v829 = vcombine.low %v805, %v821
    %v830 = vcombine.high %v805, %v821
    %v832 = vunpack.c.l.s4 1934713408
    %v833 = vunpack.c.0.s8 %v832
    %v834 = vlaneseq
    %v835 = vshrl.u32 %v834, 7
    %v836 = vsub.s32 %v833, %v835
    %v837 = vrot.slane %v829, %v836
    %v839 = vunpack.c.l.s4 1934713408
    %v840 = vunpack.c.0.s8 %v839
    %v841 = vlaneseq
    %v842 = vshrl.u32 %v841, 7
    %v843 = vsub.s32 %v840, %v842
    %v844 = vrot.slane %v830, %v843
    %v845 = vcombine.low %v812, %v828
    %v846 = vcombine.high %v812, %v828
    %v848 = vunpack.c.l.s4 1934713408
    %v849 = vunpack.c.0.s8 %v848
    %v850 = vlaneseq
    %v851 = vshrl.u32 %v850, 7
    %v852 = vsub.s32 %v849, %v851
    %v853 = vrot.slane %v845, %v852
    %v855 = vunpack.c.l.s4 1934713408
    %v856 = vunpack.c.0.s8 %v855
    %v857 = vlaneseq
    %v858 = vshrl.u32 %v857, 7
    %v859 = vsub.s32 %v856, %v858
    %v860 = vrot.slane %v846, %v859
    %v861 = vcombine.high %v837, 0.0
    %v862 = vcombine.high %v844, 0.0
    %v863 = vcombine.high %v853, 0.0
    %v864 = vcombine.high %v860, 0.0
    %v865 = vcombine.low %v776, %v784
    %v866 = vcombine.high %v776, %v784
    %v868 = vunpack.c.l.s4 1983009808
    %v869 = vunpack.c.0.s8 %v868
    %v870 = vlaneseq
    %v871 = vshrl.u32 %v870, 7
    %v872 = vsub.s32 %v869, %v871
    %v873 = vrot.slane %v865, %v872
    %v875 = vunpack.c.l.s4 1983009808
    %v876 = vunpack.c.0.s8 %v875
    %v877 = vlaneseq
    %v878 = vshrl.u32 %v877, 7
    %v879 = vsub.s32 %v876, %v878
    %v880 = vrot.slane %v866, %v879
    %v881 = vcombine.low %v780, %v788
    %v882 = vcombine.high %v780, %v788
    %v884 = vunpack.c.l.s4 1983009808
    %v885 = vunpack.c.0.s8 %v884
    %v886 = vlaneseq
    %v887 = vshrl.u32 %v886, 7
    %v888 = vsub.s32 %v885, %v887
    %v889 = vrot.slane %v881, %v888
    %v891 = vunpack.c.l.s4 1983009808
    %v892 = vunpack.c.0.s8 %v891
    %v893 = vlaneseq
    %v894 = vshrl.u32 %v893, 7
    %v895 = vsub.s32 %v892, %v894
    %v896 = vrot.slane %v882, %v895
    %v897 = vcombine.low %v873, %v889
    %v898 = vcombine.high %v873, %v889
    %v900 = vunpack.c.l.s4 1934713408
    %v901 = vunpack.c.0.s8 %v900
    %v902 = vlaneseq
    %v903 = vshrl.u32 %v902, 7
    %v904 = vsub.s32 %v901, %v903
    %v905 = vrot.slane %v897, %v904
    %v907 = vunpack.c.l.s4 1934713408
    %v908 = vunpack.c.0.s8 %v907
    %v909 = vlaneseq
    %v910 = vshrl.u32 %v909, 7
    %v911 = vsub.s32 %v908, %v910
    %v912 = vrot.slane %v898, %v911
    %v913 = vcombine.low %v880, %v896
    %v914 = vcombine.high %v880, %v896
    %v916 = vunpack.c.l.s4 1934713408
    %v917 = vunpack.c.0.s8 %v916
    %v918 = vlaneseq
    %v919 = vshrl.u32 %v918, 7
    %v920 = vsub.s32 %v917, %v919
    %v921 = vrot.slane %v913, %v920
    %v923 = vunpack.c.l.s4 1934713408
    %v924 = vunpack.c.0.s8 %v923
    %v925 = vlaneseq
    %v926 = vshrl.u32 %v925, 7
    %v927 = vsub.s32 %v924, %v926
    %v928 = vrot.slane %v914, %v927
    %v929 = vcombine.high %v905, 0.0
    %v930 = vcombine.high %v912, 0.0
    %v931 = vcombine.high %v921, 0.0
    %v932 = vcombine.high %v928, 0.0
    %v933 = vcombine.low %v837, %v844
    %v935 = vunpack.c.l.s4 1983009808
    %v936 = vunpack.c.0.s8 %v935
    %v937 = vlaneseq
    %v938 = vshrl.u32 %v937, 7
    %v939 = vsub.s32 %v936, %v938
    %v940 = vrot.slane %v933, %v939
    %v941 = vcombine.low %v861, %v862
    %v943 = vunpack.c.l.s4 1983009808
    %v944 = vunpack.c.0.s8 %v943
    %v945 = vlaneseq
    %v946 = vshrl.u32 %v945, 7
    %v947 = vsub.s32 %v944, %v946
    %v948 = vrot.slane %v941, %v947
    %v949 = vcombine.low %v853, %v860
    %v951 = vunpack.c.l.s4 1983009808
    %v952 = vunpack.c.0.s8 %v951
    %v953 = vlaneseq
    %v954 = vshrl.u32 %v953, 7
    %v955 = vsub.s32 %v952, %v954
    %v956 = vrot.slane %v949, %v955
    %v957 = vcombine.low %v863, %v864
    %v959 = vunpack.c.l.s4 1983009808
    %v960 = vunpack.c.0.s8 %v959
    %v961 = vlaneseq
    %v962 = vshrl.u32 %v961, 7
    %v963 = vsub.s32 %v960, %v962
    %v964 = vrot.slane %v957, %v963
    %v965 = vcombine.low %v940, %v948
    %v966 = vcombine.high %v940, %v948
    %v968 = vunpack.c.l.s4 1934713408
    %v969 = vunpack.c.0.s8 %v968
    %v970 = vlaneseq
    %v971 = vshrl.u32 %v970, 7
    %v972 = vsub.s32 %v969, %v971
    %v973 = vrot.slane %v965, %v972
    %v975 = vunpack.c.l.s4 1934713408
    %v976 = vunpack.c.0.s8 %v975
    %v977 = vlaneseq
    %v978 = vshrl.u32 %v977, 7
    %v979 = vsub.s32 %v976, %v978
    %v980 = vrot.slane %v966, %v979
    %v981 = vcombine.low %v956, %v964
    %v982 = vcombine.high %v956, %v964
    %v984 = vunpack.c.l.s4 1934713408
    %v985 = vunpack.c.0.s8 %v984
    %v986 = vlaneseq
    %v987 = vshrl.u32 %v986, 7
    %v988 = vsub.s32 %v985, %v987
    %v989 = vrot.slane %v981, %v988
    %v991 = vunpack.c.l.s4 1934713408
    %v992 = vunpack.c.0.s8 %v991
    %v993 = vlaneseq
    %v994 = vshrl.u32 %v993, 7
    %v995 = vsub.s32 %v992, %v994
    %v996 = vrot.slane %v982, %v995
    %v997 = vcombine.low %v973, %v989
    %v998 = vcombine.high %v973, %v989
    %v999 = vcombine.low %v980, %v996
    %v1000 = vcombine.high %v980, %v996
    %v1001 = vcombine.low %v905, %v912
    %v1003 = vunpack.c.l.s4 1983009808
    %v1004 = vunpack.c.0.s8 %v1003
    %v1005 = vlaneseq
    %v1006 = vshrl.u32 %v1005, 7
    %v1007 = vsub.s32 %v1004, %v1006
    %v1008 = vrot.slane %v1001, %v1007
    %v1009 = vcombine.low %v929, %v930
    %v1011 = vunpack.c.l.s4 1983009808
    %v1012 = vunpack.c.0.s8 %v1011
    %v1013 = vlaneseq
    %v1014 = vshrl.u32 %v1013, 7
    %v1015 = vsub.s32 %v1012, %v1014
    %v1016 = vrot.slane %v1009, %v1015
    %v1017 = vcombine.low %v921, %v928
    %v1019 = vunpack.c.l.s4 1983009808
    %v1020 = vunpack.c.0.s8 %v1019
    %v1021 = vlaneseq
    %v1022 = vshrl.u32 %v1021, 7
    %v1023 = vsub.s32 %v1020, %v1022
    %v1024 = vrot.slane %v1017, %v1023
    %v1025 = vcombine.low %v931, %v932
    %v1027 = vunpack.c.l.s4 1983009808
    %v1028 = vunpack.c.0.s8 %v1027
    %v1029 = vlaneseq
    %v1030 = vshrl.u32 %v1029, 7
    %v1031 = vsub.s32 %v1028, %v1030
    %v1032 = vrot.slane %v1025, %v1031
    %v1033 = vcombine.low %v1008, %v1016
    %v1034 = vcombine.high %v1008, %v1016
    %v1036 = vunpack.c.l.s4 1934713408
    %v1037 = vunpack.c.0.s8 %v1036
    %v1038 = vlaneseq
    %v1039 = vshrl.u32 %v1038, 7
    %v1040 = vsub.s32 %v1037, %v1039
    %v1041 = vrot.slane %v1033, %v1040
    %v1043 = vunpack.c.l.s4 1934713408
    %v1044 = vunpack.c.0.s8 %v1043
    %v1045 = vlaneseq
    %v1046 = vshrl.u32 %v1045, 7
    %v1047 = vsub.s32 %v1044, %v1046
    %v1048 = vrot.slane %v1034, %v1047
    %v1049 = vcombine.low %v1024, %v1032
    %v1050 = vcombine.high %v1024, %v1032
    %v1052 = vunpack.c.l.s4 1934713408
    %v1053 = vunpack.c.0.s8 %v1052
    %v1054 = vlaneseq
    %v1055 = vshrl.u32 %v1054, 7
    %v1056 = vsub.s32 %v1053, %v1055
    %v1057 = vrot.slane %v1049, %v1056
    %v1059 = vunpack.c.l.s4 1934713408
    %v1060 = vunpack.c.0.s8 %v1059
    %v1061 = vlaneseq
    %v1062 = vshrl.u32 %v1061, 7
    %v1063 = vsub.s32 %v1060, %v1062
    %v1064 = vrot.slane %v1050, %v1063
    %v1065 = vcombine.low %v1041, %v1057
    %v1066 = vcombine.high %v1041, %v1057
    %v1067 = vcombine.low %v1048, %v1064
    %v1068 = vcombine.high %v1048, %v1064
    %vm1069 = vcmask 64512
    %v1071 = vsel %vm1069, %v405, 0
    %v1074 = vsel %vm1069, %v473, 0
    %v1077 = vsel %vm1069, %v701, 0
    %v1080 = vsel %vm1069, %v769, 0
    %1082 = vmatprep.subr.mxu0 0.0
    %1083 = vmatpush1.xpose.msra.mxu0 0.0
    %1084 = vmatprep.subr.mxu0 0.0
    %1085 = vmatpush1.xpose.msra.mxu0 0.0
    %1086 = vmatprep.subr.mxu0 0.0
    %1087 = vmatpush1.xpose.msra.mxu0 0.0
    %1088 = vmatprep.subr.mxu0 0.0
    %1089 = vmatpush1.xpose.msra.mxu0 0.0
    %1090 = vmatprep.subr.mxu0 0.0
    %1091 = vmatpush1.xpose.msra.mxu0 0.0
    %1092 = vmatprep.subr.mxu0 0.0
    %1093 = vmatpush1.xpose.msra.mxu0 0.0
    %1094 = vmatprep.subr.mxu0 0.0
    %1095 = vmatpush1.xpose.msra.mxu0 0.0
    %1096 = vmatprep.subr.mxu0 0.0
    %1097 = vmatpush1.xpose.msra.mxu0 0.0
    %1098 = vmatprep.subr.mxu0 0.0
    %1099 = vmatpush1.xpose.msra.mxu0 0.0
    %1100 = vmatprep.subr.mxu0 0.0
    %1101 = vmatpush1.xpose.msra.mxu0 0.0
    %1102 = vmatprep.subr.mxu0 0.0
    %1103 = vmatpush1.xpose.msra.mxu0 0.0
    %1104 = vmatprep.subr.mxu0 0.0
    %1105 = vmatpush1.xpose.msra.mxu0 0.0
    %1106 = vmatprep.subr.mxu0 0.0
    %1107 = vmatpush1.xpose.msra.mxu0 0.0
    %1108 = vmatprep.subr.mxu0 0.0
    %1109 = vmatpush1.xpose.msra.mxu0 0.0
    %1110 = vmatprep.subr.mxu0 0.0
    %1111 = vmatpush1.xpose.msra.mxu0 %v1080
    %1112 = vmatprep.subr.mxu0 0.0
    %1113 = vmatpush1.xpose.msra.mxu0 %v1077
    %1114 = vmatprep.subr.mxu0 0.0
    %1115 = vmatpush2.xpose.msra.mxu0 0.0
    %1116 = vmatprep.subr.mxu0 0.0
    %1117 = vmatpush2.xpose.msra.mxu0 0.0
    %1118 = vmatprep.subr.mxu0 0.0
    %1119 = vmatpush2.xpose.msra.mxu0 0.0
    %1120 = vmatprep.subr.mxu0 0.0
    %1121 = vmatpush2.xpose.msra.mxu0 0.0
    %1122 = vmatprep.subr.mxu0 0.0
    %1123 = vmatpush2.xpose.msra.mxu0 0.0
    %1124 = vmatprep.subr.mxu0 0.0
    %1125 = vmatpush2.xpose.msra.mxu0 0.0
    %1126 = vmatprep.subr.mxu0 0.0
    %1127 = vmatpush2.xpose.msra.mxu0 0.0
    %1128 = vmatprep.subr.mxu0 0.0
    %1129 = vmatpush2.xpose.msra.mxu0 0.0
    %1130 = vmatprep.subr.mxu0 0.0
    %1131 = vmatpush2.xpose.msra.mxu0 0.0
    %1132 = vmatprep.subr.mxu0 0.0
    %1133 = vmatpush2.xpose.msra.mxu0 0.0
    %1134 = vmatprep.subr.mxu0 0.0
    %1135 = vmatpush2.xpose.msra.mxu0 0.0
    %1136 = vmatprep.subr.mxu0 0.0
    %1137 = vmatpush2.xpose.msra.mxu0 0.0
    %1138 = vmatprep.subr.mxu0 0.0
    %1139 = vmatpush2.xpose.msra.mxu0 0.0
    %1140 = vmatprep.subr.mxu0 0.0
    %1141 = vmatpush2.xpose.msra.mxu0 0.0
    %1142 = vmatprep.subr.mxu0 0.0
    %1143 = vmatpush2.xpose.msra.mxu0 0.0
    %1144 = vmatprep.subr.mxu0 0.0
    %1145 = vmatpush2.xpose.msra.mxu0 0.0
    %1146 = vmatprep.mubr.f32.mxu0 0.0
    %1147 = vmatmul.mubr.f32.gmra.mxu0 %v1071
    %v1148 = vpop.f32.mrf.mxu0
    %v1149 = vadd.f32 %v47, %v1148
    %v1150 = vpop.f32.mrf.mxu0
    %1151 = vmatprep.mubr.f32.mxu0 0.0
    %1152 = vmatmul.mubr.f32.gmra.mxu0 %v1074
    %v1153 = vpop.f32.mrf.mxu0
    %v1154 = vadd.f32 %v48, %v1153
    %v1155 = vpop.f32.mrf.mxu0
    %1156 = vdwg.mxu0
    %v1158 = vsel %vm1069, %v406, 0
    %v1161 = vsel %vm1069, %v474, 0
    %v1164 = vsel %vm1069, %v702, 0
    %v1167 = vsel %vm1069, %v770, 0
    %1169 = vmatprep.subr.mxu0 0.0
    %1170 = vmatpush1.xpose.msra.mxu0 0.0
    %1171 = vmatprep.subr.mxu0 0.0
    %1172 = vmatpush1.xpose.msra.mxu0 0.0
    %1173 = vmatprep.subr.mxu0 0.0
    %1174 = vmatpush1.xpose.msra.mxu0 0.0
    %1175 = vmatprep.subr.mxu0 0.0
    %1176 = vmatpush1.xpose.msra.mxu0 0.0
    %1177 = vmatprep.subr.mxu0 0.0
    %1178 = vmatpush1.xpose.msra.mxu0 0.0
    %1179 = vmatprep.subr.mxu0 0.0
    %1180 = vmatpush1.xpose.msra.mxu0 0.0
    %1181 = vmatprep.subr.mxu0 0.0
    %1182 = vmatpush1.xpose.msra.mxu0 0.0
    %1183 = vmatprep.subr.mxu0 0.0
    %1184 = vmatpush1.xpose.msra.mxu0 0.0
    %1185 = vmatprep.subr.mxu0 0.0
    %1186 = vmatpush1.xpose.msra.mxu0 0.0
    %1187 = vmatprep.subr.mxu0 0.0
    %1188 = vmatpush1.xpose.msra.mxu0 0.0
    %1189 = vmatprep.subr.mxu0 0.0
    %1190 = vmatpush1.xpose.msra.mxu0 0.0
    %1191 = vmatprep.subr.mxu0 0.0
    %1192 = vmatpush1.xpose.msra.mxu0 0.0
    %1193 = vmatprep.subr.mxu0 0.0
    %1194 = vmatpush1.xpose.msra.mxu0 0.0
    %1195 = vmatprep.subr.mxu0 0.0
    %1196 = vmatpush1.xpose.msra.mxu0 0.0
    %1197 = vmatprep.subr.mxu0 0.0
    %1198 = vmatpush1.xpose.msra.mxu0 %v1167
    %1199 = vmatprep.subr.mxu0 0.0
    %1200 = vmatpush1.xpose.msra.mxu0 %v1164
    %1201 = vmatprep.subr.mxu0 0.0
    %1202 = vmatpush2.xpose.msra.mxu0 0.0
    %1203 = vmatprep.subr.mxu0 0.0
    %1204 = vmatpush2.xpose.msra.mxu0 0.0
    %1205 = vmatprep.subr.mxu0 0.0
    %1206 = vmatpush2.xpose.msra.mxu0 0.0
    %1207 = vmatprep.subr.mxu0 0.0
    %1208 = vmatpush2.xpose.msra.mxu0 0.0
    %1209 = vmatprep.subr.mxu0 0.0
    %1210 = vmatpush2.xpose.msra.mxu0 0.0
    %1211 = vmatprep.subr.mxu0 0.0
    %1212 = vmatpush2.xpose.msra.mxu0 0.0
    %1213 = vmatprep.subr.mxu0 0.0
    %1214 = vmatpush2.xpose.msra.mxu0 0.0
    %1215 = vmatprep.subr.mxu0 0.0
    %1216 = vmatpush2.xpose.msra.mxu0 0.0
    %1217 = vmatprep.subr.mxu0 0.0
    %1218 = vmatpush2.xpose.msra.mxu0 0.0
    %1219 = vmatprep.subr.mxu0 0.0
    %1220 = vmatpush2.xpose.msra.mxu0 0.0
    %1221 = vmatprep.subr.mxu0 0.0
    %1222 = vmatpush2.xpose.msra.mxu0 0.0
    %1223 = vmatprep.subr.mxu0 0.0
    %1224 = vmatpush2.xpose.msra.mxu0 0.0
    %1225 = vmatprep.subr.mxu0 0.0
    %1226 = vmatpush2.xpose.msra.mxu0 0.0
    %1227 = vmatprep.subr.mxu0 0.0
    %1228 = vmatpush2.xpose.msra.mxu0 0.0
    %1229 = vmatprep.subr.mxu0 0.0
    %1230 = vmatpush2.xpose.msra.mxu0 0.0
    %1231 = vmatprep.subr.mxu0 0.0
    %1232 = vmatpush2.xpose.msra.mxu0 0.0
    %1233 = vmatprep.mubr.f32.mxu0 0.0
    %1234 = vmatmul.mubr.f32.gmra.mxu0 %v1158
    %v1235 = vpop.f32.mrf.mxu0
    %v1236 = vadd.f32 %v47, %v1235
    %v1237 = vpop.f32.mrf.mxu0
    %1238 = vmatprep.mubr.f32.mxu0 0.0
    %1239 = vmatmul.mubr.f32.gmra.mxu0 %v1161
    %v1240 = vpop.f32.mrf.mxu0
    %v1241 = vadd.f32 %v48, %v1240
    %v1242 = vpop.f32.mrf.mxu0
    %1243 = vdwg.mxu0
    %v1245 = vsel %vm1069, %v407, 0
    %v1248 = vsel %vm1069, %v475, 0
    %v1251 = vsel %vm1069, %v703, 0
    %v1254 = vsel %vm1069, %v771, 0
    %1256 = vmatprep.subr.mxu0 0.0
    %1257 = vmatpush1.xpose.msra.mxu0 0.0
    %1258 = vmatprep.subr.mxu0 0.0
    %1259 = vmatpush1.xpose.msra.mxu0 0.0
    %1260 = vmatprep.subr.mxu0 0.0
    %1261 = vmatpush1.xpose.msra.mxu0 0.0
    %1262 = vmatprep.subr.mxu0 0.0
    %1263 = vmatpush1.xpose.msra.mxu0 0.0
    %1264 = vmatprep.subr.mxu0 0.0
    %1265 = vmatpush1.xpose.msra.mxu0 0.0
    %1266 = vmatprep.subr.mxu0 0.0
    %1267 = vmatpush1.xpose.msra.mxu0 0.0
    %1268 = vmatprep.subr.mxu0 0.0
    %1269 = vmatpush1.xpose.msra.mxu0 0.0
    %1270 = vmatprep.subr.mxu0 0.0
    %1271 = vmatpush1.xpose.msra.mxu0 0.0
    %1272 = vmatprep.subr.mxu0 0.0
    %1273 = vmatpush1.xpose.msra.mxu0 0.0
    %1274 = vmatprep.subr.mxu0 0.0
    %1275 = vmatpush1.xpose.msra.mxu0 0.0
    %1276 = vmatprep.subr.mxu0 0.0
    %1277 = vmatpush1.xpose.msra.mxu0 0.0
    %1278 = vmatprep.subr.mxu0 0.0
    %1279 = vmatpush1.xpose.msra.mxu0 0.0
    %1280 = vmatprep.subr.mxu0 0.0
    %1281 = vmatpush1.xpose.msra.mxu0 0.0
    %1282 = vmatprep.subr.mxu0 0.0
    %1283 = vmatpush1.xpose.msra.mxu0 0.0
    %1284 = vmatprep.subr.mxu0 0.0
    %1285 = vmatpush1.xpose.msra.mxu0 %v1254
    %1286 = vmatprep.subr.mxu0 0.0
    %1287 = vmatpush1.xpose.msra.mxu0 %v1251
    %1288 = vmatprep.subr.mxu0 0.0
    %1289 = vmatpush2.xpose.msra.mxu0 0.0
    %1290 = vmatprep.subr.mxu0 0.0
    %1291 = vmatpush2.xpose.msra.mxu0 0.0
    %1292 = vmatprep.subr.mxu0 0.0
    %1293 = vmatpush2.xpose.msra.mxu0 0.0
    %1294 = vmatprep.subr.mxu0 0.0
    %1295 = vmatpush2.xpose.msra.mxu0 0.0
    %1296 = vmatprep.subr.mxu0 0.0
    %1297 = vmatpush2.xpose.msra.mxu0 0.0
    %1298 = vmatprep.subr.mxu0 0.0
    %1299 = vmatpush2.xpose.msra.mxu0 0.0
    %1300 = vmatprep.subr.mxu0 0.0
    %1301 = vmatpush2.xpose.msra.mxu0 0.0
    %1302 = vmatprep.subr.mxu0 0.0
    %1303 = vmatpush2.xpose.msra.mxu0 0.0
    %1304 = vmatprep.subr.mxu0 0.0
    %1305 = vmatpush2.xpose.msra.mxu0 0.0
    %1306 = vmatprep.subr.mxu0 0.0
    %1307 = vmatpush2.xpose.msra.mxu0 0.0
    %1308 = vmatprep.subr.mxu0 0.0
    %1309 = vmatpush2.xpose.msra.mxu0 0.0
    %1310 = vmatprep.subr.mxu0 0.0
    %1311 = vmatpush2.xpose.msra.mxu0 0.0
    %1312 = vmatprep.subr.mxu0 0.0
    %1313 = vmatpush2.xpose.msra.mxu0 0.0
    %1314 = vmatprep.subr.mxu0 0.0
    %1315 = vmatpush2.xpose.msra.mxu0 0.0
    %1316 = vmatprep.subr.mxu0 0.0
    %1317 = vmatpush2.xpose.msra.mxu0 0.0
    %1318 = vmatprep.subr.mxu0 0.0
    %1319 = vmatpush2.xpose.msra.mxu0 0.0
    %1320 = vmatprep.mubr.f32.mxu0 0.0
    %1321 = vmatmul.mubr.f32.gmra.mxu0 %v1245
    %v1322 = vpop.f32.mrf.mxu0
    %v1323 = vadd.f32 %v47, %v1322
    %v1324 = vpop.f32.mrf.mxu0
    %1325 = vmatprep.mubr.f32.mxu0 0.0
    %1326 = vmatmul.mubr.f32.gmra.mxu0 %v1248
    %v1327 = vpop.f32.mrf.mxu0
    %v1328 = vadd.f32 %v48, %v1327
    %v1329 = vpop.f32.mrf.mxu0
    %1330 = vdwg.mxu0
    %v1332 = vsel %vm1069, %v408, 0
    %v1335 = vsel %vm1069, %v476, 0
    %v1338 = vsel %vm1069, %v704, 0
    %v1341 = vsel %vm1069, %v772, 0
    %1343 = vmatprep.subr.mxu0 0.0
    %1344 = vmatpush1.xpose.msra.mxu0 0.0
    %1345 = vmatprep.subr.mxu0 0.0
    %1346 = vmatpush1.xpose.msra.mxu0 0.0
    %1347 = vmatprep.subr.mxu0 0.0
    %1348 = vmatpush1.xpose.msra.mxu0 0.0
    %1349 = vmatprep.subr.mxu0 0.0
    %1350 = vmatpush1.xpose.msra.mxu0 0.0
    %1351 = vmatprep.subr.mxu0 0.0
    %1352 = vmatpush1.xpose.msra.mxu0 0.0
    %1353 = vmatprep.subr.mxu0 0.0
    %1354 = vmatpush1.xpose.msra.mxu0 0.0
    %1355 = vmatprep.subr.mxu0 0.0
    %1356 = vmatpush1.xpose.msra.mxu0 0.0
    %1357 = vmatprep.subr.mxu0 0.0
    %1358 = vmatpush1.xpose.msra.mxu0 0.0
    %1359 = vmatprep.subr.mxu0 0.0
    %1360 = vmatpush1.xpose.msra.mxu0 0.0
    %1361 = vmatprep.subr.mxu0 0.0
    %1362 = vmatpush1.xpose.msra.mxu0 0.0
    %1363 = vmatprep.subr.mxu0 0.0
    %1364 = vmatpush1.xpose.msra.mxu0 0.0
    %1365 = vmatprep.subr.mxu0 0.0
    %1366 = vmatpush1.xpose.msra.mxu0 0.0
    %1367 = vmatprep.subr.mxu0 0.0
    %1368 = vmatpush1.xpose.msra.mxu0 0.0
    %1369 = vmatprep.subr.mxu0 0.0
    %1370 = vmatpush1.xpose.msra.mxu0 0.0
    %1371 = vmatprep.subr.mxu0 0.0
    %1372 = vmatpush1.xpose.msra.mxu0 %v1341
    %1373 = vmatprep.subr.mxu0 0.0
    %1374 = vmatpush1.xpose.msra.mxu0 %v1338
    %1375 = vmatprep.subr.mxu0 0.0
    %1376 = vmatpush2.xpose.msra.mxu0 0.0
    %1377 = vmatprep.subr.mxu0 0.0
    %1378 = vmatpush2.xpose.msra.mxu0 0.0
    %1379 = vmatprep.subr.mxu0 0.0
    %1380 = vmatpush2.xpose.msra.mxu0 0.0
    %1381 = vmatprep.subr.mxu0 0.0
    %1382 = vmatpush2.xpose.msra.mxu0 0.0
    %1383 = vmatprep.subr.mxu0 0.0
    %1384 = vmatpush2.xpose.msra.mxu0 0.0
    %1385 = vmatprep.subr.mxu0 0.0
    %1386 = vmatpush2.xpose.msra.mxu0 0.0
    %1387 = vmatprep.subr.mxu0 0.0
    %1388 = vmatpush2.xpose.msra.mxu0 0.0
    %1389 = vmatprep.subr.mxu0 0.0
    %1390 = vmatpush2.xpose.msra.mxu0 0.0
    %1391 = vmatprep.subr.mxu0 0.0
    %1392 = vmatpush2.xpose.msra.mxu0 0.0
    %1393 = vmatprep.subr.mxu0 0.0
    %1394 = vmatpush2.xpose.msra.mxu0 0.0
    %1395 = vmatprep.subr.mxu0 0.0
    %1396 = vmatpush2.xpose.msra.mxu0 0.0
    %1397 = vmatprep.subr.mxu0 0.0
    %1398 = vmatpush2.xpose.msra.mxu0 0.0
    %1399 = vmatprep.subr.mxu0 0.0
    %1400 = vmatpush2.xpose.msra.mxu0 0.0
    %1401 = vmatprep.subr.mxu0 0.0
    %1402 = vmatpush2.xpose.msra.mxu0 0.0
    %1403 = vmatprep.subr.mxu0 0.0
    %1404 = vmatpush2.xpose.msra.mxu0 0.0
    %1405 = vmatprep.subr.mxu0 0.0
    %1406 = vmatpush2.xpose.msra.mxu0 0.0
    %1407 = vmatprep.mubr.f32.mxu0 0.0
    %1408 = vmatmul.mubr.f32.gmra.mxu0 %v1332
    %v1409 = vpop.f32.mrf.mxu0
    %v1410 = vadd.f32 %v47, %v1409
    %v1411 = vpop.f32.mrf.mxu0
    %1412 = vmatprep.mubr.f32.mxu0 0.0
    %1413 = vmatmul.mubr.f32.gmra.mxu0 %v1335
    %v1414 = vpop.f32.mrf.mxu0
    %v1415 = vadd.f32 %v48, %v1414
    %v1416 = vpop.f32.mrf.mxu0
    %1417 = vdwg.mxu0
    %vm1418 = vcmask 130048
    %v1419 = vsel %vm1418, %v1149, -inf
    %1420 = vmax.xlane.f32.xlu0 %v1419
    %v1421 = vpop.xlane.xlu0 %1420
    %v1422 = vsel %vm1418, %v1154, -inf
    %1423 = vmax.xlane.f32.xlu0 %v1422
    %v1424 = vpop.xlane.xlu0 %1423
    %v1425 = vsel %vm1418, %v1236, -inf
    %1426 = vmax.xlane.f32.xlu0 %v1425
    %v1427 = vpop.xlane.xlu0 %1426
    %v1428 = vsel %vm1418, %v1241, -inf
    %1429 = vmax.xlane.f32.xlu0 %v1428
    %v1430 = vpop.xlane.xlu0 %1429
    %v1431 = vsel %vm1418, %v1323, -inf
    %1432 = vmax.xlane.f32.xlu0 %v1431
    %v1433 = vpop.xlane.xlu0 %1432
    %v1434 = vsel %vm1418, %v1328, -inf
    %1435 = vmax.xlane.f32.xlu0 %v1434
    %v1436 = vpop.xlane.xlu0 %1435
    %v1437 = vsel %vm1418, %v1410, -inf
    %1438 = vmax.xlane.f32.xlu0 %v1437
    %v1439 = vpop.xlane.xlu0 %1438
    %v1440 = vsel %vm1418, %v1415, -inf
    %1441 = vmax.xlane.f32.xlu0 %v1440
    %v1442 = vpop.xlane.xlu0 %1441
    %v1443 = vsub.f32 %v1149, %v1421
    %v1444 = vsub.f32 %v1154, %v1424
    %v1445 = vsub.f32 %v1236, %v1427
    %v1446 = vsub.f32 %v1241, %v1430
    %v1447 = vsub.f32 %v1323, %v1433
    %v1448 = vsub.f32 %v1328, %v1436
    %v1449 = vsub.f32 %v1410, %v1439
    %v1450 = vsub.f32 %v1415, %v1442
    %v1451 = vmul.f32 %v1443, 1.442695
    %v1452 = vpow.pop %v1451
    %v1453 = vmul.f32 %v1444, 1.442695
    %v1454 = vpow.pop %v1453
    %v1455 = vmul.f32 %v1445, 1.442695
    %v1456 = vpow.pop %v1455
    %v1457 = vmul.f32 %v1446, 1.442695
    %v1458 = vpow.pop %v1457
    %v1459 = vmul.f32 %v1447, 1.442695
    %v1460 = vpow.pop %v1459
    %v1461 = vmul.f32 %v1448, 1.442695
    %v1462 = vpow.pop %v1461
    %v1463 = vmul.f32 %v1449, 1.442695
    %v1464 = vpow.pop %v1463
    %v1465 = vmul.f32 %v1450, 1.442695
    %v1466 = vpow.pop %v1465
    %v1467 = vsel %vm1418, %v1452, 0.0
    %1468 = vadd.xlane.f32.xlu0 %v1467
    %v1469 = vpop.xlane.xlu0 %1468
    %v1470 = vsel %vm1418, %v1454, 0.0
    %1471 = vadd.xlane.f32.xlu0 %v1470
    %v1472 = vpop.xlane.xlu0 %1471
    %v1473 = vsel %vm1418, %v1456, 0.0
    %1474 = vadd.xlane.f32.xlu0 %v1473
    %v1475 = vpop.xlane.xlu0 %1474
    %v1476 = vsel %vm1418, %v1458, 0.0
    %1477 = vadd.xlane.f32.xlu0 %v1476
    %v1478 = vpop.xlane.xlu0 %1477
    %v1479 = vsel %vm1418, %v1460, 0.0
    %1480 = vadd.xlane.f32.xlu0 %v1479
    %v1481 = vpop.xlane.xlu0 %1480
    %v1482 = vsel %vm1418, %v1462, 0.0
    %1483 = vadd.xlane.f32.xlu0 %v1482
    %v1484 = vpop.xlane.xlu0 %1483
    %v1485 = vsel %vm1418, %v1464, 0.0
    %1486 = vadd.xlane.f32.xlu0 %v1485
    %v1487 = vpop.xlane.xlu0 %1486
    %v1488 = vsel %vm1418, %v1466, 0.0
    %1489 = vadd.xlane.f32.xlu0 %v1488
    %v1490 = vpop.xlane.xlu0 %1489
    %v1491 = vrcp.pop %v1469
    %v1492 = vrcp.pop %v1472
    %v1493 = vrcp.pop %v1475
    %v1494 = vrcp.pop %v1478
    %v1495 = vrcp.pop %v1481
    %v1496 = vrcp.pop %v1484
    %v1497 = vrcp.pop %v1487
    %v1498 = vrcp.pop %v1490
    %v1499 = vmul.f32 %v1452, %v1491
    %v1500 = vmul.f32 %v1454, %v1492
    %v1501 = vmul.f32 %v1456, %v1493
    %v1502 = vmul.f32 %v1458, %v1494
    %v1503 = vmul.f32 %v1460, %v1495
    %v1504 = vmul.f32 %v1462, %v1496
    %v1505 = vmul.f32 %v1464, %v1497
    %v1506 = vmul.f32 %v1466, %v1498
    %v1508 = vsel %vm1418, %v1499, 0
    %v1511 = vsel %vm1418, %v1500, 0
    %1513 = vmatprep.subr.mxu0 0.0
    %1514 = vmatpush1.msra.mxu0 0.0
    %1515 = vmatprep.subr.mxu0 0.0
    %1516 = vmatpush1.msra.mxu0 0.0
    %1517 = vmatprep.subr.mxu0 0.0
    %1518 = vmatpush1.msra.mxu0 0.0
    %1519 = vmatprep.subr.mxu0 0.0
    %1520 = vmatpush1.msra.mxu0 0.0
    %1521 = vmatprep.subr.mxu0 0.0
    %1522 = vmatpush1.msra.mxu0 0.0
    %1523 = vmatprep.subr.mxu0 0.0
    %1524 = vmatpush1.msra.mxu0 0.0
    %1525 = vmatprep.subr.mxu0 0.0
    %1526 = vmatpush1.msra.mxu0 0.0
    %1527 = vmatprep.subr.mxu0 0.0
    %1528 = vmatpush1.msra.mxu0 0.0
    %1529 = vmatprep.subr.mxu0 0.0
    %1530 = vmatpush1.msra.mxu0 0.0
    %1531 = vmatprep.subr.mxu0 0.0
    %1532 = vmatpush1.msra.mxu0 0.0
    %1533 = vmatprep.subr.mxu0 0.0
    %1534 = vmatpush1.msra.mxu0 0.0
    %1535 = vmatprep.subr.mxu0 0.0
    %1536 = vmatpush1.msra.mxu0 0.0
    %1537 = vmatprep.subr.mxu0 0.0
    %1538 = vmatpush1.msra.mxu0 0.0
    %1539 = vmatprep.subr.mxu0 0.0
    %1540 = vmatpush1.msra.mxu0 0.0
    %1541 = vmatprep.subr.mxu0 0.0
    %1542 = vmatpush1.msra.mxu0 %v1065
    %1543 = vmatprep.subr.mxu0 0.0
    %1544 = vmatpush1.msra.mxu0 %v997
    %1545 = vmatprep.subr.mxu0 0.0
    %1546 = vmatpush2.msra.mxu0 0.0
    %1547 = vmatprep.subr.mxu0 0.0
    %1548 = vmatpush2.msra.mxu0 0.0
    %1549 = vmatprep.subr.mxu0 0.0
    %1550 = vmatpush2.msra.mxu0 0.0
    %1551 = vmatprep.subr.mxu0 0.0
    %1552 = vmatpush2.msra.mxu0 0.0
    %1553 = vmatprep.subr.mxu0 0.0
    %1554 = vmatpush2.msra.mxu0 0.0
    %1555 = vmatprep.subr.mxu0 0.0
    %1556 = vmatpush2.msra.mxu0 0.0
    %1557 = vmatprep.subr.mxu0 0.0
    %1558 = vmatpush2.msra.mxu0 0.0
    %1559 = vmatprep.subr.mxu0 0.0
    %1560 = vmatpush2.msra.mxu0 0.0
    %1561 = vmatprep.subr.mxu0 0.0
    %1562 = vmatpush2.msra.mxu0 0.0
    %1563 = vmatprep.subr.mxu0 0.0
    %1564 = vmatpush2.msra.mxu0 0.0
    %1565 = vmatprep.subr.mxu0 0.0
    %1566 = vmatpush2.msra.mxu0 0.0
    %1567 = vmatprep.subr.mxu0 0.0
    %1568 = vmatpush2.msra.mxu0 0.0
    %1569 = vmatprep.subr.mxu0 0.0
    %1570 = vmatpush2.msra.mxu0 0.0
    %1571 = vmatprep.subr.mxu0 0.0
    %1572 = vmatpush2.msra.mxu0 0.0
    %1573 = vmatprep.subr.mxu0 0.0
    %1574 = vmatpush2.msra.mxu0 0.0
    %1575 = vmatprep.subr.mxu0 0.0
    %1576 = vmatpush2.msra.mxu0 0.0
    %1577 = vmatprep.mubr.f32.mxu0 0.0
    %1578 = vmatmul.mubr.f32.gmra.mxu0 %v1508
    %v1579 = vpop.f32.mrf.mxu0
    %v1580 = vadd.f32 0.0, %v1579
    %v1581 = vpop.f32.mrf.mxu0
    %1582 = vmatprep.mubr.f32.mxu0 0.0
    %1583 = vmatmul.mubr.f32.gmra.mxu0 %v1511
    %v1584 = vpop.f32.mrf.mxu0
    %v1585 = vadd.f32 0.0, %v1584
    %v1586 = vpop.f32.mrf.mxu0
    %1587 = vdwg.mxu0
    %v1589 = vsel %vm1418, %v1501, 0
    %v1592 = vsel %vm1418, %v1502, 0
    %1594 = vmatprep.subr.mxu0 0.0
    %1595 = vmatpush1.msra.mxu0 0.0
    %1596 = vmatprep.subr.mxu0 0.0
    %1597 = vmatpush1.msra.mxu0 0.0
    %1598 = vmatprep.subr.mxu0 0.0
    %1599 = vmatpush1.msra.mxu0 0.0
    %1600 = vmatprep.subr.mxu0 0.0
    %1601 = vmatpush1.msra.mxu0 0.0
    %1602 = vmatprep.subr.mxu0 0.0
    %1603 = vmatpush1.msra.mxu0 0.0
    %1604 = vmatprep.subr.mxu0 0.0
    %1605 = vmatpush1.msra.mxu0 0.0
    %1606 = vmatprep.subr.mxu0 0.0
    %1607 = vmatpush1.msra.mxu0 0.0
    %1608 = vmatprep.subr.mxu0 0.0
    %1609 = vmatpush1.msra.mxu0 0.0
    %1610 = vmatprep.subr.mxu0 0.0
    %1611 = vmatpush1.msra.mxu0 0.0
    %1612 = vmatprep.subr.mxu0 0.0
    %1613 = vmatpush1.msra.mxu0 0.0
    %1614 = vmatprep.subr.mxu0 0.0
    %1615 = vmatpush1.msra.mxu0 0.0
    %1616 = vmatprep.subr.mxu0 0.0
    %1617 = vmatpush1.msra.mxu0 0.0
    %1618 = vmatprep.subr.mxu0 0.0
    %1619 = vmatpush1.msra.mxu0 0.0
    %1620 = vmatprep.subr.mxu0 0.0
    %1621 = vmatpush1.msra.mxu0 0.0
    %1622 = vmatprep.subr.mxu0 0.0
    %1623 = vmatpush1.msra.mxu0 %v1066
    %1624 = vmatprep.subr.mxu0 0.0
    %1625 = vmatpush1.msra.mxu0 %v998
    %1626 = vmatprep.subr.mxu0 0.0
    %1627 = vmatpush2.msra.mxu0 0.0
    %1628 = vmatprep.subr.mxu0 0.0
    %1629 = vmatpush2.msra.mxu0 0.0
    %1630 = vmatprep.subr.mxu0 0.0
    %1631 = vmatpush2.msra.mxu0 0.0
    %1632 = vmatprep.subr.mxu0 0.0
    %1633 = vmatpush2.msra.mxu0 0.0
    %1634 = vmatprep.subr.mxu0 0.0
    %1635 = vmatpush2.msra.mxu0 0.0
    %1636 = vmatprep.subr.mxu0 0.0
    %1637 = vmatpush2.msra.mxu0 0.0
    %1638 = vmatprep.subr.mxu0 0.0
    %1639 = vmatpush2.msra.mxu0 0.0
    %1640 = vmatprep.subr.mxu0 0.0
    %1641 = vmatpush2.msra.mxu0 0.0
    %1642 = vmatprep.subr.mxu0 0.0
    %1643 = vmatpush2.msra.mxu0 0.0
    %1644 = vmatprep.subr.mxu0 0.0
    %1645 = vmatpush2.msra.mxu0 0.0
    %1646 = vmatprep.subr.mxu0 0.0
    %1647 = vmatpush2.msra.mxu0 0.0
    %1648 = vmatprep.subr.mxu0 0.0
    %1649 = vmatpush2.msra.mxu0 0.0
    %1650 = vmatprep.subr.mxu0 0.0
    %1651 = vmatpush2.msra.mxu0 0.0
    %1652 = vmatprep.subr.mxu0 0.0
    %1653 = vmatpush2.msra.mxu0 0.0
    %1654 = vmatprep.subr.mxu0 0.0
    %1655 = vmatpush2.msra.mxu0 0.0
    %1656 = vmatprep.subr.mxu0 0.0
    %1657 = vmatpush2.msra.mxu0 0.0
    %1658 = vmatprep.mubr.f32.mxu0 0.0
    %1659 = vmatmul.mubr.f32.gmra.mxu0 %v1589
    %v1660 = vpop.f32.mrf.mxu0
    %v1661 = vadd.f32 0.0, %v1660
    %v1662 = vpop.f32.mrf.mxu0
    %1663 = vmatprep.mubr.f32.mxu0 0.0
    %1664 = vmatmul.mubr.f32.gmra.mxu0 %v1592
    %v1665 = vpop.f32.mrf.mxu0
    %v1666 = vadd.f32 0.0, %v1665
    %v1667 = vpop.f32.mrf.mxu0
    %1668 = vdwg.mxu0
    %v1670 = vsel %vm1418, %v1503, 0
    %v1673 = vsel %vm1418, %v1504, 0
    %1675 = vmatprep.subr.mxu0 0.0
    %1676 = vmatpush1.msra.mxu0 0.0
    %1677 = vmatprep.subr.mxu0 0.0
    %1678 = vmatpush1.msra.mxu0 0.0
    %1679 = vmatprep.subr.mxu0 0.0
    %1680 = vmatpush1.msra.mxu0 0.0
    %1681 = vmatprep.subr.mxu0 0.0
    %1682 = vmatpush1.msra.mxu0 0.0
    %1683 = vmatprep.subr.mxu0 0.0
    %1684 = vmatpush1.msra.mxu0 0.0
    %1685 = vmatprep.subr.mxu0 0.0
    %1686 = vmatpush1.msra.mxu0 0.0
    %1687 = vmatprep.subr.mxu0 0.0
    %1688 = vmatpush1.msra.mxu0 0.0
    %1689 = vmatprep.subr.mxu0 0.0
    %1690 = vmatpush1.msra.mxu0 0.0
    %1691 = vmatprep.subr.mxu0 0.0
    %1692 = vmatpush1.msra.mxu0 0.0
    %1693 = vmatprep.subr.mxu0 0.0
    %1694 = vmatpush1.msra.mxu0 0.0
    %1695 = vmatprep.subr.mxu0 0.0
    %1696 = vmatpush1.msra.mxu0 0.0
    %1697 = vmatprep.subr.mxu0 0.0
    %1698 = vmatpush1.msra.mxu0 0.0
    %1699 = vmatprep.subr.mxu0 0.0
    %1700 = vmatpush1.msra.mxu0 0.0
    %1701 = vmatprep.subr.mxu0 0.0
    %1702 = vmatpush1.msra.mxu0 0.0
    %1703 = vmatprep.subr.mxu0 0.0
    %1704 = vmatpush1.msra.mxu0 %v1067
    %1705 = vmatprep.subr.mxu0 0.0
    %1706 = vmatpush1.msra.mxu0 %v999
    %1707 = vmatprep.subr.mxu0 0.0
    %1708 = vmatpush2.msra.mxu0 0.0
    %1709 = vmatprep.subr.mxu0 0.0
    %1710 = vmatpush2.msra.mxu0 0.0
    %1711 = vmatprep.subr.mxu0 0.0
    %1712 = vmatpush2.msra.mxu0 0.0
    %1713 = vmatprep.subr.mxu0 0.0
    %1714 = vmatpush2.msra.mxu0 0.0
    %1715 = vmatprep.subr.mxu0 0.0
    %1716 = vmatpush2.msra.mxu0 0.0
    %1717 = vmatprep.subr.mxu0 0.0
    %1718 = vmatpush2.msra.mxu0 0.0
    %1719 = vmatprep.subr.mxu0 0.0
    %1720 = vmatpush2.msra.mxu0 0.0
    %1721 = vmatprep.subr.mxu0 0.0
    %1722 = vmatpush2.msra.mxu0 0.0
    %1723 = vmatprep.subr.mxu0 0.0
    %1724 = vmatpush2.msra.mxu0 0.0
    %1725 = vmatprep.subr.mxu0 0.0
    %1726 = vmatpush2.msra.mxu0 0.0
    %1727 = vmatprep.subr.mxu0 0.0
    %1728 = vmatpush2.msra.mxu0 0.0
    %1729 = vmatprep.subr.mxu0 0.0
    %1730 = vmatpush2.msra.mxu0 0.0
    %1731 = vmatprep.subr.mxu0 0.0
    %1732 = vmatpush2.msra.mxu0 0.0
    %1733 = vmatprep.subr.mxu0 0.0
    %1734 = vmatpush2.msra.mxu0 0.0
    %1735 = vmatprep.subr.mxu0 0.0
    %1736 = vmatpush2.msra.mxu0 0.0
    %1737 = vmatprep.subr.mxu0 0.0
    %1738 = vmatpush2.msra.mxu0 0.0
    %1739 = vmatprep.mubr.f32.mxu0 0.0
    %1740 = vmatmul.mubr.f32.gmra.mxu0 %v1670
    %v1741 = vpop.f32.mrf.mxu0
    %v1742 = vadd.f32 0.0, %v1741
    %v1743 = vpop.f32.mrf.mxu0
    %1744 = vmatprep.mubr.f32.mxu0 0.0
    %1745 = vmatmul.mubr.f32.gmra.mxu0 %v1673
    %v1746 = vpop.f32.mrf.mxu0
    %v1747 = vadd.f32 0.0, %v1746
    %v1748 = vpop.f32.mrf.mxu0
    %1749 = vdwg.mxu0
    %v1751 = vsel %vm1418, %v1505, 0
    %v1754 = vsel %vm1418, %v1506, 0
    %1756 = vmatprep.subr.mxu0 0.0
    %1757 = vmatpush1.msra.mxu0 0.0
    %1758 = vmatprep.subr.mxu0 0.0
    %1759 = vmatpush1.msra.mxu0 0.0
    %1760 = vmatprep.subr.mxu0 0.0
    %1761 = vmatpush1.msra.mxu0 0.0
    %1762 = vmatprep.subr.mxu0 0.0
    %1763 = vmatpush1.msra.mxu0 0.0
    %1764 = vmatprep.subr.mxu0 0.0
    %1765 = vmatpush1.msra.mxu0 0.0
    %1766 = vmatprep.subr.mxu0 0.0
    %1767 = vmatpush1.msra.mxu0 0.0
    %1768 = vmatprep.subr.mxu0 0.0
    %1769 = vmatpush1.msra.mxu0 0.0
    %1770 = vmatprep.subr.mxu0 0.0
    %1771 = vmatpush1.msra.mxu0 0.0
    %1772 = vmatprep.subr.mxu0 0.0
    %1773 = vmatpush1.msra.mxu0 0.0
    %1774 = vmatprep.subr.mxu0 0.0
    %1775 = vmatpush1.msra.mxu0 0.0
    %1776 = vmatprep.subr.mxu0 0.0
    %1777 = vmatpush1.msra.mxu0 0.0
    %1778 = vmatprep.subr.mxu0 0.0
    %1779 = vmatpush1.msra.mxu0 0.0
    %1780 = vmatprep.subr.mxu0 0.0
    %1781 = vmatpush1.msra.mxu0 0.0
    %1782 = vmatprep.subr.mxu0 0.0
    %1783 = vmatpush1.msra.mxu0 0.0
    %1784 = vmatprep.subr.mxu0 0.0
    %1785 = vmatpush1.msra.mxu0 %v1068
    %1786 = vmatprep.subr.mxu0 0.0
    %1787 = vmatpush1.msra.mxu0 %v1000
    %1788 = vmatprep.subr.mxu0 0.0
    %1789 = vmatpush2.msra.mxu0 0.0
    %1790 = vmatprep.subr.mxu0 0.0
    %1791 = vmatpush2.msra.mxu0 0.0
    %1792 = vmatprep.subr.mxu0 0.0
    %1793 = vmatpush2.msra.mxu0 0.0
    %1794 = vmatprep.subr.mxu0 0.0
    %1795 = vmatpush2.msra.mxu0 0.0
    %1796 = vmatprep.subr.mxu0 0.0
    %1797 = vmatpush2.msra.mxu0 0.0
    %1798 = vmatprep.subr.mxu0 0.0
    %1799 = vmatpush2.msra.mxu0 0.0
    %1800 = vmatprep.subr.mxu0 0.0
    %1801 = vmatpush2.msra.mxu0 0.0
    %1802 = vmatprep.subr.mxu0 0.0
    %1803 = vmatpush2.msra.mxu0 0.0
    %1804 = vmatprep.subr.mxu0 0.0
    %1805 = vmatpush2.msra.mxu0 0.0
    %1806 = vmatprep.subr.mxu0 0.0
    %1807 = vmatpush2.msra.mxu0 0.0
    %1808 = vmatprep.subr.mxu0 0.0
    %1809 = vmatpush2.msra.mxu0 0.0
    %1810 = vmatprep.subr.mxu0 0.0
    %1811 = vmatpush2.msra.mxu0 0.0
    %1812 = vmatprep.subr.mxu0 0.0
    %1813 = vmatpush2.msra.mxu0 0.0
    %1814 = vmatprep.subr.mxu0 0.0
    %1815 = vmatpush2.msra.mxu0 0.0
    %1816 = vmatprep.subr.mxu0 0.0
    %1817 = vmatpush2.msra.mxu0 0.0
    %1818 = vmatprep.subr.mxu0 0.0
    %1819 = vmatpush2.msra.mxu0 0.0
    %1820 = vmatprep.mubr.f32.mxu0 0.0
    %1821 = vmatmul.mubr.f32.gmra.mxu0 %v1751
    %v1822 = vpop.f32.mrf.mxu0
    %v1823 = vadd.f32 0.0, %v1822
    %v1824 = vpop.f32.mrf.mxu0
    %1825 = vmatprep.mubr.f32.mxu0 0.0
    %1826 = vmatmul.mubr.f32.gmra.mxu0 %v1754
    %v1827 = vpop.f32.mrf.mxu0
    %v1828 = vadd.f32 0.0, %v1827
    %v1829 = vpop.f32.mrf.mxu0
    %1830 = vdwg.mxu0
    %v1831 = vcombine.low %v1580, %v1742
    %v1832 = vcombine.high %v1580, %v1742
    %v1834 = vunpack.c.l.s4 1983009808
    %v1835 = vunpack.c.0.s8 %v1834
    %v1836 = vlaneseq
    %v1837 = vshrl.u32 %v1836, 7
    %v1838 = vsub.s32 %v1835, %v1837
    %v1839 = vrot.slane %v1831, %v1838
    %v1841 = vunpack.c.l.s4 1983009808
    %v1842 = vunpack.c.0.s8 %v1841
    %v1843 = vlaneseq
    %v1844 = vshrl.u32 %v1843, 7
    %v1845 = vsub.s32 %v1842, %v1844
    %v1846 = vrot.slane %v1832, %v1845
    %v1847 = vcombine.low %v1661, %v1823
    %v1848 = vcombine.high %v1661, %v1823
    %v1850 = vunpack.c.l.s4 1983009808
    %v1851 = vunpack.c.0.s8 %v1850
    %v1852 = vlaneseq
    %v1853 = vshrl.u32 %v1852, 7
    %v1854 = vsub.s32 %v1851, %v1853
    %v1855 = vrot.slane %v1847, %v1854
    %v1857 = vunpack.c.l.s4 1983009808
    %v1858 = vunpack.c.0.s8 %v1857
    %v1859 = vlaneseq
    %v1860 = vshrl.u32 %v1859, 7
    %v1861 = vsub.s32 %v1858, %v1860
    %v1862 = vrot.slane %v1848, %v1861
    %v1863 = vcombine.low %v1839, %v1855
    %v1864 = vcombine.high %v1839, %v1855
    %v1866 = vunpack.c.l.s4 1934713408
    %v1867 = vunpack.c.0.s8 %v1866
    %v1868 = vlaneseq
    %v1869 = vshrl.u32 %v1868, 7
    %v1870 = vsub.s32 %v1867, %v1869
    %v1871 = vrot.slane %v1863, %v1870
    %v1873 = vunpack.c.l.s4 1934713408
    %v1874 = vunpack.c.0.s8 %v1873
    %v1875 = vlaneseq
    %v1876 = vshrl.u32 %v1875, 7
    %v1877 = vsub.s32 %v1874, %v1876
    %v1878 = vrot.slane %v1864, %v1877
    %v1879 = vcombine.low %v1846, %v1862
    %v1880 = vcombine.high %v1846, %v1862
    %v1882 = vunpack.c.l.s4 1934713408
    %v1883 = vunpack.c.0.s8 %v1882
    %v1884 = vlaneseq
    %v1885 = vshrl.u32 %v1884, 7
    %v1886 = vsub.s32 %v1883, %v1885
    %v1887 = vrot.slane %v1879, %v1886
    %v1889 = vunpack.c.l.s4 1934713408
    %v1890 = vunpack.c.0.s8 %v1889
    %v1891 = vlaneseq
    %v1892 = vshrl.u32 %v1891, 7
    %v1893 = vsub.s32 %v1890, %v1892
    %v1894 = vrot.slane %v1880, %v1893
    %v1895 = vcombine.high %v1871, 0.0
    %v1896 = vcombine.high %v1878, 0.0
    %v1897 = vcombine.high %v1887, 0.0
    %v1898 = vcombine.high %v1894, 0.0
    %v1899 = vcombine.low %v1585, %v1747
    %v1900 = vcombine.high %v1585, %v1747
    %v1902 = vunpack.c.l.s4 1983009808
    %v1903 = vunpack.c.0.s8 %v1902
    %v1904 = vlaneseq
    %v1905 = vshrl.u32 %v1904, 7
    %v1906 = vsub.s32 %v1903, %v1905
    %v1907 = vrot.slane %v1899, %v1906
    %v1909 = vunpack.c.l.s4 1983009808
    %v1910 = vunpack.c.0.s8 %v1909
    %v1911 = vlaneseq
    %v1912 = vshrl.u32 %v1911, 7
    %v1913 = vsub.s32 %v1910, %v1912
    %v1914 = vrot.slane %v1900, %v1913
    %v1915 = vcombine.low %v1666, %v1828
    %v1916 = vcombine.high %v1666, %v1828
    %v1918 = vunpack.c.l.s4 1983009808
    %v1919 = vunpack.c.0.s8 %v1918
    %v1920 = vlaneseq
    %v1921 = vshrl.u32 %v1920, 7
    %v1922 = vsub.s32 %v1919, %v1921
    %v1923 = vrot.slane %v1915, %v1922
    %v1925 = vunpack.c.l.s4 1983009808
    %v1926 = vunpack.c.0.s8 %v1925
    %v1927 = vlaneseq
    %v1928 = vshrl.u32 %v1927, 7
    %v1929 = vsub.s32 %v1926, %v1928
    %v1930 = vrot.slane %v1916, %v1929
    %v1931 = vcombine.low %v1907, %v1923
    %v1932 = vcombine.high %v1907, %v1923
    %v1934 = vunpack.c.l.s4 1934713408
    %v1935 = vunpack.c.0.s8 %v1934
    %v1936 = vlaneseq
    %v1937 = vshrl.u32 %v1936, 7
    %v1938 = vsub.s32 %v1935, %v1937
    %v1939 = vrot.slane %v1931, %v1938
    %v1941 = vunpack.c.l.s4 1934713408
    %v1942 = vunpack.c.0.s8 %v1941
    %v1943 = vlaneseq
    %v1944 = vshrl.u32 %v1943, 7
    %v1945 = vsub.s32 %v1942, %v1944
    %v1946 = vrot.slane %v1932, %v1945
    %v1947 = vcombine.low %v1914, %v1930
    %v1948 = vcombine.high %v1914, %v1930
    %v1950 = vunpack.c.l.s4 1934713408
    %v1951 = vunpack.c.0.s8 %v1950
    %v1952 = vlaneseq
    %v1953 = vshrl.u32 %v1952, 7
    %v1954 = vsub.s32 %v1951, %v1953
    %v1955 = vrot.slane %v1947, %v1954
    %v1957 = vunpack.c.l.s4 1934713408
    %v1958 = vunpack.c.0.s8 %v1957
    %v1959 = vlaneseq
    %v1960 = vshrl.u32 %v1959, 7
    %v1961 = vsub.s32 %v1958, %v1960
    %v1962 = vrot.slane %v1948, %v1961
    %v1963 = vcombine.high %v1939, 0.0
    %v1964 = vcombine.high %v1946, 0.0
    %v1965 = vcombine.high %v1955, 0.0
    %v1966 = vcombine.high %v1962, 0.0
    %v1967 = vcombine.low %v1871, %v1878
    %v1969 = vunpack.c.l.s4 1983009808
    %v1970 = vunpack.c.0.s8 %v1969
    %v1971 = vlaneseq
    %v1972 = vshrl.u32 %v1971, 7
    %v1973 = vsub.s32 %v1970, %v1972
    %v1974 = vrot.slane %v1967, %v1973
    %v1975 = vcombine.low %v1895, %v1896
    %v1977 = vunpack.c.l.s4 1983009808
    %v1978 = vunpack.c.0.s8 %v1977
    %v1979 = vlaneseq
    %v1980 = vshrl.u32 %v1979, 7
    %v1981 = vsub.s32 %v1978, %v1980
    %v1982 = vrot.slane %v1975, %v1981
    %v1983 = vcombine.low %v1887, %v1894
    %v1985 = vunpack.c.l.s4 1983009808
    %v1986 = vunpack.c.0.s8 %v1985
    %v1987 = vlaneseq
    %v1988 = vshrl.u32 %v1987, 7
    %v1989 = vsub.s32 %v1986, %v1988
    %v1990 = vrot.slane %v1983, %v1989
    %v1991 = vcombine.low %v1897, %v1898
    %v1993 = vunpack.c.l.s4 1983009808
    %v1994 = vunpack.c.0.s8 %v1993
    %v1995 = vlaneseq
    %v1996 = vshrl.u32 %v1995, 7
    %v1997 = vsub.s32 %v1994, %v1996
    %v1998 = vrot.slane %v1991, %v1997
    %v1999 = vcombine.low %v1974, %v1982
    %v2000 = vcombine.high %v1974, %v1982
    %v2002 = vunpack.c.l.s4 1934713408
    %v2003 = vunpack.c.0.s8 %v2002
    %v2004 = vlaneseq
    %v2005 = vshrl.u32 %v2004, 7
    %v2006 = vsub.s32 %v2003, %v2005
    %v2007 = vrot.slane %v1999, %v2006
    %v2009 = vunpack.c.l.s4 1934713408
    %v2010 = vunpack.c.0.s8 %v2009
    %v2011 = vlaneseq
    %v2012 = vshrl.u32 %v2011, 7
    %v2013 = vsub.s32 %v2010, %v2012
    %v2014 = vrot.slane %v2000, %v2013
    %v2015 = vcombine.low %v1990, %v1998
    %v2016 = vcombine.high %v1990, %v1998
    %v2018 = vunpack.c.l.s4 1934713408
    %v2019 = vunpack.c.0.s8 %v2018
    %v2020 = vlaneseq
    %v2021 = vshrl.u32 %v2020, 7
    %v2022 = vsub.s32 %v2019, %v2021
    %v2023 = vrot.slane %v2015, %v2022
    %v2025 = vunpack.c.l.s4 1934713408
    %v2026 = vunpack.c.0.s8 %v2025
    %v2027 = vlaneseq
    %v2028 = vshrl.u32 %v2027, 7
    %v2029 = vsub.s32 %v2026, %v2028
    %v2030 = vrot.slane %v2016, %v2029
    %v2031 = vcombine.low %v2007, %v2023
    %v2032 = vcombine.high %v2007, %v2023
    %v2033 = vcombine.low %v2014, %v2030
    %v2034 = vcombine.high %v2014, %v2030
    %v2035 = vcombine.low %v1939, %v1946
    %v2037 = vunpack.c.l.s4 1983009808
    %v2038 = vunpack.c.0.s8 %v2037
    %v2039 = vlaneseq
    %v2040 = vshrl.u32 %v2039, 7
    %v2041 = vsub.s32 %v2038, %v2040
    %v2042 = vrot.slane %v2035, %v2041
    %v2043 = vcombine.low %v1963, %v1964
    %v2045 = vunpack.c.l.s4 1983009808
    %v2046 = vunpack.c.0.s8 %v2045
    %v2047 = vlaneseq
    %v2048 = vshrl.u32 %v2047, 7
    %v2049 = vsub.s32 %v2046, %v2048
    %v2050 = vrot.slane %v2043, %v2049
    %v2051 = vcombine.low %v1955, %v1962
    %v2053 = vunpack.c.l.s4 1983009808
    %v2054 = vunpack.c.0.s8 %v2053
    %v2055 = vlaneseq
    %v2056 = vshrl.u32 %v2055, 7
    %v2057 = vsub.s32 %v2054, %v2056
    %v2058 = vrot.slane %v2051, %v2057
    %v2059 = vcombine.low %v1965, %v1966
    %v2061 = vunpack.c.l.s4 1983009808
    %v2062 = vunpack.c.0.s8 %v2061
    %v2063 = vlaneseq
    %v2064 = vshrl.u32 %v2063, 7
    %v2065 = vsub.s32 %v2062, %v2064
    %v2066 = vrot.slane %v2059, %v2065
    %v2067 = vcombine.low %v2042, %v2050
    %v2068 = vcombine.high %v2042, %v2050
    %v2070 = vunpack.c.l.s4 1934713408
    %v2071 = vunpack.c.0.s8 %v2070
    %v2072 = vlaneseq
    %v2073 = vshrl.u32 %v2072, 7
    %v2074 = vsub.s32 %v2071, %v2073
    %v2075 = vrot.slane %v2067, %v2074
    %v2077 = vunpack.c.l.s4 1934713408
    %v2078 = vunpack.c.0.s8 %v2077
    %v2079 = vlaneseq
    %v2080 = vshrl.u32 %v2079, 7
    %v2081 = vsub.s32 %v2078, %v2080
    %v2082 = vrot.slane %v2068, %v2081
    %v2083 = vcombine.low %v2058, %v2066
    %v2084 = vcombine.high %v2058, %v2066
    %v2086 = vunpack.c.l.s4 1934713408
    %v2087 = vunpack.c.0.s8 %v2086
    %v2088 = vlaneseq
    %v2089 = vshrl.u32 %v2088, 7
    %v2090 = vsub.s32 %v2087, %v2089
    %v2091 = vrot.slane %v2083, %v2090
    %v2093 = vunpack.c.l.s4 1934713408
    %v2094 = vunpack.c.0.s8 %v2093
    %v2095 = vlaneseq
    %v2096 = vshrl.u32 %v2095, 7
    %v2097 = vsub.s32 %v2094, %v2096
    %v2098 = vrot.slane %v2084, %v2097
    %v2099 = vcombine.low %v2075, %v2091
    %v2100 = vcombine.high %v2075, %v2091
    %v2101 = vcombine.low %v2082, %v2098
    %v2102 = vcombine.high %v2082, %v2098
    %2105 = vrot.lane.b32.xlu0 %v2032, 8
    %v2106 = vpop.permute.xlu0 %2105
    %2107 = vrot.lane.b32.xlu0 %v2100, 8
    %v2108 = vpop.permute.xlu0 %2107
    %2113 = vrot.lane.b32.xlu0 %v2033, 16
    %v2114 = vpop.permute.xlu0 %2113
    %2115 = vrot.lane.b32.xlu0 %v2101, 16
    %v2116 = vpop.permute.xlu0 %2115
    %2121 = vrot.lane.b32.xlu0 %v2034, 24
    %v2122 = vpop.permute.xlu0 %2121
    %2123 = vrot.lane.b32.xlu0 %v2102, 24
    %v2124 = vpop.permute.xlu0 %2123
    %v2127 = vsel %vm1069, %v2031, %v2106
    %v2128 = vsel %vm1069, %v2099, %v2108
    %v2129 = vsel %vm1418, %v2127, %v2114
    %v2130 = vsel %vm1418, %v2128, %v2116
    %vm2131 = vcmask 195584
    %v2132 = vsel %vm2131, %v2129, %v2122
    %v2133 = vsel %vm2131, %v2130, %v2124
    %v2134 = vld [vmem:[%s2] sm:$0xff]
    %v2135 = vld [vmem:[%s2 + $0x10] sm:$0xff]
    %v2136 = vld [vmem:[%s2 + $0x20] sm:$0xff]
    %v2137 = vld [vmem:[%s2 + $0x30] sm:$0xff]
    %v2138 = vld [vmem:[%s4] sm:$0x1]
    %v2140 = vlaneseq
    %v2141 = vshrl.u32 %v2140, 7
    %v2142 = vsub.s32 0, %v2141
    %v2143 = vrot.slane %v2138, %v2142
    %2148 = vrot.lane.b32.xlu0 %v2134, 32
    %v2149 = vpop.permute.xlu0 %2148
    %2150 = vrot.lane.b32.xlu0 %v2135, 32
    %v2151 = vpop.permute.xlu0 %2150
    %2152 = vrot.lane.b32.xlu0 %v2136, 32
    %v2153 = vpop.permute.xlu0 %2152
    %2154 = vrot.lane.b32.xlu0 %v2137, 32
    %v2155 = vpop.permute.xlu0 %2154
    %2160 = vrot.lane.b32.xlu0 %v2143, 32
    %v2161 = vpop.permute.xlu0 %2160
    %v2164 = vsel %vm52, %v2132, 0
    %v2167 = vsel %vm52, %v2133, 0
    %2169 = vmatprep.subr.mxu0 0.0
    %2170 = vmatpush1.msra.mxu0 0.0
    %2171 = vmatprep.subr.mxu0 0.0
    %2172 = vmatpush1.msra.mxu0 0.0
    %2173 = vmatprep.subr.mxu0 0.0
    %2174 = vmatpush1.msra.mxu0 0.0
    %2175 = vmatprep.subr.mxu0 0.0
    %2176 = vmatpush1.msra.mxu0 0.0
    %2177 = vmatprep.subr.mxu0 0.0
    %2178 = vmatpush1.msra.mxu0 0.0
    %2179 = vmatprep.subr.mxu0 0.0
    %2180 = vmatpush1.msra.mxu0 0.0
    %2181 = vmatprep.subr.mxu0 0.0
    %2182 = vmatpush1.msra.mxu0 0.0
    %2183 = vmatprep.subr.mxu0 0.0
    %2184 = vmatpush1.msra.mxu0 0.0
    %2185 = vmatprep.subr.mxu0 0.0
    %2186 = vmatpush1.msra.mxu0 0.0
    %2187 = vmatprep.subr.mxu0 0.0
    %2188 = vmatpush1.msra.mxu0 0.0
    %2189 = vmatprep.subr.mxu0 0.0
    %2190 = vmatpush1.msra.mxu0 0.0
    %2191 = vmatprep.subr.mxu0 0.0
    %2192 = vmatpush1.msra.mxu0 0.0
    %2193 = vmatprep.subr.mxu0 0.0
    %2194 = vmatpush1.msra.mxu0 %v2155
    %2195 = vmatprep.subr.mxu0 0.0
    %2196 = vmatpush1.msra.mxu0 %v2153
    %2197 = vmatprep.subr.mxu0 0.0
    %2198 = vmatpush1.msra.mxu0 %v2151
    %2199 = vmatprep.subr.mxu0 0.0
    %2200 = vmatpush1.msra.mxu0 %v2149
    %2201 = vmatprep.subr.mxu0 0.0
    %2202 = vmatpush2.msra.mxu0 0.0
    %2203 = vmatprep.subr.mxu0 0.0
    %2204 = vmatpush2.msra.mxu0 0.0
    %2205 = vmatprep.subr.mxu0 0.0
    %2206 = vmatpush2.msra.mxu0 0.0
    %2207 = vmatprep.subr.mxu0 0.0
    %2208 = vmatpush2.msra.mxu0 0.0
    %2209 = vmatprep.subr.mxu0 0.0
    %2210 = vmatpush2.msra.mxu0 0.0
    %2211 = vmatprep.subr.mxu0 0.0
    %2212 = vmatpush2.msra.mxu0 0.0
    %2213 = vmatprep.subr.mxu0 0.0
    %2214 = vmatpush2.msra.mxu0 0.0
    %2215 = vmatprep.subr.mxu0 0.0
    %2216 = vmatpush2.msra.mxu0 0.0
    %2217 = vmatprep.subr.mxu0 0.0
    %2218 = vmatpush2.msra.mxu0 0.0
    %2219 = vmatprep.subr.mxu0 0.0
    %2220 = vmatpush2.msra.mxu0 0.0
    %2221 = vmatprep.subr.mxu0 0.0
    %2222 = vmatpush2.msra.mxu0 0.0
    %2223 = vmatprep.subr.mxu0 0.0
    %2224 = vmatpush2.msra.mxu0 0.0
    %2225 = vmatprep.subr.mxu0 0.0
    %2226 = vmatpush2.msra.mxu0 0.0
    %2227 = vmatprep.subr.mxu0 0.0
    %2228 = vmatpush2.msra.mxu0 0.0
    %2229 = vmatprep.subr.mxu0 0.0
    %2230 = vmatpush2.msra.mxu0 0.0
    %2231 = vmatprep.subr.mxu0 0.0
    %2232 = vmatpush2.msra.mxu0 0.0
    %2233 = vmatprep.mubr.f32.mxu0 0.0
    %2234 = vmatmul.mubr.f32.gmra.mxu0 %v2164
    %v2235 = vpop.f32.mrf.mxu0
    %v2236 = vadd.f32 %v2161, %v2235
    %v2237 = vpop.f32.mrf.mxu0
    %2238 = vmatprep.mubr.f32.mxu0 0.0
    %2239 = vmatmul.mubr.f32.gmra.mxu0 %v2167
    %v2240 = vpop.f32.mrf.mxu0
    %v2241 = vadd.f32 %v2161, %v2240
    %v2242 = vpop.f32.mrf.mxu0
    %2243 = vdwg.mxu0
    %v2244 = vadd.f32 %v2236, %v91
    %v2245 = vadd.f32 %v2241, %v92
    %v2246 = vld [vmem:[%s4 + $0x1] sm:$0x1]
    %v2247 = vsel %vm52, %v2244, 0.0
    %2248 = vadd.xlane.f32.xlu0 %v2247
    %v2249 = vpop.xlane.xlu0 %2248
    %v2250 = vsel %vm52, %v2245, 0.0
    %2251 = vadd.xlane.f32.xlu0 %v2250
    %v2252 = vpop.xlane.xlu0 %2251
    %v2253 = vmul.f32 %v2249, %v59
    %v2254 = vmul.f32 %v2252, %v59
    %v2255 = vsub.f32 %v2244, %v2253
    %v2256 = vsub.f32 %v2245, %v2254
    %v2257 = vmul.f32 %v2255, %v2255
    %v2258 = vmul.f32 %v2256, %v2256
    %v2259 = vsel %vm52, %v2257, 0.0
    %2260 = vadd.xlane.f32.xlu0 %v2259
    %v2261 = vpop.xlane.xlu0 %2260
    %v2262 = vsel %vm52, %v2258, 0.0
    %2263 = vadd.xlane.f32.xlu0 %v2262
    %v2264 = vpop.xlane.xlu0 %2263
    %v2265 = vmul.f32 %v2261, %v59
    %v2266 = vmul.f32 %v2264, %v59
    %v2267 = vadd.f32 %v2265, 1e-12
    %v2268 = vadd.f32 %v2266, 1e-12
    %v2269 = vrsqrt.pop %v2267
    %v2270 = vrsqrt.pop %v2268
    %v2271 = vmul.f32 %v2255, %v2269
    %v2272 = vmul.f32 %v2256, %v2270
    %v2274 = vlaneseq
    %v2275 = vshrl.u32 %v2274, 7
    %v2276 = vsub.s32 0, %v2275
    %v2277 = vrot.slane %v2246, %v2276
    %v2279 = vmul.f32 %v2271, %v2277
    %v2280 = vmul.f32 %v2272, %v2277
    %2281 = vrot.lane.b32.xlu0 %v2277, 96
    %v2282 = vpop.permute.xlu0 %2281
    %v2284 = vadd.f32 %v2279, %v2282
    %v2285 = vadd.f32 %v2280, %v2282
    %v2286 = vld [vmem:[%s2 + $0x8] sm:$0xff]
    %v2287 = vld [vmem:[%s2 + $0x18] sm:$0xff]
    %v2288 = vld [vmem:[%s2 + $0x28] sm:$0xff]
    %v2289 = vld [vmem:[%s2 + $0x38] sm:$0xff]
    %2290 = vrot.lane.b32.xlu0 %v2277, 64
    %v2291 = vpop.permute.xlu0 %2290
    %v2294 = vsel %vm52, %v2284, 0
    %v2297 = vsel %vm52, %v2285, 0
    %2299 = vmatprep.subr.mxu0 0.0
    %2300 = vmatpush1.msra.mxu0 0.0
    %2301 = vmatprep.subr.mxu0 0.0
    %2302 = vmatpush1.msra.mxu0 0.0
    %2303 = vmatprep.subr.mxu0 0.0
    %2304 = vmatpush1.msra.mxu0 0.0
    %2305 = vmatprep.subr.mxu0 0.0
    %2306 = vmatpush1.msra.mxu0 0.0
    %2307 = vmatprep.subr.mxu0 0.0
    %2308 = vmatpush1.msra.mxu0 0.0
    %2309 = vmatprep.subr.mxu0 0.0
    %2310 = vmatpush1.msra.mxu0 0.0
    %2311 = vmatprep.subr.mxu0 0.0
    %2312 = vmatpush1.msra.mxu0 0.0
    %2313 = vmatprep.subr.mxu0 0.0
    %2314 = vmatpush1.msra.mxu0 0.0
    %2315 = vmatprep.subr.mxu0 0.0
    %2316 = vmatpush1.msra.mxu0 0.0
    %2317 = vmatprep.subr.mxu0 0.0
    %2318 = vmatpush1.msra.mxu0 0.0
    %2319 = vmatprep.subr.mxu0 0.0
    %2320 = vmatpush1.msra.mxu0 0.0
    %2321 = vmatprep.subr.mxu0 0.0
    %2322 = vmatpush1.msra.mxu0 0.0
    %2323 = vmatprep.subr.mxu0 0.0
    %2324 = vmatpush1.msra.mxu0 %v2289
    %2325 = vmatprep.subr.mxu0 0.0
    %2326 = vmatpush1.msra.mxu0 %v2288
    %2327 = vmatprep.subr.mxu0 0.0
    %2328 = vmatpush1.msra.mxu0 %v2287
    %2329 = vmatprep.subr.mxu0 0.0
    %2330 = vmatpush1.msra.mxu0 %v2286
    %2331 = vmatprep.subr.mxu0 0.0
    %2332 = vmatpush2.msra.mxu0 0.0
    %2333 = vmatprep.subr.mxu0 0.0
    %2334 = vmatpush2.msra.mxu0 0.0
    %2335 = vmatprep.subr.mxu0 0.0
    %2336 = vmatpush2.msra.mxu0 0.0
    %2337 = vmatprep.subr.mxu0 0.0
    %2338 = vmatpush2.msra.mxu0 0.0
    %2339 = vmatprep.subr.mxu0 0.0
    %2340 = vmatpush2.msra.mxu0 0.0
    %2341 = vmatprep.subr.mxu0 0.0
    %2342 = vmatpush2.msra.mxu0 0.0
    %2343 = vmatprep.subr.mxu0 0.0
    %2344 = vmatpush2.msra.mxu0 0.0
    %2345 = vmatprep.subr.mxu0 0.0
    %2346 = vmatpush2.msra.mxu0 0.0
    %2347 = vmatprep.subr.mxu0 0.0
    %2348 = vmatpush2.msra.mxu0 0.0
    %2349 = vmatprep.subr.mxu0 0.0
    %2350 = vmatpush2.msra.mxu0 0.0
    %2351 = vmatprep.subr.mxu0 0.0
    %2352 = vmatpush2.msra.mxu0 0.0
    %2353 = vmatprep.subr.mxu0 0.0
    %2354 = vmatpush2.msra.mxu0 0.0
    %2355 = vmatprep.subr.mxu0 0.0
    %2356 = vmatpush2.msra.mxu0 0.0
    %2357 = vmatprep.subr.mxu0 0.0
    %2358 = vmatpush2.msra.mxu0 0.0
    %2359 = vmatprep.subr.mxu0 0.0
    %2360 = vmatpush2.msra.mxu0 0.0
    %2361 = vmatprep.subr.mxu0 0.0
    %2362 = vmatpush2.msra.mxu0 0.0
    %2363 = vmatprep.mubr.f32.mxu0 0.0
    %2364 = vmatmul.mubr.f32.gmra.mxu0 %v2294
    %v2365 = vpop.f32.mrf.mxu0
    %v2366 = vadd.f32 %v2291, %v2365
    %v2367 = vpop.f32.mrf.mxu0
    %2368 = vmatprep.mubr.f32.mxu0 0.0
    %2369 = vmatmul.mubr.f32.gmra.mxu0 %v2297
    %v2370 = vpop.f32.mrf.mxu0
    %v2371 = vadd.f32 %v2291, %v2370
    %v2372 = vpop.f32.mrf.mxu0
    %2373 = vdwg.mxu0
    %v2374 = vmul.f32 %v2366, 0.5
    %v2375 = vmul.f32 %v2371, 0.5
    %v2376 = vmul.f32 %v2366, 0.044715
    %v2377 = vmul.f32 %v2371, 0.044715
    %v2378 = vmul.f32 %v2376, %v2366
    %v2379 = vmul.f32 %v2377, %v2371
    %v2380 = vmul.f32 %v2378, %v2366
    %v2381 = vmul.f32 %v2379, %v2371
    %v2382 = vadd.f32 %v2366, %v2380
    %v2383 = vadd.f32 %v2371, %v2381
    %v2384 = vmul.f32 %v2382, 0.7978846
    %v2385 = vmul.f32 %v2383, 0.7978846
    %v2386 = vtanh.pop %v2384
    %v2387 = vtanh.pop %v2385
    %v2388 = vadd.f32 %v2386, 1.0
    %v2389 = vadd.f32 %v2387, 1.0
    %v2390 = vmul.f32 %v2374, %v2388
    %v2391 = vmul.f32 %v2375, %v2389
    %v2392 = vld [vmem:[%s3] sm:$0xff]
    %v2393 = vld [vmem:[%s3 + $0x8] sm:$0xff]
    %v2394 = vld [vmem:[%s3 + $0x10] sm:$0xff]
    %v2395 = vld [vmem:[%s3 + $0x18] sm:$0xff]
    %v2396 = vld [vmem:[%s3 + $0x20] sm:$0xff]
    %v2397 = vld [vmem:[%s3 + $0x28] sm:$0xff]
    %v2398 = vld [vmem:[%s3 + $0x30] sm:$0xff]
    %v2399 = vld [vmem:[%s3 + $0x38] sm:$0xff]
    %v2400 = vld [vmem:[%s4 + $0x2] sm:$0x1]
    %v2402 = vlaneseq
    %v2403 = vshrl.u32 %v2402, 7
    %v2404 = vsub.s32 0, %v2403
    %v2405 = vrot.slane %v2400, %v2404
    %vm2407 = vcmask 523264
    %v2409 = vsel %vm2407, %v2390, 0
    %v2412 = vsel %vm2407, %v2391, 0
    %2414 = vmatprep.subr.mxu0 0.0
    %2415 = vmatpush1.msra.mxu0 0.0
    %2416 = vmatprep.subr.mxu0 0.0
    %2417 = vmatpush1.msra.mxu0 0.0
    %2418 = vmatprep.subr.mxu0 0.0
    %2419 = vmatpush1.msra.mxu0 0.0
    %2420 = vmatprep.subr.mxu0 0.0
    %2421 = vmatpush1.msra.mxu0 0.0
    %2422 = vmatprep.subr.mxu0 0.0
    %2423 = vmatpush1.msra.mxu0 0.0
    %2424 = vmatprep.subr.mxu0 0.0
    %2425 = vmatpush1.msra.mxu0 0.0
    %2426 = vmatprep.subr.mxu0 0.0
    %2427 = vmatpush1.msra.mxu0 0.0
    %2428 = vmatprep.subr.mxu0 0.0
    %2429 = vmatpush1.msra.mxu0 0.0
    %2430 = vmatprep.subr.mxu0 0.0
    %2431 = vmatpush1.msra.mxu0 %v2399
    %2432 = vmatprep.subr.mxu0 0.0
    %2433 = vmatpush1.msra.mxu0 %v2398
    %2434 = vmatprep.subr.mxu0 0.0
    %2435 = vmatpush1.msra.mxu0 %v2397
    %2436 = vmatprep.subr.mxu0 0.0
    %2437 = vmatpush1.msra.mxu0 %v2396
    %2438 = vmatprep.subr.mxu0 0.0
    %2439 = vmatpush1.msra.mxu0 %v2395
    %2440 = vmatprep.subr.mxu0 0.0
    %2441 = vmatpush1.msra.mxu0 %v2394
    %2442 = vmatprep.subr.mxu0 0.0
    %2443 = vmatpush1.msra.mxu0 %v2393
    %2444 = vmatprep.subr.mxu0 0.0
    %2445 = vmatpush1.msra.mxu0 %v2392
    %2446 = vmatprep.subr.mxu0 0.0
    %2447 = vmatpush2.msra.mxu0 0.0
    %2448 = vmatprep.subr.mxu0 0.0
    %2449 = vmatpush2.msra.mxu0 0.0
    %2450 = vmatprep.subr.mxu0 0.0
    %2451 = vmatpush2.msra.mxu0 0.0
    %2452 = vmatprep.subr.mxu0 0.0
    %2453 = vmatpush2.msra.mxu0 0.0
    %2454 = vmatprep.subr.mxu0 0.0
    %2455 = vmatpush2.msra.mxu0 0.0
    %2456 = vmatprep.subr.mxu0 0.0
    %2457 = vmatpush2.msra.mxu0 0.0
    %2458 = vmatprep.subr.mxu0 0.0
    %2459 = vmatpush2.msra.mxu0 0.0
    %2460 = vmatprep.subr.mxu0 0.0
    %2461 = vmatpush2.msra.mxu0 0.0
    %2462 = vmatprep.subr.mxu0 0.0
    %2463 = vmatpush2.msra.mxu0 0.0
    %2464 = vmatprep.subr.mxu0 0.0
    %2465 = vmatpush2.msra.mxu0 0.0
    %2466 = vmatprep.subr.mxu0 0.0
    %2467 = vmatpush2.msra.mxu0 0.0
    %2468 = vmatprep.subr.mxu0 0.0
    %2469 = vmatpush2.msra.mxu0 0.0
    %2470 = vmatprep.subr.mxu0 0.0
    %2471 = vmatpush2.msra.mxu0 0.0
    %2472 = vmatprep.subr.mxu0 0.0
    %2473 = vmatpush2.msra.mxu0 0.0
    %2474 = vmatprep.subr.mxu0 0.0
    %2475 = vmatpush2.msra.mxu0 0.0
    %2476 = vmatprep.subr.mxu0 0.0
    %2477 = vmatpush2.msra.mxu0 0.0
    %2478 = vmatprep.mubr.f32.mxu0 0.0
    %2479 = vmatmul.mubr.f32.gmra.mxu0 %v2409
    %v2480 = vpop.f32.mrf.mxu0
    %v2481 = vadd.f32 %v2405, %v2480
    %v2482 = vpop.f32.mrf.mxu0
    %2483 = vmatprep.mubr.f32.mxu0 0.0
    %2484 = vmatmul.mubr.f32.gmra.mxu0 %v2412
    %v2485 = vpop.f32.mrf.mxu0
    %v2486 = vadd.f32 %v2405, %v2485
    %v2487 = vpop.f32.mrf.mxu0
    %2488 = vdwg.mxu0
    %v2489 = vadd.f32 %v2481, %v2284
    %v2490 = vadd.f32 %v2486, %v2285
    %v2491 = vsel %vm52, %v2489, 0.0
    %2492 = vadd.xlane.f32.xlu0 %v2491
    %v2493 = vpop.xlane.xlu0 %2492
    %v2494 = vsel %vm52, %v2490, 0.0
    %2495 = vadd.xlane.f32.xlu0 %v2494
    %v2496 = vpop.xlane.xlu0 %2495
    %v2497 = vmul.f32 %v2493, %v59
    %v2498 = vmul.f32 %v2496, %v59
    %v2499 = vsub.f32 %v2489, %v2497
    %v2500 = vsub.f32 %v2490, %v2498
    %v2501 = vmul.f32 %v2499, %v2499
    %v2502 = vmul.f32 %v2500, %v2500
    %v2503 = vsel %vm52, %v2501, 0.0
    %2504 = vadd.xlane.f32.xlu0 %v2503
    %v2505 = vpop.xlane.xlu0 %2504
    %v2506 = vsel %vm52, %v2502, 0.0
    %2507 = vadd.xlane.f32.xlu0 %v2506
    %v2508 = vpop.xlane.xlu0 %2507
    %v2509 = vmul.f32 %v2505, %v59
    %v2510 = vmul.f32 %v2508, %v59
    %v2511 = vadd.f32 %v2509, 1e-12
    %v2512 = vadd.f32 %v2510, 1e-12
    %v2513 = vrsqrt.pop %v2511
    %v2514 = vrsqrt.pop %v2512
    %v2515 = vmul.f32 %v2499, %v2513
    %v2516 = vmul.f32 %v2500, %v2514
    %2517 = vrot.lane.b32.xlu0 %v2405, 96
    %v2518 = vpop.permute.xlu0 %2517
    %v2520 = vmul.f32 %v2515, %v2518
    %v2521 = vmul.f32 %v2516, %v2518
    %2522 = vrot.lane.b32.xlu0 %v2405, 64
    %v2523 = vpop.permute.xlu0 %2522
    %v2525 = vadd.f32 %v2520, %v2523
    %v2526 = vadd.f32 %v2521, %v2523
    %s2527 = scalar_lea.vmem %s2, 64
    %v2528 = vld [vmem:[%s2527] sm:$0xff]
    %v2529 = vld [vmem:[%s2527 + $0x10] sm:$0xff]
    %v2530 = vld [vmem:[%s2527 + $0x20] sm:$0xff]
    %v2531 = vld [vmem:[%s2527 + $0x30] sm:$0xff]
    %s2532 = scalar_lea.vmem %s4, 3
    %v2533 = vld [vmem:[%s2532] sm:$0x1]
    %v2535 = vlaneseq
    %v2536 = vshrl.u32 %v2535, 7
    %v2537 = vsub.s32 0, %v2536
    %v2538 = vrot.slane %v2533, %v2537
    %v2541 = vsel %vm52, %v2525, 0
    %v2544 = vsel %vm52, %v2526, 0
    %2546 = vmatprep.subr.mxu0 0.0
    %2547 = vmatpush1.msra.mxu0 0.0
    %2548 = vmatprep.subr.mxu0 0.0
    %2549 = vmatpush1.msra.mxu0 0.0
    %2550 = vmatprep.subr.mxu0 0.0
    %2551 = vmatpush1.msra.mxu0 0.0
    %2552 = vmatprep.subr.mxu0 0.0
    %2553 = vmatpush1.msra.mxu0 0.0
    %2554 = vmatprep.subr.mxu0 0.0
    %2555 = vmatpush1.msra.mxu0 0.0
    %2556 = vmatprep.subr.mxu0 0.0
    %2557 = vmatpush1.msra.mxu0 0.0
    %2558 = vmatprep.subr.mxu0 0.0
    %2559 = vmatpush1.msra.mxu0 0.0
    %2560 = vmatprep.subr.mxu0 0.0
    %2561 = vmatpush1.msra.mxu0 0.0
    %2562 = vmatprep.subr.mxu0 0.0
    %2563 = vmatpush1.msra.mxu0 0.0
    %2564 = vmatprep.subr.mxu0 0.0
    %2565 = vmatpush1.msra.mxu0 0.0
    %2566 = vmatprep.subr.mxu0 0.0
    %2567 = vmatpush1.msra.mxu0 0.0
    %2568 = vmatprep.subr.mxu0 0.0
    %2569 = vmatpush1.msra.mxu0 0.0
    %2570 = vmatprep.subr.mxu0 0.0
    %2571 = vmatpush1.msra.mxu0 %v2531
    %2572 = vmatprep.subr.mxu0 0.0
    %2573 = vmatpush1.msra.mxu0 %v2530
    %2574 = vmatprep.subr.mxu0 0.0
    %2575 = vmatpush1.msra.mxu0 %v2529
    %2576 = vmatprep.subr.mxu0 0.0
    %2577 = vmatpush1.msra.mxu0 %v2528
    %2578 = vmatprep.subr.mxu0 0.0
    %2579 = vmatpush2.msra.mxu0 0.0
    %2580 = vmatprep.subr.mxu0 0.0
    %2581 = vmatpush2.msra.mxu0 0.0
    %2582 = vmatprep.subr.mxu0 0.0
    %2583 = vmatpush2.msra.mxu0 0.0
    %2584 = vmatprep.subr.mxu0 0.0
    %2585 = vmatpush2.msra.mxu0 0.0
    %2586 = vmatprep.subr.mxu0 0.0
    %2587 = vmatpush2.msra.mxu0 0.0
    %2588 = vmatprep.subr.mxu0 0.0
    %2589 = vmatpush2.msra.mxu0 0.0
    %2590 = vmatprep.subr.mxu0 0.0
    %2591 = vmatpush2.msra.mxu0 0.0
    %2592 = vmatprep.subr.mxu0 0.0
    %2593 = vmatpush2.msra.mxu0 0.0
    %2594 = vmatprep.subr.mxu0 0.0
    %2595 = vmatpush2.msra.mxu0 0.0
    %2596 = vmatprep.subr.mxu0 0.0
    %2597 = vmatpush2.msra.mxu0 0.0
    %2598 = vmatprep.subr.mxu0 0.0
    %2599 = vmatpush2.msra.mxu0 0.0
    %2600 = vmatprep.subr.mxu0 0.0
    %2601 = vmatpush2.msra.mxu0 0.0
    %2602 = vmatprep.subr.mxu0 0.0
    %2603 = vmatpush2.msra.mxu0 0.0
    %2604 = vmatprep.subr.mxu0 0.0
    %2605 = vmatpush2.msra.mxu0 0.0
    %2606 = vmatprep.subr.mxu0 0.0
    %2607 = vmatpush2.msra.mxu0 0.0
    %2608 = vmatprep.subr.mxu0 0.0
    %2609 = vmatpush2.msra.mxu0 0.0
    %2610 = vmatprep.mubr.f32.mxu0 0.0
    %2611 = vmatmul.mubr.f32.gmra.mxu0 %v2541
    %v2612 = vpop.f32.mrf.mxu0
    %v2613 = vadd.f32 %v2538, %v2612
    %v2614 = vpop.f32.mrf.mxu0
    %2615 = vmatprep.mubr.f32.mxu0 0.0
    %2616 = vmatmul.mubr.f32.gmra.mxu0 %v2544
    %v2617 = vpop.f32.mrf.mxu0
    %v2618 = vadd.f32 %v2538, %v2617
    %v2619 = vpop.f32.mrf.mxu0
    %2620 = vdwg.mxu0
    %2623 = vrot.lane.b32.xlu0 %v2613, 120
    %v2624 = vpop.permute.xlu0 %2623
    %2625 = vrot.lane.b32.xlu0 %v2618, 120
    %v2626 = vpop.permute.xlu0 %2625
    %2629 = vrot.lane.b32.xlu0 %v2613, 112
    %v2630 = vpop.permute.xlu0 %2629
    %2631 = vrot.lane.b32.xlu0 %v2618, 112
    %v2632 = vpop.permute.xlu0 %2631
    %2635 = vrot.lane.b32.xlu0 %v2613, 104
    %v2636 = vpop.permute.xlu0 %2635
    %2637 = vrot.lane.b32.xlu0 %v2618, 104
    %v2638 = vpop.permute.xlu0 %2637
    %v2641 = vcombine.low %v2613, %v2630
    %v2642 = vcombine.high %v2613, %v2630
    %v2644 = vunpack.c.l.s4 1983009808
    %v2645 = vunpack.c.0.s8 %v2644
    %v2646 = vlaneseq
    %v2647 = vshrl.u32 %v2646, 7
    %v2648 = vsub.s32 %v2645, %v2647
    %v2649 = vrot.slane %v2641, %v2648
    %v2651 = vunpack.c.l.s4 1983009808
    %v2652 = vunpack.c.0.s8 %v2651
    %v2653 = vlaneseq
    %v2654 = vshrl.u32 %v2653, 7
    %v2655 = vsub.s32 %v2652, %v2654
    %v2656 = vrot.slane %v2642, %v2655
    %v2657 = vcombine.low %v2624, %v2636
    %v2658 = vcombine.high %v2624, %v2636
    %v2660 = vunpack.c.l.s4 1983009808
    %v2661 = vunpack.c.0.s8 %v2660
    %v2662 = vlaneseq
    %v2663 = vshrl.u32 %v2662, 7
    %v2664 = vsub.s32 %v2661, %v2663
    %v2665 = vrot.slane %v2657, %v2664
    %v2667 = vunpack.c.l.s4 1983009808
    %v2668 = vunpack.c.0.s8 %v2667
    %v2669 = vlaneseq
    %v2670 = vshrl.u32 %v2669, 7
    %v2671 = vsub.s32 %v2668, %v2670
    %v2672 = vrot.slane %v2658, %v2671
    %v2673 = vcombine.low %v2649, %v2665
    %v2674 = vcombine.high %v2649, %v2665
    %v2676 = vunpack.c.l.s4 1934713408
    %v2677 = vunpack.c.0.s8 %v2676
    %v2678 = vlaneseq
    %v2679 = vshrl.u32 %v2678, 7
    %v2680 = vsub.s32 %v2677, %v2679
    %v2681 = vrot.slane %v2673, %v2680
    %v2683 = vunpack.c.l.s4 1934713408
    %v2684 = vunpack.c.0.s8 %v2683
    %v2685 = vlaneseq
    %v2686 = vshrl.u32 %v2685, 7
    %v2687 = vsub.s32 %v2684, %v2686
    %v2688 = vrot.slane %v2674, %v2687
    %v2689 = vcombine.low %v2656, %v2672
    %v2690 = vcombine.high %v2656, %v2672
    %v2692 = vunpack.c.l.s4 1934713408
    %v2693 = vunpack.c.0.s8 %v2692
    %v2694 = vlaneseq
    %v2695 = vshrl.u32 %v2694, 7
    %v2696 = vsub.s32 %v2693, %v2695
    %v2697 = vrot.slane %v2689, %v2696
    %v2699 = vunpack.c.l.s4 1934713408
    %v2700 = vunpack.c.0.s8 %v2699
    %v2701 = vlaneseq
    %v2702 = vshrl.u32 %v2701, 7
    %v2703 = vsub.s32 %v2700, %v2702
    %v2704 = vrot.slane %v2690, %v2703
    %v2705 = vcombine.high %v2681, 0.0
    %v2706 = vcombine.high %v2688, 0.0
    %v2707 = vcombine.high %v2697, 0.0
    %v2708 = vcombine.high %v2704, 0.0
    %v2709 = vcombine.low %v2618, %v2632
    %v2710 = vcombine.high %v2618, %v2632
    %v2712 = vunpack.c.l.s4 1983009808
    %v2713 = vunpack.c.0.s8 %v2712
    %v2714 = vlaneseq
    %v2715 = vshrl.u32 %v2714, 7
    %v2716 = vsub.s32 %v2713, %v2715
    %v2717 = vrot.slane %v2709, %v2716
    %v2719 = vunpack.c.l.s4 1983009808
    %v2720 = vunpack.c.0.s8 %v2719
    %v2721 = vlaneseq
    %v2722 = vshrl.u32 %v2721, 7
    %v2723 = vsub.s32 %v2720, %v2722
    %v2724 = vrot.slane %v2710, %v2723
    %v2725 = vcombine.low %v2626, %v2638
    %v2726 = vcombine.high %v2626, %v2638
    %v2728 = vunpack.c.l.s4 1983009808
    %v2729 = vunpack.c.0.s8 %v2728
    %v2730 = vlaneseq
    %v2731 = vshrl.u32 %v2730, 7
    %v2732 = vsub.s32 %v2729, %v2731
    %v2733 = vrot.slane %v2725, %v2732
    %v2735 = vunpack.c.l.s4 1983009808
    %v2736 = vunpack.c.0.s8 %v2735
    %v2737 = vlaneseq
    %v2738 = vshrl.u32 %v2737, 7
    %v2739 = vsub.s32 %v2736, %v2738
    %v2740 = vrot.slane %v2726, %v2739
    %v2741 = vcombine.low %v2717, %v2733
    %v2742 = vcombine.high %v2717, %v2733
    %v2744 = vunpack.c.l.s4 1934713408
    %v2745 = vunpack.c.0.s8 %v2744
    %v2746 = vlaneseq
    %v2747 = vshrl.u32 %v2746, 7
    %v2748 = vsub.s32 %v2745, %v2747
    %v2749 = vrot.slane %v2741, %v2748
    %v2751 = vunpack.c.l.s4 1934713408
    %v2752 = vunpack.c.0.s8 %v2751
    %v2753 = vlaneseq
    %v2754 = vshrl.u32 %v2753, 7
    %v2755 = vsub.s32 %v2752, %v2754
    %v2756 = vrot.slane %v2742, %v2755
    %v2757 = vcombine.low %v2724, %v2740
    %v2758 = vcombine.high %v2724, %v2740
    %v2760 = vunpack.c.l.s4 1934713408
    %v2761 = vunpack.c.0.s8 %v2760
    %v2762 = vlaneseq
    %v2763 = vshrl.u32 %v2762, 7
    %v2764 = vsub.s32 %v2761, %v2763
    %v2765 = vrot.slane %v2757, %v2764
    %v2767 = vunpack.c.l.s4 1934713408
    %v2768 = vunpack.c.0.s8 %v2767
    %v2769 = vlaneseq
    %v2770 = vshrl.u32 %v2769, 7
    %v2771 = vsub.s32 %v2768, %v2770
    %v2772 = vrot.slane %v2758, %v2771
    %v2773 = vcombine.high %v2749, 0.0
    %v2774 = vcombine.high %v2756, 0.0
    %v2775 = vcombine.high %v2765, 0.0
    %v2776 = vcombine.high %v2772, 0.0
    %v2777 = vcombine.low %v2681, %v2688
    %v2779 = vunpack.c.l.s4 1983009808
    %v2780 = vunpack.c.0.s8 %v2779
    %v2781 = vlaneseq
    %v2782 = vshrl.u32 %v2781, 7
    %v2783 = vsub.s32 %v2780, %v2782
    %v2784 = vrot.slane %v2777, %v2783
    %v2785 = vcombine.low %v2705, %v2706
    %v2787 = vunpack.c.l.s4 1983009808
    %v2788 = vunpack.c.0.s8 %v2787
    %v2789 = vlaneseq
    %v2790 = vshrl.u32 %v2789, 7
    %v2791 = vsub.s32 %v2788, %v2790
    %v2792 = vrot.slane %v2785, %v2791
    %v2793 = vcombine.low %v2697, %v2704
    %v2795 = vunpack.c.l.s4 1983009808
    %v2796 = vunpack.c.0.s8 %v2795
    %v2797 = vlaneseq
    %v2798 = vshrl.u32 %v2797, 7
    %v2799 = vsub.s32 %v2796, %v2798
    %v2800 = vrot.slane %v2793, %v2799
    %v2801 = vcombine.low %v2707, %v2708
    %v2803 = vunpack.c.l.s4 1983009808
    %v2804 = vunpack.c.0.s8 %v2803
    %v2805 = vlaneseq
    %v2806 = vshrl.u32 %v2805, 7
    %v2807 = vsub.s32 %v2804, %v2806
    %v2808 = vrot.slane %v2801, %v2807
    %v2809 = vcombine.low %v2784, %v2792
    %v2810 = vcombine.high %v2784, %v2792
    %v2812 = vunpack.c.l.s4 1934713408
    %v2813 = vunpack.c.0.s8 %v2812
    %v2814 = vlaneseq
    %v2815 = vshrl.u32 %v2814, 7
    %v2816 = vsub.s32 %v2813, %v2815
    %v2817 = vrot.slane %v2809, %v2816
    %v2819 = vunpack.c.l.s4 1934713408
    %v2820 = vunpack.c.0.s8 %v2819
    %v2821 = vlaneseq
    %v2822 = vshrl.u32 %v2821, 7
    %v2823 = vsub.s32 %v2820, %v2822
    %v2824 = vrot.slane %v2810, %v2823
    %v2825 = vcombine.low %v2800, %v2808
    %v2826 = vcombine.high %v2800, %v2808
    %v2828 = vunpack.c.l.s4 1934713408
    %v2829 = vunpack.c.0.s8 %v2828
    %v2830 = vlaneseq
    %v2831 = vshrl.u32 %v2830, 7
    %v2832 = vsub.s32 %v2829, %v2831
    %v2833 = vrot.slane %v2825, %v2832
    %v2835 = vunpack.c.l.s4 1934713408
    %v2836 = vunpack.c.0.s8 %v2835
    %v2837 = vlaneseq
    %v2838 = vshrl.u32 %v2837, 7
    %v2839 = vsub.s32 %v2836, %v2838
    %v2840 = vrot.slane %v2826, %v2839
    %v2841 = vcombine.low %v2817, %v2833
    %v2842 = vcombine.high %v2817, %v2833
    %v2843 = vcombine.low %v2824, %v2840
    %v2844 = vcombine.high %v2824, %v2840
    %v2845 = vcombine.low %v2749, %v2756
    %v2847 = vunpack.c.l.s4 1983009808
    %v2848 = vunpack.c.0.s8 %v2847
    %v2849 = vlaneseq
    %v2850 = vshrl.u32 %v2849, 7
    %v2851 = vsub.s32 %v2848, %v2850
    %v2852 = vrot.slane %v2845, %v2851
    %v2853 = vcombine.low %v2773, %v2774
    %v2855 = vunpack.c.l.s4 1983009808
    %v2856 = vunpack.c.0.s8 %v2855
    %v2857 = vlaneseq
    %v2858 = vshrl.u32 %v2857, 7
    %v2859 = vsub.s32 %v2856, %v2858
    %v2860 = vrot.slane %v2853, %v2859
    %v2861 = vcombine.low %v2765, %v2772
    %v2863 = vunpack.c.l.s4 1983009808
    %v2864 = vunpack.c.0.s8 %v2863
    %v2865 = vlaneseq
    %v2866 = vshrl.u32 %v2865, 7
    %v2867 = vsub.s32 %v2864, %v2866
    %v2868 = vrot.slane %v2861, %v2867
    %v2869 = vcombine.low %v2775, %v2776
    %v2871 = vunpack.c.l.s4 1983009808
    %v2872 = vunpack.c.0.s8 %v2871
    %v2873 = vlaneseq
    %v2874 = vshrl.u32 %v2873, 7
    %v2875 = vsub.s32 %v2872, %v2874
    %v2876 = vrot.slane %v2869, %v2875
    %v2877 = vcombine.low %v2852, %v2860
    %v2878 = vcombine.high %v2852, %v2860
    %v2880 = vunpack.c.l.s4 1934713408
    %v2881 = vunpack.c.0.s8 %v2880
    %v2882 = vlaneseq
    %v2883 = vshrl.u32 %v2882, 7
    %v2884 = vsub.s32 %v2881, %v2883
    %v2885 = vrot.slane %v2877, %v2884
    %v2887 = vunpack.c.l.s4 1934713408
    %v2888 = vunpack.c.0.s8 %v2887
    %v2889 = vlaneseq
    %v2890 = vshrl.u32 %v2889, 7
    %v2891 = vsub.s32 %v2888, %v2890
    %v2892 = vrot.slane %v2878, %v2891
    %v2893 = vcombine.low %v2868, %v2876
    %v2894 = vcombine.high %v2868, %v2876
    %v2896 = vunpack.c.l.s4 1934713408
    %v2897 = vunpack.c.0.s8 %v2896
    %v2898 = vlaneseq
    %v2899 = vshrl.u32 %v2898, 7
    %v2900 = vsub.s32 %v2897, %v2899
    %v2901 = vrot.slane %v2893, %v2900
    %v2903 = vunpack.c.l.s4 1934713408
    %v2904 = vunpack.c.0.s8 %v2903
    %v2905 = vlaneseq
    %v2906 = vshrl.u32 %v2905, 7
    %v2907 = vsub.s32 %v2904, %v2906
    %v2908 = vrot.slane %v2894, %v2907
    %v2909 = vcombine.low %v2885, %v2901
    %v2910 = vcombine.high %v2885, %v2901
    %v2911 = vcombine.low %v2892, %v2908
    %v2912 = vcombine.high %v2892, %v2908
    %2913 = vrot.lane.b32.xlu0 %v2613, 96
    %v2914 = vpop.permute.xlu0 %2913
    %2915 = vrot.lane.b32.xlu0 %v2618, 96
    %v2916 = vpop.permute.xlu0 %2915
    %2917 = vrot.lane.b32.xlu0 %v2624, 96
    %v2918 = vpop.permute.xlu0 %2917
    %2919 = vrot.lane.b32.xlu0 %v2626, 96
    %v2920 = vpop.permute.xlu0 %2919
    %2921 = vrot.lane.b32.xlu0 %v2630, 96
    %v2922 = vpop.permute.xlu0 %2921
    %2923 = vrot.lane.b32.xlu0 %v2632, 96
    %v2924 = vpop.permute.xlu0 %2923
    %2925 = vrot.lane.b32.xlu0 %v2636, 96
    %v2926 = vpop.permute.xlu0 %2925
    %2927 = vrot.lane.b32.xlu0 %v2638, 96
    %v2928 = vpop.permute.xlu0 %2927
    %v2937 = vcombine.low %v2914, %v2922
    %v2938 = vcombine.high %v2914, %v2922
    %v2940 = vunpack.c.l.s4 1983009808
    %v2941 = vunpack.c.0.s8 %v2940
    %v2942 = vlaneseq
    %v2943 = vshrl.u32 %v2942, 7
    %v2944 = vsub.s32 %v2941, %v2943
    %v2945 = vrot.slane %v2937, %v2944
    %v2947 = vunpack.c.l.s4 1983009808
    %v2948 = vunpack.c.0.s8 %v2947
    %v2949 = vlaneseq
    %v2950 = vshrl.u32 %v2949, 7
    %v2951 = vsub.s32 %v2948, %v2950
    %v2952 = vrot.slane %v2938, %v2951
    %v2953 = vcombine.low %v2918, %v2926
    %v2954 = vcombine.high %v2918, %v2926
    %v2956 = vunpack.c.l.s4 1983009808
    %v2957 = vunpack.c.0.s8 %v2956
    %v2958 = vlaneseq
    %v2959 = vshrl.u32 %v2958, 7
    %v2960 = vsub.s32 %v2957, %v2959
    %v2961 = vrot.slane %v2953, %v2960
    %v2963 = vunpack.c.l.s4 1983009808
    %v2964 = vunpack.c.0.s8 %v2963
    %v2965 = vlaneseq
    %v2966 = vshrl.u32 %v2965, 7
    %v2967 = vsub.s32 %v2964, %v2966
    %v2968 = vrot.slane %v2954, %v2967
    %v2969 = vcombine.low %v2945, %v2961
    %v2970 = vcombine.high %v2945, %v2961
    %v2972 = vunpack.c.l.s4 1934713408
    %v2973 = vunpack.c.0.s8 %v2972
    %v2974 = vlaneseq
    %v2975 = vshrl.u32 %v2974, 7
    %v2976 = vsub.s32 %v2973, %v2975
    %v2977 = vrot.slane %v2969, %v2976
    %v2979 = vunpack.c.l.s4 1934713408
    %v2980 = vunpack.c.0.s8 %v2979
    %v2981 = vlaneseq
    %v2982 = vshrl.u32 %v2981, 7
    %v2983 = vsub.s32 %v2980, %v2982
    %v2984 = vrot.slane %v2970, %v2983
    %v2985 = vcombine.low %v2952, %v2968
    %v2986 = vcombine.high %v2952, %v2968
    %v2988 = vunpack.c.l.s4 1934713408
    %v2989 = vunpack.c.0.s8 %v2988
    %v2990 = vlaneseq
    %v2991 = vshrl.u32 %v2990, 7
    %v2992 = vsub.s32 %v2989, %v2991
    %v2993 = vrot.slane %v2985, %v2992
    %v2995 = vunpack.c.l.s4 1934713408
    %v2996 = vunpack.c.0.s8 %v2995
    %v2997 = vlaneseq
    %v2998 = vshrl.u32 %v2997, 7
    %v2999 = vsub.s32 %v2996, %v2998
    %v3000 = vrot.slane %v2986, %v2999
    %v3001 = vcombine.high %v2977, 0.0
    %v3002 = vcombine.high %v2984, 0.0
    %v3003 = vcombine.high %v2993, 0.0
    %v3004 = vcombine.high %v3000, 0.0
    %v3005 = vcombine.low %v2916, %v2924
    %v3006 = vcombine.high %v2916, %v2924
    %v3008 = vunpack.c.l.s4 1983009808
    %v3009 = vunpack.c.0.s8 %v3008
    %v3010 = vlaneseq
    %v3011 = vshrl.u32 %v3010, 7
    %v3012 = vsub.s32 %v3009, %v3011
    %v3013 = vrot.slane %v3005, %v3012
    %v3015 = vunpack.c.l.s4 1983009808
    %v3016 = vunpack.c.0.s8 %v3015
    %v3017 = vlaneseq
    %v3018 = vshrl.u32 %v3017, 7
    %v3019 = vsub.s32 %v3016, %v3018
    %v3020 = vrot.slane %v3006, %v3019
    %v3021 = vcombine.low %v2920, %v2928
    %v3022 = vcombine.high %v2920, %v2928
    %v3024 = vunpack.c.l.s4 1983009808
    %v3025 = vunpack.c.0.s8 %v3024
    %v3026 = vlaneseq
    %v3027 = vshrl.u32 %v3026, 7
    %v3028 = vsub.s32 %v3025, %v3027
    %v3029 = vrot.slane %v3021, %v3028
    %v3031 = vunpack.c.l.s4 1983009808
    %v3032 = vunpack.c.0.s8 %v3031
    %v3033 = vlaneseq
    %v3034 = vshrl.u32 %v3033, 7
    %v3035 = vsub.s32 %v3032, %v3034
    %v3036 = vrot.slane %v3022, %v3035
    %v3037 = vcombine.low %v3013, %v3029
    %v3038 = vcombine.high %v3013, %v3029
    %v3040 = vunpack.c.l.s4 1934713408
    %v3041 = vunpack.c.0.s8 %v3040
    %v3042 = vlaneseq
    %v3043 = vshrl.u32 %v3042, 7
    %v3044 = vsub.s32 %v3041, %v3043
    %v3045 = vrot.slane %v3037, %v3044
    %v3047 = vunpack.c.l.s4 1934713408
    %v3048 = vunpack.c.0.s8 %v3047
    %v3049 = vlaneseq
    %v3050 = vshrl.u32 %v3049, 7
    %v3051 = vsub.s32 %v3048, %v3050
    %v3052 = vrot.slane %v3038, %v3051
    %v3053 = vcombine.low %v3020, %v3036
    %v3054 = vcombine.high %v3020, %v3036
    %v3056 = vunpack.c.l.s4 1934713408
    %v3057 = vunpack.c.0.s8 %v3056
    %v3058 = vlaneseq
    %v3059 = vshrl.u32 %v3058, 7
    %v3060 = vsub.s32 %v3057, %v3059
    %v3061 = vrot.slane %v3053, %v3060
    %v3063 = vunpack.c.l.s4 1934713408
    %v3064 = vunpack.c.0.s8 %v3063
    %v3065 = vlaneseq
    %v3066 = vshrl.u32 %v3065, 7
    %v3067 = vsub.s32 %v3064, %v3066
    %v3068 = vrot.slane %v3054, %v3067
    %v3069 = vcombine.high %v3045, 0.0
    %v3070 = vcombine.high %v3052, 0.0
    %v3071 = vcombine.high %v3061, 0.0
    %v3072 = vcombine.high %v3068, 0.0
    %v3073 = vcombine.low %v2977, %v2984
    %v3075 = vunpack.c.l.s4 1983009808
    %v3076 = vunpack.c.0.s8 %v3075
    %v3077 = vlaneseq
    %v3078 = vshrl.u32 %v3077, 7
    %v3079 = vsub.s32 %v3076, %v3078
    %v3080 = vrot.slane %v3073, %v3079
    %v3081 = vcombine.low %v3001, %v3002
    %v3083 = vunpack.c.l.s4 1983009808
    %v3084 = vunpack.c.0.s8 %v3083
    %v3085 = vlaneseq
    %v3086 = vshrl.u32 %v3085, 7
    %v3087 = vsub.s32 %v3084, %v3086
    %v3088 = vrot.slane %v3081, %v3087
    %v3089 = vcombine.low %v2993, %v3000
    %v3091 = vunpack.c.l.s4 1983009808
    %v3092 = vunpack.c.0.s8 %v3091
    %v3093 = vlaneseq
    %v3094 = vshrl.u32 %v3093, 7
    %v3095 = vsub.s32 %v3092, %v3094
    %v3096 = vrot.slane %v3089, %v3095
    %v3097 = vcombine.low %v3003, %v3004
    %v3099 = vunpack.c.l.s4 1983009808
    %v3100 = vunpack.c.0.s8 %v3099
    %v3101 = vlaneseq
    %v3102 = vshrl.u32 %v3101, 7
    %v3103 = vsub.s32 %v3100, %v3102
    %v3104 = vrot.slane %v3097, %v3103
    %v3105 = vcombine.low %v3080, %v3088
    %v3106 = vcombine.high %v3080, %v3088
    %v3108 = vunpack.c.l.s4 1934713408
    %v3109 = vunpack.c.0.s8 %v3108
    %v3110 = vlaneseq
    %v3111 = vshrl.u32 %v3110, 7
    %v3112 = vsub.s32 %v3109, %v3111
    %v3113 = vrot.slane %v3105, %v3112
    %v3115 = vunpack.c.l.s4 1934713408
    %v3116 = vunpack.c.0.s8 %v3115
    %v3117 = vlaneseq
    %v3118 = vshrl.u32 %v3117, 7
    %v3119 = vsub.s32 %v3116, %v3118
    %v3120 = vrot.slane %v3106, %v3119
    %v3121 = vcombine.low %v3096, %v3104
    %v3122 = vcombine.high %v3096, %v3104
    %v3124 = vunpack.c.l.s4 1934713408
    %v3125 = vunpack.c.0.s8 %v3124
    %v3126 = vlaneseq
    %v3127 = vshrl.u32 %v3126, 7
    %v3128 = vsub.s32 %v3125, %v3127
    %v3129 = vrot.slane %v3121, %v3128
    %v3131 = vunpack.c.l.s4 1934713408
    %v3132 = vunpack.c.0.s8 %v3131
    %v3133 = vlaneseq
    %v3134 = vshrl.u32 %v3133, 7
    %v3135 = vsub.s32 %v3132, %v3134
    %v3136 = vrot.slane %v3122, %v3135
    %v3137 = vcombine.low %v3113, %v3129
    %v3138 = vcombine.high %v3113, %v3129
    %v3139 = vcombine.low %v3120, %v3136
    %v3140 = vcombine.high %v3120, %v3136
    %v3141 = vcombine.low %v3045, %v3052
    %v3143 = vunpack.c.l.s4 1983009808
    %v3144 = vunpack.c.0.s8 %v3143
    %v3145 = vlaneseq
    %v3146 = vshrl.u32 %v3145, 7
    %v3147 = vsub.s32 %v3144, %v3146
    %v3148 = vrot.slane %v3141, %v3147
    %v3149 = vcombine.low %v3069, %v3070
    %v3151 = vunpack.c.l.s4 1983009808
    %v3152 = vunpack.c.0.s8 %v3151
    %v3153 = vlaneseq
    %v3154 = vshrl.u32 %v3153, 7
    %v3155 = vsub.s32 %v3152, %v3154
    %v3156 = vrot.slane %v3149, %v3155
    %v3157 = vcombine.low %v3061, %v3068
    %v3159 = vunpack.c.l.s4 1983009808
    %v3160 = vunpack.c.0.s8 %v3159
    %v3161 = vlaneseq
    %v3162 = vshrl.u32 %v3161, 7
    %v3163 = vsub.s32 %v3160, %v3162
    %v3164 = vrot.slane %v3157, %v3163
    %v3165 = vcombine.low %v3071, %v3072
    %v3167 = vunpack.c.l.s4 1983009808
    %v3168 = vunpack.c.0.s8 %v3167
    %v3169 = vlaneseq
    %v3170 = vshrl.u32 %v3169, 7
    %v3171 = vsub.s32 %v3168, %v3170
    %v3172 = vrot.slane %v3165, %v3171
    %v3173 = vcombine.low %v3148, %v3156
    %v3174 = vcombine.high %v3148, %v3156
    %v3176 = vunpack.c.l.s4 1934713408
    %v3177 = vunpack.c.0.s8 %v3176
    %v3178 = vlaneseq
    %v3179 = vshrl.u32 %v3178, 7
    %v3180 = vsub.s32 %v3177, %v3179
    %v3181 = vrot.slane %v3173, %v3180
    %v3183 = vunpack.c.l.s4 1934713408
    %v3184 = vunpack.c.0.s8 %v3183
    %v3185 = vlaneseq
    %v3186 = vshrl.u32 %v3185, 7
    %v3187 = vsub.s32 %v3184, %v3186
    %v3188 = vrot.slane %v3174, %v3187
    %v3189 = vcombine.low %v3164, %v3172
    %v3190 = vcombine.high %v3164, %v3172
    %v3192 = vunpack.c.l.s4 1934713408
    %v3193 = vunpack.c.0.s8 %v3192
    %v3194 = vlaneseq
    %v3195 = vshrl.u32 %v3194, 7
    %v3196 = vsub.s32 %v3193, %v3195
    %v3197 = vrot.slane %v3189, %v3196
    %v3199 = vunpack.c.l.s4 1934713408
    %v3200 = vunpack.c.0.s8 %v3199
    %v3201 = vlaneseq
    %v3202 = vshrl.u32 %v3201, 7
    %v3203 = vsub.s32 %v3200, %v3202
    %v3204 = vrot.slane %v3190, %v3203
    %v3205 = vcombine.low %v3181, %v3197
    %v3206 = vcombine.high %v3181, %v3197
    %v3207 = vcombine.low %v3188, %v3204
    %v3208 = vcombine.high %v3188, %v3204
    %3209 = vrot.lane.b32.xlu0 %v2613, 64
    %v3210 = vpop.permute.xlu0 %3209
    %3211 = vrot.lane.b32.xlu0 %v2618, 64
    %v3212 = vpop.permute.xlu0 %3211
    %3213 = vrot.lane.b32.xlu0 %v2624, 64
    %v3214 = vpop.permute.xlu0 %3213
    %3215 = vrot.lane.b32.xlu0 %v2626, 64
    %v3216 = vpop.permute.xlu0 %3215
    %3217 = vrot.lane.b32.xlu0 %v2630, 64
    %v3218 = vpop.permute.xlu0 %3217
    %3219 = vrot.lane.b32.xlu0 %v2632, 64
    %v3220 = vpop.permute.xlu0 %3219
    %3221 = vrot.lane.b32.xlu0 %v2636, 64
    %v3222 = vpop.permute.xlu0 %3221
    %3223 = vrot.lane.b32.xlu0 %v2638, 64
    %v3224 = vpop.permute.xlu0 %3223
    %v3233 = vcombine.low %v3210, %v3218
    %v3234 = vcombine.high %v3210, %v3218
    %v3236 = vunpack.c.l.s4 1983009808
    %v3237 = vunpack.c.0.s8 %v3236
    %v3238 = vlaneseq
    %v3239 = vshrl.u32 %v3238, 7
    %v3240 = vsub.s32 %v3237, %v3239
    %v3241 = vrot.slane %v3233, %v3240
    %v3243 = vunpack.c.l.s4 1983009808
    %v3244 = vunpack.c.0.s8 %v3243
    %v3245 = vlaneseq
    %v3246 = vshrl.u32 %v3245, 7
    %v3247 = vsub.s32 %v3244, %v3246
    %v3248 = vrot.slane %v3234, %v3247
    %v3249 = vcombine.low %v3214, %v3222
    %v3250 = vcombine.high %v3214, %v3222
    %v3252 = vunpack.c.l.s4 1983009808
    %v3253 = vunpack.c.0.s8 %v3252
    %v3254 = vlaneseq
    %v3255 = vshrl.u32 %v3254, 7
    %v3256 = vsub.s32 %v3253, %v3255
    %v3257 = vrot.slane %v3249, %v3256
    %v3259 = vunpack.c.l.s4 1983009808
    %v3260 = vunpack.c.0.s8 %v3259
    %v3261 = vlaneseq
    %v3262 = vshrl.u32 %v3261, 7
    %v3263 = vsub.s32 %v3260, %v3262
    %v3264 = vrot.slane %v3250, %v3263
    %v3265 = vcombine.low %v3241, %v3257
    %v3266 = vcombine.high %v3241, %v3257
    %v3268 = vunpack.c.l.s4 1934713408
    %v3269 = vunpack.c.0.s8 %v3268
    %v3270 = vlaneseq
    %v3271 = vshrl.u32 %v3270, 7
    %v3272 = vsub.s32 %v3269, %v3271
    %v3273 = vrot.slane %v3265, %v3272
    %v3275 = vunpack.c.l.s4 1934713408
    %v3276 = vunpack.c.0.s8 %v3275
    %v3277 = vlaneseq
    %v3278 = vshrl.u32 %v3277, 7
    %v3279 = vsub.s32 %v3276, %v3278
    %v3280 = vrot.slane %v3266, %v3279
    %v3281 = vcombine.low %v3248, %v3264
    %v3282 = vcombine.high %v3248, %v3264
    %v3284 = vunpack.c.l.s4 1934713408
    %v3285 = vunpack.c.0.s8 %v3284
    %v3286 = vlaneseq
    %v3287 = vshrl.u32 %v3286, 7
    %v3288 = vsub.s32 %v3285, %v3287
    %v3289 = vrot.slane %v3281, %v3288
    %v3291 = vunpack.c.l.s4 1934713408
    %v3292 = vunpack.c.0.s8 %v3291
    %v3293 = vlaneseq
    %v3294 = vshrl.u32 %v3293, 7
    %v3295 = vsub.s32 %v3292, %v3294
    %v3296 = vrot.slane %v3282, %v3295
    %v3297 = vcombine.high %v3273, 0.0
    %v3298 = vcombine.high %v3280, 0.0
    %v3299 = vcombine.high %v3289, 0.0
    %v3300 = vcombine.high %v3296, 0.0
    %v3301 = vcombine.low %v3212, %v3220
    %v3302 = vcombine.high %v3212, %v3220
    %v3304 = vunpack.c.l.s4 1983009808
    %v3305 = vunpack.c.0.s8 %v3304
    %v3306 = vlaneseq
    %v3307 = vshrl.u32 %v3306, 7
    %v3308 = vsub.s32 %v3305, %v3307
    %v3309 = vrot.slane %v3301, %v3308
    %v3311 = vunpack.c.l.s4 1983009808
    %v3312 = vunpack.c.0.s8 %v3311
    %v3313 = vlaneseq
    %v3314 = vshrl.u32 %v3313, 7
    %v3315 = vsub.s32 %v3312, %v3314
    %v3316 = vrot.slane %v3302, %v3315
    %v3317 = vcombine.low %v3216, %v3224
    %v3318 = vcombine.high %v3216, %v3224
    %v3320 = vunpack.c.l.s4 1983009808
    %v3321 = vunpack.c.0.s8 %v3320
    %v3322 = vlaneseq
    %v3323 = vshrl.u32 %v3322, 7
    %v3324 = vsub.s32 %v3321, %v3323
    %v3325 = vrot.slane %v3317, %v3324
    %v3327 = vunpack.c.l.s4 1983009808
    %v3328 = vunpack.c.0.s8 %v3327
    %v3329 = vlaneseq
    %v3330 = vshrl.u32 %v3329, 7
    %v3331 = vsub.s32 %v3328, %v3330
    %v3332 = vrot.slane %v3318, %v3331
    %v3333 = vcombine.low %v3309, %v3325
    %v3334 = vcombine.high %v3309, %v3325
    %v3336 = vunpack.c.l.s4 1934713408
    %v3337 = vunpack.c.0.s8 %v3336
    %v3338 = vlaneseq
    %v3339 = vshrl.u32 %v3338, 7
    %v3340 = vsub.s32 %v3337, %v3339
    %v3341 = vrot.slane %v3333, %v3340
    %v3343 = vunpack.c.l.s4 1934713408
    %v3344 = vunpack.c.0.s8 %v3343
    %v3345 = vlaneseq
    %v3346 = vshrl.u32 %v3345, 7
    %v3347 = vsub.s32 %v3344, %v3346
    %v3348 = vrot.slane %v3334, %v3347
    %v3349 = vcombine.low %v3316, %v3332
    %v3350 = vcombine.high %v3316, %v3332
    %v3352 = vunpack.c.l.s4 1934713408
    %v3353 = vunpack.c.0.s8 %v3352
    %v3354 = vlaneseq
    %v3355 = vshrl.u32 %v3354, 7
    %v3356 = vsub.s32 %v3353, %v3355
    %v3357 = vrot.slane %v3349, %v3356
    %v3359 = vunpack.c.l.s4 1934713408
    %v3360 = vunpack.c.0.s8 %v3359
    %v3361 = vlaneseq
    %v3362 = vshrl.u32 %v3361, 7
    %v3363 = vsub.s32 %v3360, %v3362
    %v3364 = vrot.slane %v3350, %v3363
    %v3365 = vcombine.high %v3341, 0.0
    %v3366 = vcombine.high %v3348, 0.0
    %v3367 = vcombine.high %v3357, 0.0
    %v3368 = vcombine.high %v3364, 0.0
    %v3369 = vcombine.low %v3273, %v3280
    %v3371 = vunpack.c.l.s4 1983009808
    %v3372 = vunpack.c.0.s8 %v3371
    %v3373 = vlaneseq
    %v3374 = vshrl.u32 %v3373, 7
    %v3375 = vsub.s32 %v3372, %v3374
    %v3376 = vrot.slane %v3369, %v3375
    %v3377 = vcombine.low %v3297, %v3298
    %v3379 = vunpack.c.l.s4 1983009808
    %v3380 = vunpack.c.0.s8 %v3379
    %v3381 = vlaneseq
    %v3382 = vshrl.u32 %v3381, 7
    %v3383 = vsub.s32 %v3380, %v3382
    %v3384 = vrot.slane %v3377, %v3383
    %v3385 = vcombine.low %v3289, %v3296
    %v3387 = vunpack.c.l.s4 1983009808
    %v3388 = vunpack.c.0.s8 %v3387
    %v3389 = vlaneseq
    %v3390 = vshrl.u32 %v3389, 7
    %v3391 = vsub.s32 %v3388, %v3390
    %v3392 = vrot.slane %v3385, %v3391
    %v3393 = vcombine.low %v3299, %v3300
    %v3395 = vunpack.c.l.s4 1983009808
    %v3396 = vunpack.c.0.s8 %v3395
    %v3397 = vlaneseq
    %v3398 = vshrl.u32 %v3397, 7
    %v3399 = vsub.s32 %v3396, %v3398
    %v3400 = vrot.slane %v3393, %v3399
    %v3401 = vcombine.low %v3376, %v3384
    %v3402 = vcombine.high %v3376, %v3384
    %v3404 = vunpack.c.l.s4 1934713408
    %v3405 = vunpack.c.0.s8 %v3404
    %v3406 = vlaneseq
    %v3407 = vshrl.u32 %v3406, 7
    %v3408 = vsub.s32 %v3405, %v3407
    %v3409 = vrot.slane %v3401, %v3408
    %v3411 = vunpack.c.l.s4 1934713408
    %v3412 = vunpack.c.0.s8 %v3411
    %v3413 = vlaneseq
    %v3414 = vshrl.u32 %v3413, 7
    %v3415 = vsub.s32 %v3412, %v3414
    %v3416 = vrot.slane %v3402, %v3415
    %v3417 = vcombine.low %v3392, %v3400
    %v3418 = vcombine.high %v3392, %v3400
    %v3420 = vunpack.c.l.s4 1934713408
    %v3421 = vunpack.c.0.s8 %v3420
    %v3422 = vlaneseq
    %v3423 = vshrl.u32 %v3422, 7
    %v3424 = vsub.s32 %v3421, %v3423
    %v3425 = vrot.slane %v3417, %v3424
    %v3427 = vunpack.c.l.s4 1934713408
    %v3428 = vunpack.c.0.s8 %v3427
    %v3429 = vlaneseq
    %v3430 = vshrl.u32 %v3429, 7
    %v3431 = vsub.s32 %v3428, %v3430
    %v3432 = vrot.slane %v3418, %v3431
    %v3433 = vcombine.low %v3409, %v3425
    %v3434 = vcombine.high %v3409, %v3425
    %v3435 = vcombine.low %v3416, %v3432
    %v3436 = vcombine.high %v3416, %v3432
    %v3437 = vcombine.low %v3341, %v3348
    %v3439 = vunpack.c.l.s4 1983009808
    %v3440 = vunpack.c.0.s8 %v3439
    %v3441 = vlaneseq
    %v3442 = vshrl.u32 %v3441, 7
    %v3443 = vsub.s32 %v3440, %v3442
    %v3444 = vrot.slane %v3437, %v3443
    %v3445 = vcombine.low %v3365, %v3366
    %v3447 = vunpack.c.l.s4 1983009808
    %v3448 = vunpack.c.0.s8 %v3447
    %v3449 = vlaneseq
    %v3450 = vshrl.u32 %v3449, 7
    %v3451 = vsub.s32 %v3448, %v3450
    %v3452 = vrot.slane %v3445, %v3451
    %v3453 = vcombine.low %v3357, %v3364
    %v3455 = vunpack.c.l.s4 1983009808
    %v3456 = vunpack.c.0.s8 %v3455
    %v3457 = vlaneseq
    %v3458 = vshrl.u32 %v3457, 7
    %v3459 = vsub.s32 %v3456, %v3458
    %v3460 = vrot.slane %v3453, %v3459
    %v3461 = vcombine.low %v3367, %v3368
    %v3463 = vunpack.c.l.s4 1983009808
    %v3464 = vunpack.c.0.s8 %v3463
    %v3465 = vlaneseq
    %v3466 = vshrl.u32 %v3465, 7
    %v3467 = vsub.s32 %v3464, %v3466
    %v3468 = vrot.slane %v3461, %v3467
    %v3469 = vcombine.low %v3444, %v3452
    %v3470 = vcombine.high %v3444, %v3452
    %v3472 = vunpack.c.l.s4 1934713408
    %v3473 = vunpack.c.0.s8 %v3472
    %v3474 = vlaneseq
    %v3475 = vshrl.u32 %v3474, 7
    %v3476 = vsub.s32 %v3473, %v3475
    %v3477 = vrot.slane %v3469, %v3476
    %v3479 = vunpack.c.l.s4 1934713408
    %v3480 = vunpack.c.0.s8 %v3479
    %v3481 = vlaneseq
    %v3482 = vshrl.u32 %v3481, 7
    %v3483 = vsub.s32 %v3480, %v3482
    %v3484 = vrot.slane %v3470, %v3483
    %v3485 = vcombine.low %v3460, %v3468
    %v3486 = vcombine.high %v3460, %v3468
    %v3488 = vunpack.c.l.s4 1934713408
    %v3489 = vunpack.c.0.s8 %v3488
    %v3490 = vlaneseq
    %v3491 = vshrl.u32 %v3490, 7
    %v3492 = vsub.s32 %v3489, %v3491
    %v3493 = vrot.slane %v3485, %v3492
    %v3495 = vunpack.c.l.s4 1934713408
    %v3496 = vunpack.c.0.s8 %v3495
    %v3497 = vlaneseq
    %v3498 = vshrl.u32 %v3497, 7
    %v3499 = vsub.s32 %v3496, %v3498
    %v3500 = vrot.slane %v3486, %v3499
    %v3501 = vcombine.low %v3477, %v3493
    %v3502 = vcombine.high %v3477, %v3493
    %v3503 = vcombine.low %v3484, %v3500
    %v3504 = vcombine.high %v3484, %v3500
    %v3506 = vsel %vm1069, %v2841, 0
    %v3509 = vsel %vm1069, %v2909, 0
    %v3512 = vsel %vm1069, %v3137, 0
    %v3515 = vsel %vm1069, %v3205, 0
    %3517 = vmatprep.subr.mxu0 0.0
    %3518 = vmatpush1.xpose.msra.mxu0 0.0
    %3519 = vmatprep.subr.mxu0 0.0
    %3520 = vmatpush1.xpose.msra.mxu0 0.0
    %3521 = vmatprep.subr.mxu0 0.0
    %3522 = vmatpush1.xpose.msra.mxu0 0.0
    %3523 = vmatprep.subr.mxu0 0.0
    %3524 = vmatpush1.xpose.msra.mxu0 0.0
    %3525 = vmatprep.subr.mxu0 0.0
    %3526 = vmatpush1.xpose.msra.mxu0 0.0
    %3527 = vmatprep.subr.mxu0 0.0
    %3528 = vmatpush1.xpose.msra.mxu0 0.0
    %3529 = vmatprep.subr.mxu0 0.0
    %3530 = vmatpush1.xpose.msra.mxu0 0.0
    %3531 = vmatprep.subr.mxu0 0.0
    %3532 = vmatpush1.xpose.msra.mxu0 0.0
    %3533 = vmatprep.subr.mxu0 0.0
    %3534 = vmatpush1.xpose.msra.mxu0 0.0
    %3535 = vmatprep.subr.mxu0 0.0
    %3536 = vmatpush1.xpose.msra.mxu0 0.0
    %3537 = vmatprep.subr.mxu0 0.0
    %3538 = vmatpush1.xpose.msra.mxu0 0.0
    %3539 = vmatprep.subr.mxu0 0.0
    %3540 = vmatpush1.xpose.msra.mxu0 0.0
    %3541 = vmatprep.subr.mxu0 0.0
    %3542 = vmatpush1.xpose.msra.mxu0 0.0
    %3543 = vmatprep.subr.mxu0 0.0
    %3544 = vmatpush1.xpose.msra.mxu0 0.0
    %3545 = vmatprep.subr.mxu0 0.0
    %3546 = vmatpush1.xpose.msra.mxu0 %v3515
    %3547 = vmatprep.subr.mxu0 0.0
    %3548 = vmatpush1.xpose.msra.mxu0 %v3512
    %3549 = vmatprep.subr.mxu0 0.0
    %3550 = vmatpush2.xpose.msra.mxu0 0.0
    %3551 = vmatprep.subr.mxu0 0.0
    %3552 = vmatpush2.xpose.msra.mxu0 0.0
    %3553 = vmatprep.subr.mxu0 0.0
    %3554 = vmatpush2.xpose.msra.mxu0 0.0
    %3555 = vmatprep.subr.mxu0 0.0
    %3556 = vmatpush2.xpose.msra.mxu0 0.0
    %3557 = vmatprep.subr.mxu0 0.0
    %3558 = vmatpush2.xpose.msra.mxu0 0.0
    %3559 = vmatprep.subr.mxu0 0.0
    %3560 = vmatpush2.xpose.msra.mxu0 0.0
    %3561 = vmatprep.subr.mxu0 0.0
    %3562 = vmatpush2.xpose.msra.mxu0 0.0
    %3563 = vmatprep.subr.mxu0 0.0
    %3564 = vmatpush2.xpose.msra.mxu0 0.0
    %3565 = vmatprep.subr.mxu0 0.0
    %3566 = vmatpush2.xpose.msra.mxu0 0.0
    %3567 = vmatprep.subr.mxu0 0.0
    %3568 = vmatpush2.xpose.msra.mxu0 0.0
    %3569 = vmatprep.subr.mxu0 0.0
    %3570 = vmatpush2.xpose.msra.mxu0 0.0
    %3571 = vmatprep.subr.mxu0 0.0
    %3572 = vmatpush2.xpose.msra.mxu0 0.0
    %3573 = vmatprep.subr.mxu0 0.0
    %3574 = vmatpush2.xpose.msra.mxu0 0.0
    %3575 = vmatprep.subr.mxu0 0.0
    %3576 = vmatpush2.xpose.msra.mxu0 0.0
    %3577 = vmatprep.subr.mxu0 0.0
    %3578 = vmatpush2.xpose.msra.mxu0 0.0
    %3579 = vmatprep.subr.mxu0 0.0
    %3580 = vmatpush2.xpose.msra.mxu0 0.0
    %3581 = vmatprep.mubr.f32.mxu0 0.0
    %3582 = vmatmul.mubr.f32.gmra.mxu0 %v3506
    %v3583 = vpop.f32.mrf.mxu0
    %v3584 = vadd.f32 %v47, %v3583
    %v3585 = vpop.f32.mrf.mxu0
    %3586 = vmatprep.mubr.f32.mxu0 0.0
    %3587 = vmatmul.mubr.f32.gmra.mxu0 %v3509
    %v3588 = vpop.f32.mrf.mxu0
    %v3589 = vadd.f32 %v48, %v3588
    %v3590 = vpop.f32.mrf.mxu0
    %3591 = vdwg.mxu0
    %v3593 = vsel %vm1069, %v2842, 0
    %v3596 = vsel %vm1069, %v2910, 0
    %v3599 = vsel %vm1069, %v3138, 0
    %v3602 = vsel %vm1069, %v3206, 0
    %3604 = vmatprep.subr.mxu0 0.0
    %3605 = vmatpush1.xpose.msra.mxu0 0.0
    %3606 = vmatprep.subr.mxu0 0.0
    %3607 = vmatpush1.xpose.msra.mxu0 0.0
    %3608 = vmatprep.subr.mxu0 0.0
    %3609 = vmatpush1.xpose.msra.mxu0 0.0
    %3610 = vmatprep.subr.mxu0 0.0
    %3611 = vmatpush1.xpose.msra.mxu0 0.0
    %3612 = vmatprep.subr.mxu0 0.0
    %3613 = vmatpush1.xpose.msra.mxu0 0.0
    %3614 = vmatprep.subr.mxu0 0.0
    %3615 = vmatpush1.xpose.msra.mxu0 0.0
    %3616 = vmatprep.subr.mxu0 0.0
    %3617 = vmatpush1.xpose.msra.mxu0 0.0
    %3618 = vmatprep.subr.mxu0 0.0
    %3619 = vmatpush1.xpose.msra.mxu0 0.0
    %3620 = vmatprep.subr.mxu0 0.0
    %3621 = vmatpush1.xpose.msra.mxu0 0.0
    %3622 = vmatprep.subr.mxu0 0.0
    %3623 = vmatpush1.xpose.msra.mxu0 0.0
    %3624 = vmatprep.subr.mxu0 0.0
    %3625 = vmatpush1.xpose.msra.mxu0 0.0
    %3626 = vmatprep.subr.mxu0 0.0
    %3627 = vmatpush1.xpose.msra.mxu0 0.0
    %3628 = vmatprep.subr.mxu0 0.0
    %3629 = vmatpush1.xpose.msra.mxu0 0.0
    %3630 = vmatprep.subr.mxu0 0.0
    %3631 = vmatpush1.xpose.msra.mxu0 0.0
    %3632 = vmatprep.subr.mxu0 0.0
    %3633 = vmatpush1.xpose.msra.mxu0 %v3602
    %3634 = vmatprep.subr.mxu0 0.0
    %3635 = vmatpush1.xpose.msra.mxu0 %v3599
    %3636 = vmatprep.subr.mxu0 0.0
    %3637 = vmatpush2.xpose.msra.mxu0 0.0
    %3638 = vmatprep.subr.mxu0 0.0
    %3639 = vmatpush2.xpose.msra.mxu0 0.0
    %3640 = vmatprep.subr.mxu0 0.0
    %3641 = vmatpush2.xpose.msra.mxu0 0.0
    %3642 = vmatprep.subr.mxu0 0.0
    %3643 = vmatpush2.xpose.msra.mxu0 0.0
    %3644 = vmatprep.subr.mxu0 0.0
    %3645 = vmatpush2.xpose.msra.mxu0 0.0
    %3646 = vmatprep.subr.mxu0 0.0
    %3647 = vmatpush2.xpose.msra.mxu0 0.0
    %3648 = vmatprep.subr.mxu0 0.0
    %3649 = vmatpush2.xpose.msra.mxu0 0.0
    %3650 = vmatprep.subr.mxu0 0.0
    %3651 = vmatpush2.xpose.msra.mxu0 0.0
    %3652 = vmatprep.subr.mxu0 0.0
    %3653 = vmatpush2.xpose.msra.mxu0 0.0
    %3654 = vmatprep.subr.mxu0 0.0
    %3655 = vmatpush2.xpose.msra.mxu0 0.0
    %3656 = vmatprep.subr.mxu0 0.0
    %3657 = vmatpush2.xpose.msra.mxu0 0.0
    %3658 = vmatprep.subr.mxu0 0.0
    %3659 = vmatpush2.xpose.msra.mxu0 0.0
    %3660 = vmatprep.subr.mxu0 0.0
    %3661 = vmatpush2.xpose.msra.mxu0 0.0
    %3662 = vmatprep.subr.mxu0 0.0
    %3663 = vmatpush2.xpose.msra.mxu0 0.0
    %3664 = vmatprep.subr.mxu0 0.0
    %3665 = vmatpush2.xpose.msra.mxu0 0.0
    %3666 = vmatprep.subr.mxu0 0.0
    %3667 = vmatpush2.xpose.msra.mxu0 0.0
    %3668 = vmatprep.mubr.f32.mxu0 0.0
    %3669 = vmatmul.mubr.f32.gmra.mxu0 %v3593
    %v3670 = vpop.f32.mrf.mxu0
    %v3671 = vadd.f32 %v47, %v3670
    %v3672 = vpop.f32.mrf.mxu0
    %3673 = vmatprep.mubr.f32.mxu0 0.0
    %3674 = vmatmul.mubr.f32.gmra.mxu0 %v3596
    %v3675 = vpop.f32.mrf.mxu0
    %v3676 = vadd.f32 %v48, %v3675
    %v3677 = vpop.f32.mrf.mxu0
    %3678 = vdwg.mxu0
    %v3680 = vsel %vm1069, %v2843, 0
    %v3683 = vsel %vm1069, %v2911, 0
    %v3686 = vsel %vm1069, %v3139, 0
    %v3689 = vsel %vm1069, %v3207, 0
    %3691 = vmatprep.subr.mxu0 0.0
    %3692 = vmatpush1.xpose.msra.mxu0 0.0
    %3693 = vmatprep.subr.mxu0 0.0
    %3694 = vmatpush1.xpose.msra.mxu0 0.0
    %3695 = vmatprep.subr.mxu0 0.0
    %3696 = vmatpush1.xpose.msra.mxu0 0.0
    %3697 = vmatprep.subr.mxu0 0.0
    %3698 = vmatpush1.xpose.msra.mxu0 0.0
    %3699 = vmatprep.subr.mxu0 0.0
    %3700 = vmatpush1.xpose.msra.mxu0 0.0
    %3701 = vmatprep.subr.mxu0 0.0
    %3702 = vmatpush1.xpose.msra.mxu0 0.0
    %3703 = vmatprep.subr.mxu0 0.0
    %3704 = vmatpush1.xpose.msra.mxu0 0.0
    %3705 = vmatprep.subr.mxu0 0.0
    %3706 = vmatpush1.xpose.msra.mxu0 0.0
    %3707 = vmatprep.subr.mxu0 0.0
    %3708 = vmatpush1.xpose.msra.mxu0 0.0
    %3709 = vmatprep.subr.mxu0 0.0
    %3710 = vmatpush1.xpose.msra.mxu0 0.0
    %3711 = vmatprep.subr.mxu0 0.0
    %3712 = vmatpush1.xpose.msra.mxu0 0.0
    %3713 = vmatprep.subr.mxu0 0.0
    %3714 = vmatpush1.xpose.msra.mxu0 0.0
    %3715 = vmatprep.subr.mxu0 0.0
    %3716 = vmatpush1.xpose.msra.mxu0 0.0
    %3717 = vmatprep.subr.mxu0 0.0
    %3718 = vmatpush1.xpose.msra.mxu0 0.0
    %3719 = vmatprep.subr.mxu0 0.0
    %3720 = vmatpush1.xpose.msra.mxu0 %v3689
    %3721 = vmatprep.subr.mxu0 0.0
    %3722 = vmatpush1.xpose.msra.mxu0 %v3686
    %3723 = vmatprep.subr.mxu0 0.0
    %3724 = vmatpush2.xpose.msra.mxu0 0.0
    %3725 = vmatprep.subr.mxu0 0.0
    %3726 = vmatpush2.xpose.msra.mxu0 0.0
    %3727 = vmatprep.subr.mxu0 0.0
    %3728 = vmatpush2.xpose.msra.mxu0 0.0
    %3729 = vmatprep.subr.mxu0 0.0
    %3730 = vmatpush2.xpose.msra.mxu0 0.0
    %3731 = vmatprep.subr.mxu0 0.0
    %3732 = vmatpush2.xpose.msra.mxu0 0.0
    %3733 = vmatprep.subr.mxu0 0.0
    %3734 = vmatpush2.xpose.msra.mxu0 0.0
    %3735 = vmatprep.subr.mxu0 0.0
    %3736 = vmatpush2.xpose.msra.mxu0 0.0
    %3737 = vmatprep.subr.mxu0 0.0
    %3738 = vmatpush2.xpose.msra.mxu0 0.0
    %3739 = vmatprep.subr.mxu0 0.0
    %3740 = vmatpush2.xpose.msra.mxu0 0.0
    %3741 = vmatprep.subr.mxu0 0.0
    %3742 = vmatpush2.xpose.msra.mxu0 0.0
    %3743 = vmatprep.subr.mxu0 0.0
    %3744 = vmatpush2.xpose.msra.mxu0 0.0
    %3745 = vmatprep.subr.mxu0 0.0
    %3746 = vmatpush2.xpose.msra.mxu0 0.0
    %3747 = vmatprep.subr.mxu0 0.0
    %3748 = vmatpush2.xpose.msra.mxu0 0.0
    %3749 = vmatprep.subr.mxu0 0.0
    %3750 = vmatpush2.xpose.msra.mxu0 0.0
    %3751 = vmatprep.subr.mxu0 0.0
    %3752 = vmatpush2.xpose.msra.mxu0 0.0
    %3753 = vmatprep.subr.mxu0 0.0
    %3754 = vmatpush2.xpose.msra.mxu0 0.0
    %3755 = vmatprep.mubr.f32.mxu0 0.0
    %3756 = vmatmul.mubr.f32.gmra.mxu0 %v3680
    %v3757 = vpop.f32.mrf.mxu0
    %v3758 = vadd.f32 %v47, %v3757
    %v3759 = vpop.f32.mrf.mxu0
    %3760 = vmatprep.mubr.f32.mxu0 0.0
    %3761 = vmatmul.mubr.f32.gmra.mxu0 %v3683
    %v3762 = vpop.f32.mrf.mxu0
    %v3763 = vadd.f32 %v48, %v3762
    %v3764 = vpop.f32.mrf.mxu0
    %3765 = vdwg.mxu0
    %v3767 = vsel %vm1069, %v2844, 0
    %v3770 = vsel %vm1069, %v2912, 0
    %v3773 = vsel %vm1069, %v3140, 0
    %v3776 = vsel %vm1069, %v3208, 0
    %3778 = vmatprep.subr.mxu0 0.0
    %3779 = vmatpush1.xpose.msra.mxu0 0.0
    %3780 = vmatprep.subr.mxu0 0.0
    %3781 = vmatpush1.xpose.msra.mxu0 0.0
    %3782 = vmatprep.subr.mxu0 0.0
    %3783 = vmatpush1.xpose.msra.mxu0 0.0
    %3784 = vmatprep.subr.mxu0 0.0
    %3785 = vmatpush1.xpose.msra.mxu0 0.0
    %3786 = vmatprep.subr.mxu0 0.0
    %3787 = vmatpush1.xpose.msra.mxu0 0.0
    %3788 = vmatprep.subr.mxu0 0.0
    %3789 = vmatpush1.xpose.msra.mxu0 0.0
    %3790 = vmatprep.subr.mxu0 0.0
    %3791 = vmatpush1.xpose.msra.mxu0 0.0
    %3792 = vmatprep.subr.mxu0 0.0
    %3793 = vmatpush1.xpose.msra.mxu0 0.0
    %3794 = vmatprep.subr.mxu0 0.0
    %3795 = vmatpush1.xpose.msra.mxu0 0.0
    %3796 = vmatprep.subr.mxu0 0.0
    %3797 = vmatpush1.xpose.msra.mxu0 0.0
    %3798 = vmatprep.subr.mxu0 0.0
    %3799 = vmatpush1.xpose.msra.mxu0 0.0
    %3800 = vmatprep.subr.mxu0 0.0
    %3801 = vmatpush1.xpose.msra.mxu0 0.0
    %3802 = vmatprep.subr.mxu0 0.0
    %3803 = vmatpush1.xpose.msra.mxu0 0.0
    %3804 = vmatprep.subr.mxu0 0.0
    %3805 = vmatpush1.xpose.msra.mxu0 0.0
    %3806 = vmatprep.subr.mxu0 0.0
    %3807 = vmatpush1.xpose.msra.mxu0 %v3776
    %3808 = vmatprep.subr.mxu0 0.0
    %3809 = vmatpush1.xpose.msra.mxu0 %v3773
    %3810 = vmatprep.subr.mxu0 0.0
    %3811 = vmatpush2.xpose.msra.mxu0 0.0
    %3812 = vmatprep.subr.mxu0 0.0
    %3813 = vmatpush2.xpose.msra.mxu0 0.0
    %3814 = vmatprep.subr.mxu0 0.0
    %3815 = vmatpush2.xpose.msra.mxu0 0.0
    %3816 = vmatprep.subr.mxu0 0.0
    %3817 = vmatpush2.xpose.msra.mxu0 0.0
    %3818 = vmatprep.subr.mxu0 0.0
    %3819 = vmatpush2.xpose.msra.mxu0 0.0
    %3820 = vmatprep.subr.mxu0 0.0
    %3821 = vmatpush2.xpose.msra.mxu0 0.0
    %3822 = vmatprep.subr.mxu0 0.0
    %3823 = vmatpush2.xpose.msra.mxu0 0.0
    %3824 = vmatprep.subr.mxu0 0.0
    %3825 = vmatpush2.xpose.msra.mxu0 0.0
    %3826 = vmatprep.subr.mxu0 0.0
    %3827 = vmatpush2.xpose.msra.mxu0 0.0
    %3828 = vmatprep.subr.mxu0 0.0
    %3829 = vmatpush2.xpose.msra.mxu0 0.0
    %3830 = vmatprep.subr.mxu0 0.0
    %3831 = vmatpush2.xpose.msra.mxu0 0.0
    %3832 = vmatprep.subr.mxu0 0.0
    %3833 = vmatpush2.xpose.msra.mxu0 0.0
    %3834 = vmatprep.subr.mxu0 0.0
    %3835 = vmatpush2.xpose.msra.mxu0 0.0
    %3836 = vmatprep.subr.mxu0 0.0
    %3837 = vmatpush2.xpose.msra.mxu0 0.0
    %3838 = vmatprep.subr.mxu0 0.0
    %3839 = vmatpush2.xpose.msra.mxu0 0.0
    %3840 = vmatprep.subr.mxu0 0.0
    %3841 = vmatpush2.xpose.msra.mxu0 0.0
    %3842 = vmatprep.mubr.f32.mxu0 0.0
    %3843 = vmatmul.mubr.f32.gmra.mxu0 %v3767
    %v3844 = vpop.f32.mrf.mxu0
    %v3845 = vadd.f32 %v47, %v3844
    %v3846 = vpop.f32.mrf.mxu0
    %3847 = vmatprep.mubr.f32.mxu0 0.0
    %3848 = vmatmul.mubr.f32.gmra.mxu0 %v3770
    %v3849 = vpop.f32.mrf.mxu0
    %v3850 = vadd.f32 %v48, %v3849
    %v3851 = vpop.f32.mrf.mxu0
    %3852 = vdwg.mxu0
    %v3853 = vsel %vm1418, %v3584, -inf
    %3854 = vmax.xlane.f32.xlu0 %v3853
    %v3855 = vpop.xlane.xlu0 %3854
    %v3856 = vsel %vm1418, %v3589, -inf
    %3857 = vmax.xlane.f32.xlu0 %v3856
    %v3858 = vpop.xlane.xlu0 %3857
    %v3859 = vsel %vm1418, %v3671, -inf
    %3860 = vmax.xlane.f32.xlu0 %v3859
    %v3861 = vpop.xlane.xlu0 %3860
    %v3862 = vsel %vm1418, %v3676, -inf
    %3863 = vmax.xlane.f32.xlu0 %v3862
    %v3864 = vpop.xlane.xlu0 %3863
    %v3865 = vsel %vm1418, %v3758, -inf
    %3866 = vmax.xlane.f32.xlu0 %v3865
    %v3867 = vpop.xlane.xlu0 %3866
    %v3868 = vsel %vm1418, %v3763, -inf
    %3869 = vmax.xlane.f32.xlu0 %v3868
    %v3870 = vpop.xlane.xlu0 %3869
    %v3871 = vsel %vm1418, %v3845, -inf
    %3872 = vmax.xlane.f32.xlu0 %v3871
    %v3873 = vpop.xlane.xlu0 %3872
    %v3874 = vsel %vm1418, %v3850, -inf
    %3875 = vmax.xlane.f32.xlu0 %v3874
    %v3876 = vpop.xlane.xlu0 %3875
    %v3877 = vsub.f32 %v3584, %v3855
    %v3878 = vsub.f32 %v3589, %v3858
    %v3879 = vsub.f32 %v3671, %v3861
    %v3880 = vsub.f32 %v3676, %v3864
    %v3881 = vsub.f32 %v3758, %v3867
    %v3882 = vsub.f32 %v3763, %v3870
    %v3883 = vsub.f32 %v3845, %v3873
    %v3884 = vsub.f32 %v3850, %v3876
    %v3885 = vmul.f32 %v3877, 1.442695
    %v3886 = vpow.pop %v3885
    %v3887 = vmul.f32 %v3878, 1.442695
    %v3888 = vpow.pop %v3887
    %v3889 = vmul.f32 %v3879, 1.442695
    %v3890 = vpow.pop %v3889
    %v3891 = vmul.f32 %v3880, 1.442695
    %v3892 = vpow.pop %v3891
    %v3893 = vmul.f32 %v3881, 1.442695
    %v3894 = vpow.pop %v3893
    %v3895 = vmul.f32 %v3882, 1.442695
    %v3896 = vpow.pop %v3895
    %v3897 = vmul.f32 %v3883, 1.442695
    %v3898 = vpow.pop %v3897
    %v3899 = vmul.f32 %v3884, 1.442695
    %v3900 = vpow.pop %v3899
    %v3901 = vsel %vm1418, %v3886, 0.0
    %3902 = vadd.xlane.f32.xlu0 %v3901
    %v3903 = vpop.xlane.xlu0 %3902
    %v3904 = vsel %vm1418, %v3888, 0.0
    %3905 = vadd.xlane.f32.xlu0 %v3904
    %v3906 = vpop.xlane.xlu0 %3905
    %v3907 = vsel %vm1418, %v3890, 0.0
    %3908 = vadd.xlane.f32.xlu0 %v3907
    %v3909 = vpop.xlane.xlu0 %3908
    %v3910 = vsel %vm1418, %v3892, 0.0
    %3911 = vadd.xlane.f32.xlu0 %v3910
    %v3912 = vpop.xlane.xlu0 %3911
    %v3913 = vsel %vm1418, %v3894, 0.0
    %3914 = vadd.xlane.f32.xlu0 %v3913
    %v3915 = vpop.xlane.xlu0 %3914
    %v3916 = vsel %vm1418, %v3896, 0.0
    %3917 = vadd.xlane.f32.xlu0 %v3916
    %v3918 = vpop.xlane.xlu0 %3917
    %v3919 = vsel %vm1418, %v3898, 0.0
    %3920 = vadd.xlane.f32.xlu0 %v3919
    %v3921 = vpop.xlane.xlu0 %3920
    %v3922 = vsel %vm1418, %v3900, 0.0
    %3923 = vadd.xlane.f32.xlu0 %v3922
    %v3924 = vpop.xlane.xlu0 %3923
    %v3925 = vrcp.pop %v3903
    %v3926 = vrcp.pop %v3906
    %v3927 = vrcp.pop %v3909
    %v3928 = vrcp.pop %v3912
    %v3929 = vrcp.pop %v3915
    %v3930 = vrcp.pop %v3918
    %v3931 = vrcp.pop %v3921
    %v3932 = vrcp.pop %v3924
    %v3933 = vmul.f32 %v3886, %v3925
    %v3934 = vmul.f32 %v3888, %v3926
    %v3935 = vmul.f32 %v3890, %v3927
    %v3936 = vmul.f32 %v3892, %v3928
    %v3937 = vmul.f32 %v3894, %v3929
    %v3938 = vmul.f32 %v3896, %v3930
    %v3939 = vmul.f32 %v3898, %v3931
    %v3940 = vmul.f32 %v3900, %v3932
    %v3942 = vsel %vm1418, %v3933, 0
    %v3945 = vsel %vm1418, %v3934, 0
    %3947 = vmatprep.subr.mxu0 0.0
    %3948 = vmatpush1.msra.mxu0 0.0
    %3949 = vmatprep.subr.mxu0 0.0
    %3950 = vmatpush1.msra.mxu0 0.0
    %3951 = vmatprep.subr.mxu0 0.0
    %3952 = vmatpush1.msra.mxu0 0.0
    %3953 = vmatprep.subr.mxu0 0.0
    %3954 = vmatpush1.msra.mxu0 0.0
    %3955 = vmatprep.subr.mxu0 0.0
    %3956 = vmatpush1.msra.mxu0 0.0
    %3957 = vmatprep.subr.mxu0 0.0
    %3958 = vmatpush1.msra.mxu0 0.0
    %3959 = vmatprep.subr.mxu0 0.0
    %3960 = vmatpush1.msra.mxu0 0.0
    %3961 = vmatprep.subr.mxu0 0.0
    %3962 = vmatpush1.msra.mxu0 0.0
    %3963 = vmatprep.subr.mxu0 0.0
    %3964 = vmatpush1.msra.mxu0 0.0
    %3965 = vmatprep.subr.mxu0 0.0
    %3966 = vmatpush1.msra.mxu0 0.0
    %3967 = vmatprep.subr.mxu0 0.0
    %3968 = vmatpush1.msra.mxu0 0.0
    %3969 = vmatprep.subr.mxu0 0.0
    %3970 = vmatpush1.msra.mxu0 0.0
    %3971 = vmatprep.subr.mxu0 0.0
    %3972 = vmatpush1.msra.mxu0 0.0
    %3973 = vmatprep.subr.mxu0 0.0
    %3974 = vmatpush1.msra.mxu0 0.0
    %3975 = vmatprep.subr.mxu0 0.0
    %3976 = vmatpush1.msra.mxu0 %v3501
    %3977 = vmatprep.subr.mxu0 0.0
    %3978 = vmatpush1.msra.mxu0 %v3433
    %3979 = vmatprep.subr.mxu0 0.0
    %3980 = vmatpush2.msra.mxu0 0.0
    %3981 = vmatprep.subr.mxu0 0.0
    %3982 = vmatpush2.msra.mxu0 0.0
    %3983 = vmatprep.subr.mxu0 0.0
    %3984 = vmatpush2.msra.mxu0 0.0
    %3985 = vmatprep.subr.mxu0 0.0
    %3986 = vmatpush2.msra.mxu0 0.0
    %3987 = vmatprep.subr.mxu0 0.0
    %3988 = vmatpush2.msra.mxu0 0.0
    %3989 = vmatprep.subr.mxu0 0.0
    %3990 = vmatpush2.msra.mxu0 0.0
    %3991 = vmatprep.subr.mxu0 0.0
    %3992 = vmatpush2.msra.mxu0 0.0
    %3993 = vmatprep.subr.mxu0 0.0
    %3994 = vmatpush2.msra.mxu0 0.0
    %3995 = vmatprep.subr.mxu0 0.0
    %3996 = vmatpush2.msra.mxu0 0.0
    %3997 = vmatprep.subr.mxu0 0.0
    %3998 = vmatpush2.msra.mxu0 0.0
    %3999 = vmatprep.subr.mxu0 0.0
    %4000 = vmatpush2.msra.mxu0 0.0
    %4001 = vmatprep.subr.mxu0 0.0
    %4002 = vmatpush2.msra.mxu0 0.0
    %4003 = vmatprep.subr.mxu0 0.0
    %4004 = vmatpush2.msra.mxu0 0.0
    %4005 = vmatprep.subr.mxu0 0.0
    %4006 = vmatpush2.msra.mxu0 0.0
    %4007 = vmatprep.subr.mxu0 0.0
    %4008 = vmatpush2.msra.mxu0 0.0
    %4009 = vmatprep.subr.mxu0 0.0
    %4010 = vmatpush2.msra.mxu0 0.0
    %4011 = vmatprep.mubr.f32.mxu0 0.0
    %4012 = vmatmul.mubr.f32.gmra.mxu0 %v3942
    %v4013 = vpop.f32.mrf.mxu0
    %v4014 = vadd.f32 0.0, %v4013
    %v4015 = vpop.f32.mrf.mxu0
    %4016 = vmatprep.mubr.f32.mxu0 0.0
    %4017 = vmatmul.mubr.f32.gmra.mxu0 %v3945
    %v4018 = vpop.f32.mrf.mxu0
    %v4019 = vadd.f32 0.0, %v4018
    %v4020 = vpop.f32.mrf.mxu0
    %4021 = vdwg.mxu0
    %v4023 = vsel %vm1418, %v3935, 0
    %v4026 = vsel %vm1418, %v3936, 0
    %4028 = vmatprep.subr.mxu0 0.0
    %4029 = vmatpush1.msra.mxu0 0.0
    %4030 = vmatprep.subr.mxu0 0.0
    %4031 = vmatpush1.msra.mxu0 0.0
    %4032 = vmatprep.subr.mxu0 0.0
    %4033 = vmatpush1.msra.mxu0 0.0
    %4034 = vmatprep.subr.mxu0 0.0
    %4035 = vmatpush1.msra.mxu0 0.0
    %4036 = vmatprep.subr.mxu0 0.0
    %4037 = vmatpush1.msra.mxu0 0.0
    %4038 = vmatprep.subr.mxu0 0.0
    %4039 = vmatpush1.msra.mxu0 0.0
    %4040 = vmatprep.subr.mxu0 0.0
    %4041 = vmatpush1.msra.mxu0 0.0
    %4042 = vmatprep.subr.mxu0 0.0
    %4043 = vmatpush1.msra.mxu0 0.0
    %4044 = vmatprep.subr.mxu0 0.0
    %4045 = vmatpush1.msra.mxu0 0.0
    %4046 = vmatprep.subr.mxu0 0.0
    %4047 = vmatpush1.msra.mxu0 0.0
    %4048 = vmatprep.subr.mxu0 0.0
    %4049 = vmatpush1.msra.mxu0 0.0
    %4050 = vmatprep.subr.mxu0 0.0
    %4051 = vmatpush1.msra.mxu0 0.0
    %4052 = vmatprep.subr.mxu0 0.0
    %4053 = vmatpush1.msra.mxu0 0.0
    %4054 = vmatprep.subr.mxu0 0.0
    %4055 = vmatpush1.msra.mxu0 0.0
    %4056 = vmatprep.subr.mxu0 0.0
    %4057 = vmatpush1.msra.mxu0 %v3502
    %4058 = vmatprep.subr.mxu0 0.0
    %4059 = vmatpush1.msra.mxu0 %v3434
    %4060 = vmatprep.subr.mxu0 0.0
    %4061 = vmatpush2.msra.mxu0 0.0
    %4062 = vmatprep.subr.mxu0 0.0
    %4063 = vmatpush2.msra.mxu0 0.0
    %4064 = vmatprep.subr.mxu0 0.0
    %4065 = vmatpush2.msra.mxu0 0.0
    %4066 = vmatprep.subr.mxu0 0.0
    %4067 = vmatpush2.msra.mxu0 0.0
    %4068 = vmatprep.subr.mxu0 0.0
    %4069 = vmatpush2.msra.mxu0 0.0
    %4070 = vmatprep.subr.mxu0 0.0
    %4071 = vmatpush2.msra.mxu0 0.0
    %4072 = vmatprep.subr.mxu0 0.0
    %4073 = vmatpush2.msra.mxu0 0.0
    %4074 = vmatprep.subr.mxu0 0.0
    %4075 = vmatpush2.msra.mxu0 0.0
    %4076 = vmatprep.subr.mxu0 0.0
    %4077 = vmatpush2.msra.mxu0 0.0
    %4078 = vmatprep.subr.mxu0 0.0
    %4079 = vmatpush2.msra.mxu0 0.0
    %4080 = vmatprep.subr.mxu0 0.0
    %4081 = vmatpush2.msra.mxu0 0.0
    %4082 = vmatprep.subr.mxu0 0.0
    %4083 = vmatpush2.msra.mxu0 0.0
    %4084 = vmatprep.subr.mxu0 0.0
    %4085 = vmatpush2.msra.mxu0 0.0
    %4086 = vmatprep.subr.mxu0 0.0
    %4087 = vmatpush2.msra.mxu0 0.0
    %4088 = vmatprep.subr.mxu0 0.0
    %4089 = vmatpush2.msra.mxu0 0.0
    %4090 = vmatprep.subr.mxu0 0.0
    %4091 = vmatpush2.msra.mxu0 0.0
    %4092 = vmatprep.mubr.f32.mxu0 0.0
    %4093 = vmatmul.mubr.f32.gmra.mxu0 %v4023
    %v4094 = vpop.f32.mrf.mxu0
    %v4095 = vadd.f32 0.0, %v4094
    %v4096 = vpop.f32.mrf.mxu0
    %4097 = vmatprep.mubr.f32.mxu0 0.0
    %4098 = vmatmul.mubr.f32.gmra.mxu0 %v4026
    %v4099 = vpop.f32.mrf.mxu0
    %v4100 = vadd.f32 0.0, %v4099
    %v4101 = vpop.f32.mrf.mxu0
    %4102 = vdwg.mxu0
    %v4104 = vsel %vm1418, %v3937, 0
    %v4107 = vsel %vm1418, %v3938, 0
    %4109 = vmatprep.subr.mxu0 0.0
    %4110 = vmatpush1.msra.mxu0 0.0
    %4111 = vmatprep.subr.mxu0 0.0
    %4112 = vmatpush1.msra.mxu0 0.0
    %4113 = vmatprep.subr.mxu0 0.0
    %4114 = vmatpush1.msra.mxu0 0.0
    %4115 = vmatprep.subr.mxu0 0.0
    %4116 = vmatpush1.msra.mxu0 0.0
    %4117 = vmatprep.subr.mxu0 0.0
    %4118 = vmatpush1.msra.mxu0 0.0
    %4119 = vmatprep.subr.mxu0 0.0
    %4120 = vmatpush1.msra.mxu0 0.0
    %4121 = vmatprep.subr.mxu0 0.0
    %4122 = vmatpush1.msra.mxu0 0.0
    %4123 = vmatprep.subr.mxu0 0.0
    %4124 = vmatpush1.msra.mxu0 0.0
    %4125 = vmatprep.subr.mxu0 0.0
    %4126 = vmatpush1.msra.mxu0 0.0
    %4127 = vmatprep.subr.mxu0 0.0
    %4128 = vmatpush1.msra.mxu0 0.0
    %4129 = vmatprep.subr.mxu0 0.0
    %4130 = vmatpush1.msra.mxu0 0.0
    %4131 = vmatprep.subr.mxu0 0.0
    %4132 = vmatpush1.msra.mxu0 0.0
    %4133 = vmatprep.subr.mxu0 0.0
    %4134 = vmatpush1.msra.mxu0 0.0
    %4135 = vmatprep.subr.mxu0 0.0
    %4136 = vmatpush1.msra.mxu0 0.0
    %4137 = vmatprep.subr.mxu0 0.0
    %4138 = vmatpush1.msra.mxu0 %v3503
    %4139 = vmatprep.subr.mxu0 0.0
    %4140 = vmatpush1.msra.mxu0 %v3435
    %4141 = vmatprep.subr.mxu0 0.0
    %4142 = vmatpush2.msra.mxu0 0.0
    %4143 = vmatprep.subr.mxu0 0.0
    %4144 = vmatpush2.msra.mxu0 0.0
    %4145 = vmatprep.subr.mxu0 0.0
    %4146 = vmatpush2.msra.mxu0 0.0
    %4147 = vmatprep.subr.mxu0 0.0
    %4148 = vmatpush2.msra.mxu0 0.0
    %4149 = vmatprep.subr.mxu0 0.0
    %4150 = vmatpush2.msra.mxu0 0.0
    %4151 = vmatprep.subr.mxu0 0.0
    %4152 = vmatpush2.msra.mxu0 0.0
    %4153 = vmatprep.subr.mxu0 0.0
    %4154 = vmatpush2.msra.mxu0 0.0
    %4155 = vmatprep.subr.mxu0 0.0
    %4156 = vmatpush2.msra.mxu0 0.0
    %4157 = vmatprep.subr.mxu0 0.0
    %4158 = vmatpush2.msra.mxu0 0.0
    %4159 = vmatprep.subr.mxu0 0.0
    %4160 = vmatpush2.msra.mxu0 0.0
    %4161 = vmatprep.subr.mxu0 0.0
    %4162 = vmatpush2.msra.mxu0 0.0
    %4163 = vmatprep.subr.mxu0 0.0
    %4164 = vmatpush2.msra.mxu0 0.0
    %4165 = vmatprep.subr.mxu0 0.0
    %4166 = vmatpush2.msra.mxu0 0.0
    %4167 = vmatprep.subr.mxu0 0.0
    %4168 = vmatpush2.msra.mxu0 0.0
    %4169 = vmatprep.subr.mxu0 0.0
    %4170 = vmatpush2.msra.mxu0 0.0
    %4171 = vmatprep.subr.mxu0 0.0
    %4172 = vmatpush2.msra.mxu0 0.0
    %4173 = vmatprep.mubr.f32.mxu0 0.0
    %4174 = vmatmul.mubr.f32.gmra.mxu0 %v4104
    %v4175 = vpop.f32.mrf.mxu0
    %v4176 = vadd.f32 0.0, %v4175
    %v4177 = vpop.f32.mrf.mxu0
    %4178 = vmatprep.mubr.f32.mxu0 0.0
    %4179 = vmatmul.mubr.f32.gmra.mxu0 %v4107
    %v4180 = vpop.f32.mrf.mxu0
    %v4181 = vadd.f32 0.0, %v4180
    %v4182 = vpop.f32.mrf.mxu0
    %4183 = vdwg.mxu0
    %v4185 = vsel %vm1418, %v3939, 0
    %v4188 = vsel %vm1418, %v3940, 0
    %4190 = vmatprep.subr.mxu0 0.0
    %4191 = vmatpush1.msra.mxu0 0.0
    %4192 = vmatprep.subr.mxu0 0.0
    %4193 = vmatpush1.msra.mxu0 0.0
    %4194 = vmatprep.subr.mxu0 0.0
    %4195 = vmatpush1.msra.mxu0 0.0
    %4196 = vmatprep.subr.mxu0 0.0
    %4197 = vmatpush1.msra.mxu0 0.0
    %4198 = vmatprep.subr.mxu0 0.0
    %4199 = vmatpush1.msra.mxu0 0.0
    %4200 = vmatprep.subr.mxu0 0.0
    %4201 = vmatpush1.msra.mxu0 0.0
    %4202 = vmatprep.subr.mxu0 0.0
    %4203 = vmatpush1.msra.mxu0 0.0
    %4204 = vmatprep.subr.mxu0 0.0
    %4205 = vmatpush1.msra.mxu0 0.0
    %4206 = vmatprep.subr.mxu0 0.0
    %4207 = vmatpush1.msra.mxu0 0.0
    %4208 = vmatprep.subr.mxu0 0.0
    %4209 = vmatpush1.msra.mxu0 0.0
    %4210 = vmatprep.subr.mxu0 0.0
    %4211 = vmatpush1.msra.mxu0 0.0
    %4212 = vmatprep.subr.mxu0 0.0
    %4213 = vmatpush1.msra.mxu0 0.0
    %4214 = vmatprep.subr.mxu0 0.0
    %4215 = vmatpush1.msra.mxu0 0.0
    %4216 = vmatprep.subr.mxu0 0.0
    %4217 = vmatpush1.msra.mxu0 0.0
    %4218 = vmatprep.subr.mxu0 0.0
    %4219 = vmatpush1.msra.mxu0 %v3504
    %4220 = vmatprep.subr.mxu0 0.0
    %4221 = vmatpush1.msra.mxu0 %v3436
    %4222 = vmatprep.subr.mxu0 0.0
    %4223 = vmatpush2.msra.mxu0 0.0
    %4224 = vmatprep.subr.mxu0 0.0
    %4225 = vmatpush2.msra.mxu0 0.0
    %4226 = vmatprep.subr.mxu0 0.0
    %4227 = vmatpush2.msra.mxu0 0.0
    %4228 = vmatprep.subr.mxu0 0.0
    %4229 = vmatpush2.msra.mxu0 0.0
    %4230 = vmatprep.subr.mxu0 0.0
    %4231 = vmatpush2.msra.mxu0 0.0
    %4232 = vmatprep.subr.mxu0 0.0
    %4233 = vmatpush2.msra.mxu0 0.0
    %4234 = vmatprep.subr.mxu0 0.0
    %4235 = vmatpush2.msra.mxu0 0.0
    %4236 = vmatprep.subr.mxu0 0.0
    %4237 = vmatpush2.msra.mxu0 0.0
    %4238 = vmatprep.subr.mxu0 0.0
    %4239 = vmatpush2.msra.mxu0 0.0
    %4240 = vmatprep.subr.mxu0 0.0
    %4241 = vmatpush2.msra.mxu0 0.0
    %4242 = vmatprep.subr.mxu0 0.0
    %4243 = vmatpush2.msra.mxu0 0.0
    %4244 = vmatprep.subr.mxu0 0.0
    %4245 = vmatpush2.msra.mxu0 0.0
    %4246 = vmatprep.subr.mxu0 0.0
    %4247 = vmatpush2.msra.mxu0 0.0
    %4248 = vmatprep.subr.mxu0 0.0
    %4249 = vmatpush2.msra.mxu0 0.0
    %4250 = vmatprep.subr.mxu0 0.0
    %4251 = vmatpush2.msra.mxu0 0.0
    %4252 = vmatprep.subr.mxu0 0.0
    %4253 = vmatpush2.msra.mxu0 0.0
    %4254 = vmatprep.mubr.f32.mxu0 0.0
    %4255 = vmatmul.mubr.f32.gmra.mxu0 %v4185
    %v4256 = vpop.f32.mrf.mxu0
    %v4257 = vadd.f32 0.0, %v4256
    %v4258 = vpop.f32.mrf.mxu0
    %4259 = vmatprep.mubr.f32.mxu0 0.0
    %4260 = vmatmul.mubr.f32.gmra.mxu0 %v4188
    %v4261 = vpop.f32.mrf.mxu0
    %v4262 = vadd.f32 0.0, %v4261
    %v4263 = vpop.f32.mrf.mxu0
    %4264 = vdwg.mxu0
    %v4265 = vcombine.low %v4014, %v4176
    %v4266 = vcombine.high %v4014, %v4176
    %v4268 = vunpack.c.l.s4 1983009808
    %v4269 = vunpack.c.0.s8 %v4268
    %v4270 = vlaneseq
    %v4271 = vshrl.u32 %v4270, 7
    %v4272 = vsub.s32 %v4269, %v4271
    %v4273 = vrot.slane %v4265, %v4272
    %v4275 = vunpack.c.l.s4 1983009808
    %v4276 = vunpack.c.0.s8 %v4275
    %v4277 = vlaneseq
    %v4278 = vshrl.u32 %v4277, 7
    %v4279 = vsub.s32 %v4276, %v4278
    %v4280 = vrot.slane %v4266, %v4279
    %v4281 = vcombine.low %v4095, %v4257
    %v4282 = vcombine.high %v4095, %v4257
    %v4284 = vunpack.c.l.s4 1983009808
    %v4285 = vunpack.c.0.s8 %v4284
    %v4286 = vlaneseq
    %v4287 = vshrl.u32 %v4286, 7
    %v4288 = vsub.s32 %v4285, %v4287
    %v4289 = vrot.slane %v4281, %v4288
    %v4291 = vunpack.c.l.s4 1983009808
    %v4292 = vunpack.c.0.s8 %v4291
    %v4293 = vlaneseq
    %v4294 = vshrl.u32 %v4293, 7
    %v4295 = vsub.s32 %v4292, %v4294
    %v4296 = vrot.slane %v4282, %v4295
    %v4297 = vcombine.low %v4273, %v4289
    %v4298 = vcombine.high %v4273, %v4289
    %v4300 = vunpack.c.l.s4 1934713408
    %v4301 = vunpack.c.0.s8 %v4300
    %v4302 = vlaneseq
    %v4303 = vshrl.u32 %v4302, 7
    %v4304 = vsub.s32 %v4301, %v4303
    %v4305 = vrot.slane %v4297, %v4304
    %v4307 = vunpack.c.l.s4 1934713408
    %v4308 = vunpack.c.0.s8 %v4307
    %v4309 = vlaneseq
    %v4310 = vshrl.u32 %v4309, 7
    %v4311 = vsub.s32 %v4308, %v4310
    %v4312 = vrot.slane %v4298, %v4311
    %v4313 = vcombine.low %v4280, %v4296
    %v4314 = vcombine.high %v4280, %v4296
    %v4316 = vunpack.c.l.s4 1934713408
    %v4317 = vunpack.c.0.s8 %v4316
    %v4318 = vlaneseq
    %v4319 = vshrl.u32 %v4318, 7
    %v4320 = vsub.s32 %v4317, %v4319
    %v4321 = vrot.slane %v4313, %v4320
    %v4323 = vunpack.c.l.s4 1934713408
    %v4324 = vunpack.c.0.s8 %v4323
    %v4325 = vlaneseq
    %v4326 = vshrl.u32 %v4325, 7
    %v4327 = vsub.s32 %v4324, %v4326
    %v4328 = vrot.slane %v4314, %v4327
    %v4329 = vcombine.high %v4305, 0.0
    %v4330 = vcombine.high %v4312, 0.0
    %v4331 = vcombine.high %v4321, 0.0
    %v4332 = vcombine.high %v4328, 0.0
    %v4333 = vcombine.low %v4019, %v4181
    %v4334 = vcombine.high %v4019, %v4181
    %v4336 = vunpack.c.l.s4 1983009808
    %v4337 = vunpack.c.0.s8 %v4336
    %v4338 = vlaneseq
    %v4339 = vshrl.u32 %v4338, 7
    %v4340 = vsub.s32 %v4337, %v4339
    %v4341 = vrot.slane %v4333, %v4340
    %v4343 = vunpack.c.l.s4 1983009808
    %v4344 = vunpack.c.0.s8 %v4343
    %v4345 = vlaneseq
    %v4346 = vshrl.u32 %v4345, 7
    %v4347 = vsub.s32 %v4344, %v4346
    %v4348 = vrot.slane %v4334, %v4347
    %v4349 = vcombine.low %v4100, %v4262
    %v4350 = vcombine.high %v4100, %v4262
    %v4352 = vunpack.c.l.s4 1983009808
    %v4353 = vunpack.c.0.s8 %v4352
    %v4354 = vlaneseq
    %v4355 = vshrl.u32 %v4354, 7
    %v4356 = vsub.s32 %v4353, %v4355
    %v4357 = vrot.slane %v4349, %v4356
    %v4359 = vunpack.c.l.s4 1983009808
    %v4360 = vunpack.c.0.s8 %v4359
    %v4361 = vlaneseq
    %v4362 = vshrl.u32 %v4361, 7
    %v4363 = vsub.s32 %v4360, %v4362
    %v4364 = vrot.slane %v4350, %v4363
    %v4365 = vcombine.low %v4341, %v4357
    %v4366 = vcombine.high %v4341, %v4357
    %v4368 = vunpack.c.l.s4 1934713408
    %v4369 = vunpack.c.0.s8 %v4368
    %v4370 = vlaneseq
    %v4371 = vshrl.u32 %v4370, 7
    %v4372 = vsub.s32 %v4369, %v4371
    %v4373 = vrot.slane %v4365, %v4372
    %v4375 = vunpack.c.l.s4 1934713408
    %v4376 = vunpack.c.0.s8 %v4375
    %v4377 = vlaneseq
    %v4378 = vshrl.u32 %v4377, 7
    %v4379 = vsub.s32 %v4376, %v4378
    %v4380 = vrot.slane %v4366, %v4379
    %v4381 = vcombine.low %v4348, %v4364
    %v4382 = vcombine.high %v4348, %v4364
    %v4384 = vunpack.c.l.s4 1934713408
    %v4385 = vunpack.c.0.s8 %v4384
    %v4386 = vlaneseq
    %v4387 = vshrl.u32 %v4386, 7
    %v4388 = vsub.s32 %v4385, %v4387
    %v4389 = vrot.slane %v4381, %v4388
    %v4391 = vunpack.c.l.s4 1934713408
    %v4392 = vunpack.c.0.s8 %v4391
    %v4393 = vlaneseq
    %v4394 = vshrl.u32 %v4393, 7
    %v4395 = vsub.s32 %v4392, %v4394
    %v4396 = vrot.slane %v4382, %v4395
    %v4397 = vcombine.high %v4373, 0.0
    %v4398 = vcombine.high %v4380, 0.0
    %v4399 = vcombine.high %v4389, 0.0
    %v4400 = vcombine.high %v4396, 0.0
    %v4401 = vcombine.low %v4305, %v4312
    %v4403 = vunpack.c.l.s4 1983009808
    %v4404 = vunpack.c.0.s8 %v4403
    %v4405 = vlaneseq
    %v4406 = vshrl.u32 %v4405, 7
    %v4407 = vsub.s32 %v4404, %v4406
    %v4408 = vrot.slane %v4401, %v4407
    %v4409 = vcombine.low %v4329, %v4330
    %v4411 = vunpack.c.l.s4 1983009808
    %v4412 = vunpack.c.0.s8 %v4411
    %v4413 = vlaneseq
    %v4414 = vshrl.u32 %v4413, 7
    %v4415 = vsub.s32 %v4412, %v4414
    %v4416 = vrot.slane %v4409, %v4415
    %v4417 = vcombine.low %v4321, %v4328
    %v4419 = vunpack.c.l.s4 1983009808
    %v4420 = vunpack.c.0.s8 %v4419
    %v4421 = vlaneseq
    %v4422 = vshrl.u32 %v4421, 7
    %v4423 = vsub.s32 %v4420, %v4422
    %v4424 = vrot.slane %v4417, %v4423
    %v4425 = vcombine.low %v4331, %v4332
    %v4427 = vunpack.c.l.s4 1983009808
    %v4428 = vunpack.c.0.s8 %v4427
    %v4429 = vlaneseq
    %v4430 = vshrl.u32 %v4429, 7
    %v4431 = vsub.s32 %v4428, %v4430
    %v4432 = vrot.slane %v4425, %v4431
    %v4433 = vcombine.low %v4408, %v4416
    %v4434 = vcombine.high %v4408, %v4416
    %v4436 = vunpack.c.l.s4 1934713408
    %v4437 = vunpack.c.0.s8 %v4436
    %v4438 = vlaneseq
    %v4439 = vshrl.u32 %v4438, 7
    %v4440 = vsub.s32 %v4437, %v4439
    %v4441 = vrot.slane %v4433, %v4440
    %v4443 = vunpack.c.l.s4 1934713408
    %v4444 = vunpack.c.0.s8 %v4443
    %v4445 = vlaneseq
    %v4446 = vshrl.u32 %v4445, 7
    %v4447 = vsub.s32 %v4444, %v4446
    %v4448 = vrot.slane %v4434, %v4447
    %v4449 = vcombine.low %v4424, %v4432
    %v4450 = vcombine.high %v4424, %v4432
    %v4452 = vunpack.c.l.s4 1934713408
    %v4453 = vunpack.c.0.s8 %v4452
    %v4454 = vlaneseq
    %v4455 = vshrl.u32 %v4454, 7
    %v4456 = vsub.s32 %v4453, %v4455
    %v4457 = vrot.slane %v4449, %v4456
    %v4459 = vunpack.c.l.s4 1934713408
    %v4460 = vunpack.c.0.s8 %v4459
    %v4461 = vlaneseq
    %v4462 = vshrl.u32 %v4461, 7
    %v4463 = vsub.s32 %v4460, %v4462
    %v4464 = vrot.slane %v4450, %v4463
    %v4465 = vcombine.low %v4441, %v4457
    %v4466 = vcombine.high %v4441, %v4457
    %v4467 = vcombine.low %v4448, %v4464
    %v4468 = vcombine.high %v4448, %v4464
    %v4469 = vcombine.low %v4373, %v4380
    %v4471 = vunpack.c.l.s4 1983009808
    %v4472 = vunpack.c.0.s8 %v4471
    %v4473 = vlaneseq
    %v4474 = vshrl.u32 %v4473, 7
    %v4475 = vsub.s32 %v4472, %v4474
    %v4476 = vrot.slane %v4469, %v4475
    %v4477 = vcombine.low %v4397, %v4398
    %v4479 = vunpack.c.l.s4 1983009808
    %v4480 = vunpack.c.0.s8 %v4479
    %v4481 = vlaneseq
    %v4482 = vshrl.u32 %v4481, 7
    %v4483 = vsub.s32 %v4480, %v4482
    %v4484 = vrot.slane %v4477, %v4483
    %v4485 = vcombine.low %v4389, %v4396
    %v4487 = vunpack.c.l.s4 1983009808
    %v4488 = vunpack.c.0.s8 %v4487
    %v4489 = vlaneseq
    %v4490 = vshrl.u32 %v4489, 7
    %v4491 = vsub.s32 %v4488, %v4490
    %v4492 = vrot.slane %v4485, %v4491
    %v4493 = vcombine.low %v4399, %v4400
    %v4495 = vunpack.c.l.s4 1983009808
    %v4496 = vunpack.c.0.s8 %v4495
    %v4497 = vlaneseq
    %v4498 = vshrl.u32 %v4497, 7
    %v4499 = vsub.s32 %v4496, %v4498
    %v4500 = vrot.slane %v4493, %v4499
    %v4501 = vcombine.low %v4476, %v4484
    %v4502 = vcombine.high %v4476, %v4484
    %v4504 = vunpack.c.l.s4 1934713408
    %v4505 = vunpack.c.0.s8 %v4504
    %v4506 = vlaneseq
    %v4507 = vshrl.u32 %v4506, 7
    %v4508 = vsub.s32 %v4505, %v4507
    %v4509 = vrot.slane %v4501, %v4508
    %v4511 = vunpack.c.l.s4 1934713408
    %v4512 = vunpack.c.0.s8 %v4511
    %v4513 = vlaneseq
    %v4514 = vshrl.u32 %v4513, 7
    %v4515 = vsub.s32 %v4512, %v4514
    %v4516 = vrot.slane %v4502, %v4515
    %v4517 = vcombine.low %v4492, %v4500
    %v4518 = vcombine.high %v4492, %v4500
    %v4520 = vunpack.c.l.s4 1934713408
    %v4521 = vunpack.c.0.s8 %v4520
    %v4522 = vlaneseq
    %v4523 = vshrl.u32 %v4522, 7
    %v4524 = vsub.s32 %v4521, %v4523
    %v4525 = vrot.slane %v4517, %v4524
    %v4527 = vunpack.c.l.s4 1934713408
    %v4528 = vunpack.c.0.s8 %v4527
    %v4529 = vlaneseq
    %v4530 = vshrl.u32 %v4529, 7
    %v4531 = vsub.s32 %v4528, %v4530
    %v4532 = vrot.slane %v4518, %v4531
    %v4533 = vcombine.low %v4509, %v4525
    %v4534 = vcombine.high %v4509, %v4525
    %v4535 = vcombine.low %v4516, %v4532
    %v4536 = vcombine.high %v4516, %v4532
    %4539 = vrot.lane.b32.xlu0 %v4466, 8
    %v4540 = vpop.permute.xlu0 %4539
    %4541 = vrot.lane.b32.xlu0 %v4534, 8
    %v4542 = vpop.permute.xlu0 %4541
    %4547 = vrot.lane.b32.xlu0 %v4467, 16
    %v4548 = vpop.permute.xlu0 %4547
    %4549 = vrot.lane.b32.xlu0 %v4535, 16
    %v4550 = vpop.permute.xlu0 %4549
    %4555 = vrot.lane.b32.xlu0 %v4468, 24
    %v4556 = vpop.permute.xlu0 %4555
    %4557 = vrot.lane.b32.xlu0 %v4536, 24
    %v4558 = vpop.permute.xlu0 %4557
    %v4561 = vsel %vm1069, %v4465, %v4540
    %v4562 = vsel %vm1069, %v4533, %v4542
    %v4563 = vsel %vm1418, %v4561, %v4548
    %v4564 = vsel %vm1418, %v4562, %v4550
    %v4565 = vsel %vm2131, %v4563, %v4556
    %v4566 = vsel %vm2131, %v4564, %v4558
    %v4567 = vld [vmem:[%s2527] sm:$0xff]
    %v4568 = vld [vmem:[%s2527 + $0x10] sm:$0xff]
    %v4569 = vld [vmem:[%s2527 + $0x20] sm:$0xff]
    %v4570 = vld [vmem:[%s2527 + $0x30] sm:$0xff]
    %v4571 = vld [vmem:[%s2532] sm:$0x1]
    %v4573 = vlaneseq
    %v4574 = vshrl.u32 %v4573, 7
    %v4575 = vsub.s32 0, %v4574
    %v4576 = vrot.slane %v4571, %v4575
    %4581 = vrot.lane.b32.xlu0 %v4567, 32
    %v4582 = vpop.permute.xlu0 %4581
    %4583 = vrot.lane.b32.xlu0 %v4568, 32
    %v4584 = vpop.permute.xlu0 %4583
    %4585 = vrot.lane.b32.xlu0 %v4569, 32
    %v4586 = vpop.permute.xlu0 %4585
    %4587 = vrot.lane.b32.xlu0 %v4570, 32
    %v4588 = vpop.permute.xlu0 %4587
    %4593 = vrot.lane.b32.xlu0 %v4576, 32
    %v4594 = vpop.permute.xlu0 %4593
    %v4597 = vsel %vm52, %v4565, 0
    %v4600 = vsel %vm52, %v4566, 0
    %4602 = vmatprep.subr.mxu0 0.0
    %4603 = vmatpush1.msra.mxu0 0.0
    %4604 = vmatprep.subr.mxu0 0.0
    %4605 = vmatpush1.msra.mxu0 0.0
    %4606 = vmatprep.subr.mxu0 0.0
    %4607 = vmatpush1.msra.mxu0 0.0
    %4608 = vmatprep.subr.mxu0 0.0
    %4609 = vmatpush1.msra.mxu0 0.0
    %4610 = vmatprep.subr.mxu0 0.0
    %4611 = vmatpush1.msra.mxu0 0.0
    %4612 = vmatprep.subr.mxu0 0.0
    %4613 = vmatpush1.msra.mxu0 0.0
    %4614 = vmatprep.subr.mxu0 0.0
    %4615 = vmatpush1.msra.mxu0 0.0
    %4616 = vmatprep.subr.mxu0 0.0
    %4617 = vmatpush1.msra.mxu0 0.0
    %4618 = vmatprep.subr.mxu0 0.0
    %4619 = vmatpush1.msra.mxu0 0.0
    %4620 = vmatprep.subr.mxu0 0.0
    %4621 = vmatpush1.msra.mxu0 0.0
    %4622 = vmatprep.subr.mxu0 0.0
    %4623 = vmatpush1.msra.mxu0 0.0
    %4624 = vmatprep.subr.mxu0 0.0
    %4625 = vmatpush1.msra.mxu0 0.0
    %4626 = vmatprep.subr.mxu0 0.0
    %4627 = vmatpush1.msra.mxu0 %v4588
    %4628 = vmatprep.subr.mxu0 0.0
    %4629 = vmatpush1.msra.mxu0 %v4586
    %4630 = vmatprep.subr.mxu0 0.0
    %4631 = vmatpush1.msra.mxu0 %v4584
    %4632 = vmatprep.subr.mxu0 0.0
    %4633 = vmatpush1.msra.mxu0 %v4582
    %4634 = vmatprep.subr.mxu0 0.0
    %4635 = vmatpush2.msra.mxu0 0.0
    %4636 = vmatprep.subr.mxu0 0.0
    %4637 = vmatpush2.msra.mxu0 0.0
    %4638 = vmatprep.subr.mxu0 0.0
    %4639 = vmatpush2.msra.mxu0 0.0
    %4640 = vmatprep.subr.mxu0 0.0
    %4641 = vmatpush2.msra.mxu0 0.0
    %4642 = vmatprep.subr.mxu0 0.0
    %4643 = vmatpush2.msra.mxu0 0.0
    %4644 = vmatprep.subr.mxu0 0.0
    %4645 = vmatpush2.msra.mxu0 0.0
    %4646 = vmatprep.subr.mxu0 0.0
    %4647 = vmatpush2.msra.mxu0 0.0
    %4648 = vmatprep.subr.mxu0 0.0
    %4649 = vmatpush2.msra.mxu0 0.0
    %4650 = vmatprep.subr.mxu0 0.0
    %4651 = vmatpush2.msra.mxu0 0.0
    %4652 = vmatprep.subr.mxu0 0.0
    %4653 = vmatpush2.msra.mxu0 0.0
    %4654 = vmatprep.subr.mxu0 0.0
    %4655 = vmatpush2.msra.mxu0 0.0
    %4656 = vmatprep.subr.mxu0 0.0
    %4657 = vmatpush2.msra.mxu0 0.0
    %4658 = vmatprep.subr.mxu0 0.0
    %4659 = vmatpush2.msra.mxu0 0.0
    %4660 = vmatprep.subr.mxu0 0.0
    %4661 = vmatpush2.msra.mxu0 0.0
    %4662 = vmatprep.subr.mxu0 0.0
    %4663 = vmatpush2.msra.mxu0 0.0
    %4664 = vmatprep.subr.mxu0 0.0
    %4665 = vmatpush2.msra.mxu0 0.0
    %4666 = vmatprep.mubr.f32.mxu0 0.0
    %4667 = vmatmul.mubr.f32.gmra.mxu0 %v4597
    %v4668 = vpop.f32.mrf.mxu0
    %v4669 = vadd.f32 %v4594, %v4668
    %v4670 = vpop.f32.mrf.mxu0
    %4671 = vmatprep.mubr.f32.mxu0 0.0
    %4672 = vmatmul.mubr.f32.gmra.mxu0 %v4600
    %v4673 = vpop.f32.mrf.mxu0
    %v4674 = vadd.f32 %v4594, %v4673
    %v4675 = vpop.f32.mrf.mxu0
    %4676 = vdwg.mxu0
    %v4677 = vadd.f32 %v4669, %v2525
    %v4678 = vadd.f32 %v4674, %v2526
    %v4679 = vld [vmem:[%s2532 + $0x1] sm:$0x1]
    %v4680 = vsel %vm52, %v4677, 0.0
    %4681 = vadd.xlane.f32.xlu0 %v4680
    %v4682 = vpop.xlane.xlu0 %4681
    %v4683 = vsel %vm52, %v4678, 0.0
    %4684 = vadd.xlane.f32.xlu0 %v4683
    %v4685 = vpop.xlane.xlu0 %4684
    %v4686 = vmul.f32 %v4682, %v59
    %v4687 = vmul.f32 %v4685, %v59
    %v4688 = vsub.f32 %v4677, %v4686
    %v4689 = vsub.f32 %v4678, %v4687
    %v4690 = vmul.f32 %v4688, %v4688
    %v4691 = vmul.f32 %v4689, %v4689
    %v4692 = vsel %vm52, %v4690, 0.0
    %4693 = vadd.xlane.f32.xlu0 %v4692
    %v4694 = vpop.xlane.xlu0 %4693
    %v4695 = vsel %vm52, %v4691, 0.0
    %4696 = vadd.xlane.f32.xlu0 %v4695
    %v4697 = vpop.xlane.xlu0 %4696
    %v4698 = vmul.f32 %v4694, %v59
    %v4699 = vmul.f32 %v4697, %v59
    %v4700 = vadd.f32 %v4698, 1e-12
    %v4701 = vadd.f32 %v4699, 1e-12
    %v4702 = vrsqrt.pop %v4700
    %v4703 = vrsqrt.pop %v4701
    %v4704 = vmul.f32 %v4688, %v4702
    %v4705 = vmul.f32 %v4689, %v4703
    %v4707 = vlaneseq
    %v4708 = vshrl.u32 %v4707, 7
    %v4709 = vsub.s32 0, %v4708
    %v4710 = vrot.slane %v4679, %v4709
    %v4712 = vmul.f32 %v4704, %v4710
    %v4713 = vmul.f32 %v4705, %v4710
    %4714 = vrot.lane.b32.xlu0 %v4710, 96
    %v4715 = vpop.permute.xlu0 %4714
    %v4717 = vadd.f32 %v4712, %v4715
    %v4718 = vadd.f32 %v4713, %v4715
    %v4719 = vld [vmem:[%s2527 + $0x8] sm:$0xff]
    %v4720 = vld [vmem:[%s2527 + $0x18] sm:$0xff]
    %v4721 = vld [vmem:[%s2527 + $0x28] sm:$0xff]
    %v4722 = vld [vmem:[%s2527 + $0x38] sm:$0xff]
    %4723 = vrot.lane.b32.xlu0 %v4710, 64
    %v4724 = vpop.permute.xlu0 %4723
    %v4727 = vsel %vm52, %v4717, 0
    %v4730 = vsel %vm52, %v4718, 0
    %4732 = vmatprep.subr.mxu0 0.0
    %4733 = vmatpush1.msra.mxu0 0.0
    %4734 = vmatprep.subr.mxu0 0.0
    %4735 = vmatpush1.msra.mxu0 0.0
    %4736 = vmatprep.subr.mxu0 0.0
    %4737 = vmatpush1.msra.mxu0 0.0
    %4738 = vmatprep.subr.mxu0 0.0
    %4739 = vmatpush1.msra.mxu0 0.0
    %4740 = vmatprep.subr.mxu0 0.0
    %4741 = vmatpush1.msra.mxu0 0.0
    %4742 = vmatprep.subr.mxu0 0.0
    %4743 = vmatpush1.msra.mxu0 0.0
    %4744 = vmatprep.subr.mxu0 0.0
    %4745 = vmatpush1.msra.mxu0 0.0
    %4746 = vmatprep.subr.mxu0 0.0
    %4747 = vmatpush1.msra.mxu0 0.0
    %4748 = vmatprep.subr.mxu0 0.0
    %4749 = vmatpush1.msra.mxu0 0.0
    %4750 = vmatprep.subr.mxu0 0.0
    %4751 = vmatpush1.msra.mxu0 0.0
    %4752 = vmatprep.subr.mxu0 0.0
    %4753 = vmatpush1.msra.mxu0 0.0
    %4754 = vmatprep.subr.mxu0 0.0
    %4755 = vmatpush1.msra.mxu0 0.0
    %4756 = vmatprep.subr.mxu0 0.0
    %4757 = vmatpush1.msra.mxu0 %v4722
    %4758 = vmatprep.subr.mxu0 0.0
    %4759 = vmatpush1.msra.mxu0 %v4721
    %4760 = vmatprep.subr.mxu0 0.0
    %4761 = vmatpush1.msra.mxu0 %v4720
    %4762 = vmatprep.subr.mxu0 0.0
    %4763 = vmatpush1.msra.mxu0 %v4719
    %4764 = vmatprep.subr.mxu0 0.0
    %4765 = vmatpush2.msra.mxu0 0.0
    %4766 = vmatprep.subr.mxu0 0.0
    %4767 = vmatpush2.msra.mxu0 0.0
    %4768 = vmatprep.subr.mxu0 0.0
    %4769 = vmatpush2.msra.mxu0 0.0
    %4770 = vmatprep.subr.mxu0 0.0
    %4771 = vmatpush2.msra.mxu0 0.0
    %4772 = vmatprep.subr.mxu0 0.0
    %4773 = vmatpush2.msra.mxu0 0.0
    %4774 = vmatprep.subr.mxu0 0.0
    %4775 = vmatpush2.msra.mxu0 0.0
    %4776 = vmatprep.subr.mxu0 0.0
    %4777 = vmatpush2.msra.mxu0 0.0
    %4778 = vmatprep.subr.mxu0 0.0
    %4779 = vmatpush2.msra.mxu0 0.0
    %4780 = vmatprep.subr.mxu0 0.0
    %4781 = vmatpush2.msra.mxu0 0.0
    %4782 = vmatprep.subr.mxu0 0.0
    %4783 = vmatpush2.msra.mxu0 0.0
    %4784 = vmatprep.subr.mxu0 0.0
    %4785 = vmatpush2.msra.mxu0 0.0
    %4786 = vmatprep.subr.mxu0 0.0
    %4787 = vmatpush2.msra.mxu0 0.0
    %4788 = vmatprep.subr.mxu0 0.0
    %4789 = vmatpush2.msra.mxu0 0.0
    %4790 = vmatprep.subr.mxu0 0.0
    %4791 = vmatpush2.msra.mxu0 0.0
    %4792 = vmatprep.subr.mxu0 0.0
    %4793 = vmatpush2.msra.mxu0 0.0
    %4794 = vmatprep.subr.mxu0 0.0
    %4795 = vmatpush2.msra.mxu0 0.0
    %4796 = vmatprep.mubr.f32.mxu0 0.0
    %4797 = vmatmul.mubr.f32.gmra.mxu0 %v4727
    %v4798 = vpop.f32.mrf.mxu0
    %v4799 = vadd.f32 %v4724, %v4798
    %v4800 = vpop.f32.mrf.mxu0
    %4801 = vmatprep.mubr.f32.mxu0 0.0
    %4802 = vmatmul.mubr.f32.gmra.mxu0 %v4730
    %v4803 = vpop.f32.mrf.mxu0
    %v4804 = vadd.f32 %v4724, %v4803
    %v4805 = vpop.f32.mrf.mxu0
    %4806 = vdwg.mxu0
    %v4807 = vmul.f32 %v4799, 0.5
    %v4808 = vmul.f32 %v4804, 0.5
    %v4809 = vmul.f32 %v4799, 0.044715
    %v4810 = vmul.f32 %v4804, 0.044715
    %v4811 = vmul.f32 %v4809, %v4799
    %v4812 = vmul.f32 %v4810, %v4804
    %v4813 = vmul.f32 %v4811, %v4799
    %v4814 = vmul.f32 %v4812, %v4804
    %v4815 = vadd.f32 %v4799, %v4813
    %v4816 = vadd.f32 %v4804, %v4814
    %v4817 = vmul.f32 %v4815, 0.7978846
    %v4818 = vmul.f32 %v4816, 0.7978846
    %v4819 = vtanh.pop %v4817
    %v4820 = vtanh.pop %v4818
    %v4821 = vadd.f32 %v4819, 1.0
    %v4822 = vadd.f32 %v4820, 1.0
    %v4823 = vmul.f32 %v4807, %v4821
    %v4824 = vmul.f32 %v4808, %v4822
    %s4825 = scalar_lea.vmem %s3, 64
    %v4826 = vld [vmem:[%s4825] sm:$0xff]
    %v4827 = vld [vmem:[%s4825 + $0x8] sm:$0xff]
    %v4828 = vld [vmem:[%s4825 + $0x10] sm:$0xff]
    %v4829 = vld [vmem:[%s4825 + $0x18] sm:$0xff]
    %v4830 = vld [vmem:[%s4825 + $0x20] sm:$0xff]
    %v4831 = vld [vmem:[%s4825 + $0x28] sm:$0xff]
    %v4832 = vld [vmem:[%s4825 + $0x30] sm:$0xff]
    %v4833 = vld [vmem:[%s4825 + $0x38] sm:$0xff]
    %v4834 = vld [vmem:[%s2532 + $0x2] sm:$0x1]
    %v4836 = vlaneseq
    %v4837 = vshrl.u32 %v4836, 7
    %v4838 = vsub.s32 0, %v4837
    %v4839 = vrot.slane %v4834, %v4838
    %v4842 = vsel %vm2407, %v4823, 0
    %v4845 = vsel %vm2407, %v4824, 0
    %4847 = vmatprep.subr.mxu0 0.0
    %4848 = vmatpush1.msra.mxu0 0.0
    %4849 = vmatprep.subr.mxu0 0.0
    %4850 = vmatpush1.msra.mxu0 0.0
    %4851 = vmatprep.subr.mxu0 0.0
    %4852 = vmatpush1.msra.mxu0 0.0
    %4853 = vmatprep.subr.mxu0 0.0
    %4854 = vmatpush1.msra.mxu0 0.0
    %4855 = vmatprep.subr.mxu0 0.0
    %4856 = vmatpush1.msra.mxu0 0.0
    %4857 = vmatprep.subr.mxu0 0.0
    %4858 = vmatpush1.msra.mxu0 0.0
    %4859 = vmatprep.subr.mxu0 0.0
    %4860 = vmatpush1.msra.mxu0 0.0
    %4861 = vmatprep.subr.mxu0 0.0
    %4862 = vmatpush1.msra.mxu0 0.0
    %4863 = vmatprep.subr.mxu0 0.0
    %4864 = vmatpush1.msra.mxu0 %v4833
    %4865 = vmatprep.subr.mxu0 0.0
    %4866 = vmatpush1.msra.mxu0 %v4832
    %4867 = vmatprep.subr.mxu0 0.0
    %4868 = vmatpush1.msra.mxu0 %v4831
    %4869 = vmatprep.subr.mxu0 0.0
    %4870 = vmatpush1.msra.mxu0 %v4830
    %4871 = vmatprep.subr.mxu0 0.0
    %4872 = vmatpush1.msra.mxu0 %v4829
    %4873 = vmatprep.subr.mxu0 0.0
    %4874 = vmatpush1.msra.mxu0 %v4828
    %4875 = vmatprep.subr.mxu0 0.0
    %4876 = vmatpush1.msra.mxu0 %v4827
    %4877 = vmatprep.subr.mxu0 0.0
    %4878 = vmatpush1.msra.mxu0 %v4826
    %4879 = vmatprep.subr.mxu0 0.0
    %4880 = vmatpush2.msra.mxu0 0.0
    %4881 = vmatprep.subr.mxu0 0.0
    %4882 = vmatpush2.msra.mxu0 0.0
    %4883 = vmatprep.subr.mxu0 0.0
    %4884 = vmatpush2.msra.mxu0 0.0
    %4885 = vmatprep.subr.mxu0 0.0
    %4886 = vmatpush2.msra.mxu0 0.0
    %4887 = vmatprep.subr.mxu0 0.0
    %4888 = vmatpush2.msra.mxu0 0.0
    %4889 = vmatprep.subr.mxu0 0.0
    %4890 = vmatpush2.msra.mxu0 0.0
    %4891 = vmatprep.subr.mxu0 0.0
    %4892 = vmatpush2.msra.mxu0 0.0
    %4893 = vmatprep.subr.mxu0 0.0
    %4894 = vmatpush2.msra.mxu0 0.0
    %4895 = vmatprep.subr.mxu0 0.0
    %4896 = vmatpush2.msra.mxu0 0.0
    %4897 = vmatprep.subr.mxu0 0.0
    %4898 = vmatpush2.msra.mxu0 0.0
    %4899 = vmatprep.subr.mxu0 0.0
    %4900 = vmatpush2.msra.mxu0 0.0
    %4901 = vmatprep.subr.mxu0 0.0
    %4902 = vmatpush2.msra.mxu0 0.0
    %4903 = vmatprep.subr.mxu0 0.0
    %4904 = vmatpush2.msra.mxu0 0.0
    %4905 = vmatprep.subr.mxu0 0.0
    %4906 = vmatpush2.msra.mxu0 0.0
    %4907 = vmatprep.subr.mxu0 0.0
    %4908 = vmatpush2.msra.mxu0 0.0
    %4909 = vmatprep.subr.mxu0 0.0
    %4910 = vmatpush2.msra.mxu0 0.0
    %4911 = vmatprep.mubr.f32.mxu0 0.0
    %4912 = vmatmul.mubr.f32.gmra.mxu0 %v4842
    %v4913 = vpop.f32.mrf.mxu0
    %v4914 = vadd.f32 %v4839, %v4913
    %v4915 = vpop.f32.mrf.mxu0
    %4916 = vmatprep.mubr.f32.mxu0 0.0
    %4917 = vmatmul.mubr.f32.gmra.mxu0 %v4845
    %v4918 = vpop.f32.mrf.mxu0
    %v4919 = vadd.f32 %v4839, %v4918
    %v4920 = vpop.f32.mrf.mxu0
    %4921 = vdwg.mxu0
    %v4922 = vadd.f32 %v4914, %v4717
    %v4923 = vadd.f32 %v4919, %v4718
    %v4924 = vsel %vm52, %v4922, 0.0
    %4925 = vadd.xlane.f32.xlu0 %v4924
    %v4926 = vpop.xlane.xlu0 %4925
    %v4927 = vsel %vm52, %v4923, 0.0
    %4928 = vadd.xlane.f32.xlu0 %v4927
    %v4929 = vpop.xlane.xlu0 %4928
    %v4930 = vmul.f32 %v4926, %v59
    %v4931 = vmul.f32 %v4929, %v59
    %v4932 = vsub.f32 %v4922, %v4930
    %v4933 = vsub.f32 %v4923, %v4931
    %v4934 = vmul.f32 %v4932, %v4932
    %v4935 = vmul.f32 %v4933, %v4933
    %v4936 = vsel %vm52, %v4934, 0.0
    %4937 = vadd.xlane.f32.xlu0 %v4936
    %v4938 = vpop.xlane.xlu0 %4937
    %v4939 = vsel %vm52, %v4935, 0.0
    %4940 = vadd.xlane.f32.xlu0 %v4939
    %v4941 = vpop.xlane.xlu0 %4940
    %v4942 = vmul.f32 %v4938, %v59
    %v4943 = vmul.f32 %v4941, %v59
    %v4944 = vadd.f32 %v4942, 1e-12
    %v4945 = vadd.f32 %v4943, 1e-12
    %v4946 = vrsqrt.pop %v4944
    %v4947 = vrsqrt.pop %v4945
    %v4948 = vmul.f32 %v4932, %v4946
    %v4949 = vmul.f32 %v4933, %v4947
    %4950 = vrot.lane.b32.xlu0 %v4839, 96
    %v4951 = vpop.permute.xlu0 %4950
    %v4953 = vmul.f32 %v4948, %v4951
    %v4954 = vmul.f32 %v4949, %v4951
    %4955 = vrot.lane.b32.xlu0 %v4839, 64
    %v4956 = vpop.permute.xlu0 %4955
    %v4958 = vadd.f32 %v4953, %v4956
    %v4959 = vadd.f32 %v4954, %v4956
    %v4960 = vmul.u32 %v28, 8
    %vm4961 = vcmp.eq.s32.totalorder %v31, %v4960
    %v4962 = vsel %vm4961, 1, 0
    %v4963 = vcvt.s32.f32 %v4962
    %v4965 = vsel %vm1418, %v4963, 0
    %4967 = vmatprep.subr.mxu0 0.0
    %4968 = vmatpush1.msra.mxu0 0.0
    %4969 = vmatprep.subr.mxu0 0.0
    %4970 = vmatpush1.msra.mxu0 0.0
    %4971 = vmatprep.subr.mxu0 0.0
    %4972 = vmatpush1.msra.mxu0 0.0
    %4973 = vmatprep.subr.mxu0 0.0
    %4974 = vmatpush1.msra.mxu0 0.0
    %4975 = vmatprep.subr.mxu0 0.0
    %4976 = vmatpush1.msra.mxu0 0.0
    %4977 = vmatprep.subr.mxu0 0.0
    %4978 = vmatpush1.msra.mxu0 0.0
    %4979 = vmatprep.subr.mxu0 0.0
    %4980 = vmatpush1.msra.mxu0 0.0
    %4981 = vmatprep.subr.mxu0 0.0
    %4982 = vmatpush1.msra.mxu0 0.0
    %4983 = vmatprep.subr.mxu0 0.0
    %4984 = vmatpush1.msra.mxu0 0.0
    %4985 = vmatprep.subr.mxu0 0.0
    %4986 = vmatpush1.msra.mxu0 0.0
    %4987 = vmatprep.subr.mxu0 0.0
    %4988 = vmatpush1.msra.mxu0 0.0
    %4989 = vmatprep.subr.mxu0 0.0
    %4990 = vmatpush1.msra.mxu0 0.0
    %4991 = vmatprep.subr.mxu0 0.0
    %4992 = vmatpush1.msra.mxu0 0.0
    %4993 = vmatprep.subr.mxu0 0.0
    %4994 = vmatpush1.msra.mxu0 0.0
    %4995 = vmatprep.subr.mxu0 0.0
    %4996 = vmatpush1.msra.mxu0 %v4959
    %4997 = vmatprep.subr.mxu0 0.0
    %4998 = vmatpush1.msra.mxu0 %v4958
    %4999 = vmatprep.subr.mxu0 0.0
    %5000 = vmatpush2.msra.mxu0 0.0
    %5001 = vmatprep.subr.mxu0 0.0
    %5002 = vmatpush2.msra.mxu0 0.0
    %5003 = vmatprep.subr.mxu0 0.0
    %5004 = vmatpush2.msra.mxu0 0.0
    %5005 = vmatprep.subr.mxu0 0.0
    %5006 = vmatpush2.msra.mxu0 0.0
    %5007 = vmatprep.subr.mxu0 0.0
    %5008 = vmatpush2.msra.mxu0 0.0
    %5009 = vmatprep.subr.mxu0 0.0
    %5010 = vmatpush2.msra.mxu0 0.0
    %5011 = vmatprep.subr.mxu0 0.0
    %5012 = vmatpush2.msra.mxu0 0.0
    %5013 = vmatprep.subr.mxu0 0.0
    %5014 = vmatpush2.msra.mxu0 0.0
    %5015 = vmatprep.subr.mxu0 0.0
    %5016 = vmatpush2.msra.mxu0 0.0
    %5017 = vmatprep.subr.mxu0 0.0
    %5018 = vmatpush2.msra.mxu0 0.0
    %5019 = vmatprep.subr.mxu0 0.0
    %5020 = vmatpush2.msra.mxu0 0.0
    %5021 = vmatprep.subr.mxu0 0.0
    %5022 = vmatpush2.msra.mxu0 0.0
    %5023 = vmatprep.subr.mxu0 0.0
    %5024 = vmatpush2.msra.mxu0 0.0
    %5025 = vmatprep.subr.mxu0 0.0
    %5026 = vmatpush2.msra.mxu0 0.0
    %5027 = vmatprep.subr.mxu0 0.0
    %5028 = vmatpush2.msra.mxu0 0.0
    %5029 = vmatprep.subr.mxu0 0.0
    %5030 = vmatpush2.msra.mxu0 0.0
    %5031 = vmatprep.mubr.f32.mxu0 0.0
    %5032 = vmatmul.mubr.f32.gmra.mxu0 %v4965
    %v5033 = vpop.f32.mrf.mxu0
    %v5034 = vadd.f32 0.0, %v5033
    %v5035 = vpop.f32.mrf.mxu0
    %5036 = vdwg.mxu0
    %v5037 = vld [vmem:[%s5] sm:$0xff]
    %v5038 = vld [vmem:[%s5 + $0x8] sm:$0xff]
    %v5039 = vld [vmem:[%s5 + $0x10] sm:$0xff]
    %v5040 = vld [vmem:[%s5 + $0x18] sm:$0xff]
    %v5041 = vld [vmem:[%s6] sm:$0x1]
    %v5043 = vlaneseq
    %v5044 = vshrl.u32 %v5043, 7
    %v5045 = vsub.s32 0, %v5044
    %v5046 = vrot.slane %v5041, %v5045
    %5047 = vrot.lane.b32.xlu0 %v5046, 64
    %v5048 = vpop.permute.xlu0 %5047
    %v5051 = vsel %vm52, %v5034, 0
    %5053 = vmatprep.subr.mxu0 0.0
    %5054 = vmatpush1.msra.mxu0 0.0
    %5055 = vmatprep.subr.mxu0 0.0
    %5056 = vmatpush1.msra.mxu0 0.0
    %5057 = vmatprep.subr.mxu0 0.0
    %5058 = vmatpush1.msra.mxu0 0.0
    %5059 = vmatprep.subr.mxu0 0.0
    %5060 = vmatpush1.msra.mxu0 0.0
    %5061 = vmatprep.subr.mxu0 0.0
    %5062 = vmatpush1.msra.mxu0 0.0
    %5063 = vmatprep.subr.mxu0 0.0
    %5064 = vmatpush1.msra.mxu0 0.0
    %5065 = vmatprep.subr.mxu0 0.0
    %5066 = vmatpush1.msra.mxu0 0.0
    %5067 = vmatprep.subr.mxu0 0.0
    %5068 = vmatpush1.msra.mxu0 0.0
    %5069 = vmatprep.subr.mxu0 0.0
    %5070 = vmatpush1.msra.mxu0 0.0
    %5071 = vmatprep.subr.mxu0 0.0
    %5072 = vmatpush1.msra.mxu0 0.0
    %5073 = vmatprep.subr.mxu0 0.0
    %5074 = vmatpush1.msra.mxu0 0.0
    %5075 = vmatprep.subr.mxu0 0.0
    %5076 = vmatpush1.msra.mxu0 0.0
    %5077 = vmatprep.subr.mxu0 0.0
    %5078 = vmatpush1.msra.mxu0 %v5040
    %5079 = vmatprep.subr.mxu0 0.0
    %5080 = vmatpush1.msra.mxu0 %v5039
    %5081 = vmatprep.subr.mxu0 0.0
    %5082 = vmatpush1.msra.mxu0 %v5038
    %5083 = vmatprep.subr.mxu0 0.0
    %5084 = vmatpush1.msra.mxu0 %v5037
    %5085 = vmatprep.subr.mxu0 0.0
    %5086 = vmatpush2.msra.mxu0 0.0
    %5087 = vmatprep.subr.mxu0 0.0
    %5088 = vmatpush2.msra.mxu0 0.0
    %5089 = vmatprep.subr.mxu0 0.0
    %5090 = vmatpush2.msra.mxu0 0.0
    %5091 = vmatprep.subr.mxu0 0.0
    %5092 = vmatpush2.msra.mxu0 0.0
    %5093 = vmatprep.subr.mxu0 0.0
    %5094 = vmatpush2.msra.mxu0 0.0
    %5095 = vmatprep.subr.mxu0 0.0
    %5096 = vmatpush2.msra.mxu0 0.0
    %5097 = vmatprep.subr.mxu0 0.0
    %5098 = vmatpush2.msra.mxu0 0.0
    %5099 = vmatprep.subr.mxu0 0.0
    %5100 = vmatpush2.msra.mxu0 0.0
    %5101 = vmatprep.subr.mxu0 0.0
    %5102 = vmatpush2.msra.mxu0 0.0
    %5103 = vmatprep.subr.mxu0 0.0
    %5104 = vmatpush2.msra.mxu0 0.0
    %5105 = vmatprep.subr.mxu0 0.0
    %5106 = vmatpush2.msra.mxu0 0.0
    %5107 = vmatprep.subr.mxu0 0.0
    %5108 = vmatpush2.msra.mxu0 0.0
    %5109 = vmatprep.subr.mxu0 0.0
    %5110 = vmatpush2.msra.mxu0 0.0
    %5111 = vmatprep.subr.mxu0 0.0
    %5112 = vmatpush2.msra.mxu0 0.0
    %5113 = vmatprep.subr.mxu0 0.0
    %5114 = vmatpush2.msra.mxu0 0.0
    %5115 = vmatprep.subr.mxu0 0.0
    %5116 = vmatpush2.msra.mxu0 0.0
    %5117 = vmatprep.mubr.f32.mxu0 0.0
    %5118 = vmatmul.mubr.f32.gmra.mxu0 %v5051
    %v5119 = vpop.f32.mrf.mxu0
    %v5120 = vadd.f32 %v5048, %v5119
    %v5121 = vpop.f32.mrf.mxu0
    %5122 = vdwg.mxu0
    %v5123 = vtanh.pop %v5120
    %5128 = vrot.lane.b32.xlu0 %v5037, 96
    %v5129 = vpop.permute.xlu0 %5128
    %5130 = vrot.lane.b32.xlu0 %v5038, 96
    %v5131 = vpop.permute.xlu0 %5130
    %5132 = vrot.lane.b32.xlu0 %v5039, 96
    %v5133 = vpop.permute.xlu0 %5132
    %5134 = vrot.lane.b32.xlu0 %v5040, 96
    %v5135 = vpop.permute.xlu0 %5134
    %5140 = vrot.lane.b32.xlu0 %v5046, 32
    %v5141 = vpop.permute.xlu0 %5140
    %v5144 = vsel %vm52, %v5123, 0
    %5146 = vmatprep.subr.mxu0 0.0
    %5147 = vmatpush1.msra.mxu0 0.0
    %5148 = vmatprep.subr.mxu0 0.0
    %5149 = vmatpush1.msra.mxu0 0.0
    %5150 = vmatprep.subr.mxu0 0.0
    %5151 = vmatpush1.msra.mxu0 0.0
    %5152 = vmatprep.subr.mxu0 0.0
    %5153 = vmatpush1.msra.mxu0 0.0
    %5154 = vmatprep.subr.mxu0 0.0
    %5155 = vmatpush1.msra.mxu0 0.0
    %5156 = vmatprep.subr.mxu0 0.0
    %5157 = vmatpush1.msra.mxu0 0.0
    %5158 = vmatprep.subr.mxu0 0.0
    %5159 = vmatpush1.msra.mxu0 0.0
    %5160 = vmatprep.subr.mxu0 0.0
    %5161 = vmatpush1.msra.mxu0 0.0
    %5162 = vmatprep.subr.mxu0 0.0
    %5163 = vmatpush1.msra.mxu0 0.0
    %5164 = vmatprep.subr.mxu0 0.0
    %5165 = vmatpush1.msra.mxu0 0.0
    %5166 = vmatprep.subr.mxu0 0.0
    %5167 = vmatpush1.msra.mxu0 0.0
    %5168 = vmatprep.subr.mxu0 0.0
    %5169 = vmatpush1.msra.mxu0 0.0
    %5170 = vmatprep.subr.mxu0 0.0
    %5171 = vmatpush1.msra.mxu0 %v5135
    %5172 = vmatprep.subr.mxu0 0.0
    %5173 = vmatpush1.msra.mxu0 %v5133
    %5174 = vmatprep.subr.mxu0 0.0
    %5175 = vmatpush1.msra.mxu0 %v5131
    %5176 = vmatprep.subr.mxu0 0.0
    %5177 = vmatpush1.msra.mxu0 %v5129
    %5178 = vmatprep.subr.mxu0 0.0
    %5179 = vmatpush2.msra.mxu0 0.0
    %5180 = vmatprep.subr.mxu0 0.0
    %5181 = vmatpush2.msra.mxu0 0.0
    %5182 = vmatprep.subr.mxu0 0.0
    %5183 = vmatpush2.msra.mxu0 0.0
    %5184 = vmatprep.subr.mxu0 0.0
    %5185 = vmatpush2.msra.mxu0 0.0
    %5186 = vmatprep.subr.mxu0 0.0
    %5187 = vmatpush2.msra.mxu0 0.0
    %5188 = vmatprep.subr.mxu0 0.0
    %5189 = vmatpush2.msra.mxu0 0.0
    %5190 = vmatprep.subr.mxu0 0.0
    %5191 = vmatpush2.msra.mxu0 0.0
    %5192 = vmatprep.subr.mxu0 0.0
    %5193 = vmatpush2.msra.mxu0 0.0
    %5194 = vmatprep.subr.mxu0 0.0
    %5195 = vmatpush2.msra.mxu0 0.0
    %5196 = vmatprep.subr.mxu0 0.0
    %5197 = vmatpush2.msra.mxu0 0.0
    %5198 = vmatprep.subr.mxu0 0.0
    %5199 = vmatpush2.msra.mxu0 0.0
    %5200 = vmatprep.subr.mxu0 0.0
    %5201 = vmatpush2.msra.mxu0 0.0
    %5202 = vmatprep.subr.mxu0 0.0
    %5203 = vmatpush2.msra.mxu0 0.0
    %5204 = vmatprep.subr.mxu0 0.0
    %5205 = vmatpush2.msra.mxu0 0.0
    %5206 = vmatprep.subr.mxu0 0.0
    %5207 = vmatpush2.msra.mxu0 0.0
    %5208 = vmatprep.subr.mxu0 0.0
    %5209 = vmatpush2.msra.mxu0 0.0
    %5210 = vmatprep.mubr.f32.mxu0 0.0
    %5211 = vmatmul.mubr.f32.gmra.mxu0 %v5144
    %v5212 = vpop.f32.mrf.mxu0
    %v5213 = vadd.f32 %v5141, %v5212
    %v5214 = vpop.f32.mrf.mxu0
    %5215 = vdwg.mxu0
    %vm5216 = vcmask 17408
    %5217 = vst.msk [vmem:[#allocation2] sm:$0x3] %vm5216, %v5213
    // Predicated region
    $region30: #{bert_vanilla_classifier.1} parent=1 // pred_check
      _
    $region31: #{bert_vanilla_classifier.1} parent=1 // pred_check_branch
      %5219 = sbr.rel (0) target = $region33
    $region32: #{bert_vanilla_classifier.1} parent=1 // pred_region
      %s5221 = ssub.s32 32, 32
      %5222 = vsyncadd [#allocation3], %s5221
      %s5224 = sshll.u32 [#allocation2], 4
      %s5225 = int_to_ptr.vmem [resolvable:$true] %s5224
      %5227 = dma.vmem_to_hbm [thread:$0]  %s5225, 32, %s7, [#allocation3]
    $region33: #{bert_vanilla_classifier.1} parent=1 // pred_fallthru
      _
    // Predicated region
    $region34: #{bert_vanilla_classifier.1} parent=1 // pred_check
      _
    $region35: #{bert_vanilla_classifier.1} parent=1 // pred_check_branch
      %5229 = sbr.rel (0) target = $region37
    $region36: #{bert_vanilla_classifier.1} parent=1 // pred_region
      %5230 = dma.done [#allocation3], 32
    $region37: #{bert_vanilla_classifier.1} parent=1 // pred_fallthru
      _
    %5231 = vsyncpa [#allocation3], 1

</llo_original>
